<compile_context>
chip_gen: v5e
topology: v5e:2x2
jax: 0.10.0
libtpu: 0.0.40
codegen_flags: <defaults>
</compile_context>

<pallas_src>
import functools

import jax
import jax.numpy as jnp
from jax import lax
from jax.experimental import pallas as pl
from jax.experimental.pallas import tpu as pltpu


_VMEM_LIMIT = 32 * 1024 * 1024   # sized from worst per-step footprint (~16 MiB)


# --------------------------------------------------------------------------
# Pallas kernels
# --------------------------------------------------------------------------

def _conv1_pool_kernel(x_ref, w_ref, scale_ref, shift_ref, mask_ref, o_ref,
                       patch_ref, *, cin_pad, wq, p):
    """Fused conv1(3x3,pad1) + BN-fold + ReLU + maxpool2x2.

    x_ref     : (1, 4, cin_pad, (H2+2)*wq) bf16  parity-split padded input
    w_ref     : (cout_pad, 9*cin_pad)      bf16
    scale/shift: (cout_pad, 1)             f32   (BN folded; zero on pad rows)
    mask_ref  : (1, p) f32, p = H2*wq, 1.0 where (lane % wq) < W2
    o_ref     : (1, cout_pad, (H2+3)*wq)   bf16  conv2's zero-padded layout
    patch_ref : (2, 9*cin_pad, p) bf16 scratch (ping-pong over quadrants)
    """
    pooled = None
    for q in range(4):
        a, b = divmod(q, 2)              # pooling-quadrant parity (row, col)
        buf = q & 1
        for t in range(9):
            dh, dw = divmod(t, 3)
            src_q = ((a + dh) % 2) * 2 + ((b + dw) % 2)
            off = ((a + dh) // 2) * wq + ((b + dw) // 2)
            patch_ref[buf, pl.ds(t * cin_pad, cin_pad), :] = (
                x_ref[0, src_q, :, pl.ds(off, p)])
        acc = jnp.dot(w_ref[...], patch_ref[buf],
                      preferred_element_type=jnp.float32)
        act = jnp.maximum(acc * scale_ref[...] + shift_ref[...], 0.0)
        pooled = act if pooled is None else jnp.maximum(pooled, act)
    pooled = pooled * mask_ref[...]
    # Emit directly in conv2's zero-padded layout: zero the tile, then one
    # lane-dense store shifted by one pad row + one pad column.
    o_ref[0, :, :] = jnp.zeros(o_ref.shape[1:], o_ref.dtype)
    o_ref[0, :, pl.ds(wq + 1, p)] = pooled.astype(o_ref.dtype)


def _conv_mid_kernel(x_ref, w_ref, scale_ref, shift_ref, mask_ref, o_ref,
                     patch_ref, *, cin_pad, wq, p):
    """conv2: 3x3 conv (stride 1, pad 1) + bias + ReLU, emits conv3's padded
    layout.  x_ref: (1, cin_pad, (H2+3)*wq) bf16, o_ref same layout for cout."""
    for t in range(9):
        dh, dw = divmod(t, 3)
        patch_ref[pl.ds(t * cin_pad, cin_pad), :] = (
            x_ref[0, :, pl.ds(dh * wq + dw, p)])
    acc = jnp.dot(w_ref[...], patch_ref[...],
                  preferred_element_type=jnp.float32)
    y = jnp.maximum(acc * scale_ref[...] + shift_ref[...], 0.0) * mask_ref[...]
    o_ref[0, :, :] = jnp.zeros(o_ref.shape[1:], o_ref.dtype)
    o_ref[0, :, pl.ds(wq + 1, p)] = y.astype(o_ref.dtype)


def _conv_fc_kernel(x_ref, w_ref, scale_ref, shift_ref, mask_ref,
                    wfc_ref, eye_ref, sel_ref, bias_ref, o_ref,
                    patch_ref, *, cin_pad, wq, p):
    """conv3 + BN-fold + ReLU fused with the fc classifier head.

    The fc contraction logits[k] = sum_{c,pix} wfc[k,c,pix]*y3[c,pix] runs on
    the MXU as G = Wfc(ncls*32, P) @ Y^T(P, 32); the needed diagonal entries
    G[k*32+c, c] are selected with a prep-time eye mask and summed per class
    with a tiny prep-time selection matmul.  y3 never leaves VMEM.
    """
    for t in range(9):
        dh, dw = divmod(t, 3)
        patch_ref[pl.ds(t * cin_pad, cin_pad), :] = (
            x_ref[0, :, pl.ds(dh * wq + dw, p)])
    acc = jnp.dot(w_ref[...], patch_ref[...],
                  preferred_element_type=jnp.float32)
    y = jnp.maximum(acc * scale_ref[...] + shift_ref[...], 0.0) * mask_ref[...]
    g = lax.dot_general(wfc_ref[...], y.astype(jnp.bfloat16),
                        dimension_numbers=(((1,), (1,)), ((), ())),
                        preferred_element_type=jnp.float32)      # (ncls*32, 32)
    d = jnp.sum(g * eye_ref[...], axis=1, keepdims=True)          # (ncls*32, 1)
    logits = jnp.dot(sel_ref[...], d,
                     preferred_element_type=jnp.float32)          # (ncls, 1)
    o_ref[0, :, :] = logits + bias_ref[...]


# --------------------------------------------------------------------------
# pallas_call wrappers (per-image grid, batch axis "parallel")
# --------------------------------------------------------------------------

def _compiler_params():
    return pltpu.CompilerParams(dimension_semantics=("parallel",),
                                vmem_limit_bytes=_VMEM_LIMIT)


def _call_conv1(xq, prep, n, h2, wq):
    p, pq, pout = h2 * wq, (h2 + 2) * wq, (h2 + 3) * wq
    cin_pad = prep["cin_pad1"]
    cout_pad = prep["w1m"].shape[0]
    kernel = functools.partial(_conv1_pool_kernel, cin_pad=cin_pad, wq=wq, p=p)
    return pl.pallas_call(
        kernel,
        out_shape=jax.ShapeDtypeStruct((n, cout_pad, pout), jnp.bfloat16),
        grid_spec=pltpu.PrefetchScalarGridSpec(
            num_scalar_prefetch=0, grid=(n,),
            in_specs=[
                pl.BlockSpec((1, 4, cin_pad, pq), lambda i: (i, 0, 0, 0)),
                pl.BlockSpec((cout_pad, 9 * cin_pad), lambda i: (0, 0)),
                pl.BlockSpec((cout_pad, 1), lambda i: (0, 0)),
                pl.BlockSpec((cout_pad, 1), lambda i: (0, 0)),
                pl.BlockSpec((1, p), lambda i: (0, 0)),
            ],
            out_specs=pl.BlockSpec((1, cout_pad, pout), lambda i: (i, 0, 0)),
            scratch_shapes=[pltpu.VMEM((2, 9 * cin_pad, p), jnp.bfloat16)],
        ),
        compiler_params=_compiler_params(),
    )(xq, prep["w1m"], prep["scale1"], prep["shift1"], prep["mask"])


def _call_conv2(y1, prep, n, h2, wq):
    p, pio = h2 * wq, (h2 + 3) * wq
    cin_pad = prep["cin_pad2"]
    cout_pad = prep["w2m"].shape[0]
    kernel = functools.partial(_conv_mid_kernel, cin_pad=cin_pad, wq=wq, p=p)
    return pl.pallas_call(
        kernel,
        out_shape=jax.ShapeDtypeStruct((n, cout_pad, pio), jnp.bfloat16),
        grid_spec=pltpu.PrefetchScalarGridSpec(
            num_scalar_prefetch=0, grid=(n,),
            in_specs=[
                pl.BlockSpec((1, cin_pad, pio), lambda i: (i, 0, 0)),
                pl.BlockSpec((cout_pad, 9 * cin_pad), lambda i: (0, 0)),
                pl.BlockSpec((cout_pad, 1), lambda i: (0, 0)),
                pl.BlockSpec((cout_pad, 1), lambda i: (0, 0)),
                pl.BlockSpec((1, p), lambda i: (0, 0)),
            ],
            out_specs=pl.BlockSpec((1, cout_pad, pio), lambda i: (i, 0, 0)),
            scratch_shapes=[pltpu.VMEM((9 * cin_pad, p), jnp.bfloat16)],
        ),
        compiler_params=_compiler_params(),
    )(y1, prep["w2m"], prep["scale2"], prep["shift2"], prep["mask"])


def _call_conv3(y2, prep, n, h2, wq):
    p, pio = h2 * wq, (h2 + 3) * wq
    cin_pad = prep["cin_pad3"]
    cout = prep["w3m"].shape[0]                      # 32
    ncls = prep["bfc"].shape[0]
    kernel = functools.partial(_conv_fc_kernel, cin_pad=cin_pad, wq=wq, p=p)
    return pl.pallas_call(
        kernel,
        out_shape=jax.ShapeDtypeStruct((n, ncls, 1), jnp.float32),
        grid_spec=pltpu.PrefetchScalarGridSpec(
            num_scalar_prefetch=0, grid=(n,),
            in_specs=[
                pl.BlockSpec((1, cin_pad, pio), lambda i: (i, 0, 0)),
                pl.BlockSpec((cout, 9 * cin_pad), lambda i: (0, 0)),
                pl.BlockSpec((cout, 1), lambda i: (0, 0)),
                pl.BlockSpec((cout, 1), lambda i: (0, 0)),
                pl.BlockSpec((1, p), lambda i: (0, 0)),
                pl.BlockSpec((ncls * cout, p), lambda i: (0, 0)),
                pl.BlockSpec((ncls * cout, cout), lambda i: (0, 0)),
                pl.BlockSpec((ncls, ncls * cout), lambda i: (0, 0)),
                pl.BlockSpec((ncls, 1), lambda i: (0, 0)),
            ],
            out_specs=pl.BlockSpec((1, ncls, 1), lambda i: (i, 0, 0)),
            scratch_shapes=[pltpu.VMEM((9 * cin_pad, p), jnp.bfloat16)],
        ),
        compiler_params=_compiler_params(),
    )(y2, prep["w3m"], prep["scale3"], prep["shift3"], prep["mask"],
      prep["wfc_flat"], prep["eye"], prep["sel"], prep["bfc"])


# --------------------------------------------------------------------------
# Forward pass (only XLA glue left: pad + parity split of the 3-channel input)
# --------------------------------------------------------------------------

def convnet_forward(x_nchw, prep):
    n, cin, h, w = x_nchw.shape
    assert h % 2 == 0 and w % 2 == 0, "maxpool2x2 expects even H, W"
    h2, w2 = h // 2, w // 2
    hq, wq = h2 + 2, w2 + 2
    cin_pad1 = prep["cin_pad1"]

    # Channel pad (3 -> 8 zero channels), zero ring, even/odd parity split.
    xb = x_nchw.astype(jnp.bfloat16)
    xb = jnp.pad(xb, ((0, 0), (0, cin_pad1 - cin), (1, 3), (1, 3)))
    xq = xb.reshape(n, cin_pad1, hq, 2, wq, 2)
    xq = jnp.transpose(xq, (0, 3, 5, 1, 2, 4)).reshape(n, 4, cin_pad1, hq * wq)

    y1 = _call_conv1(xq, prep, n, h2, wq)       # conv1+bn+relu+pool (padded)
    y2 = _call_conv2(y1, prep, n, h2, wq)       # conv2+relu         (padded)
    logits = _call_conv3(y2, prep, n, h2, wq)   # conv3+bn+relu+fc
    return logits.reshape(n, -1)


# --------------------------------------------------------------------------
# Parameters: PyTorch-style init + one-time conversion to kernel layouts
# --------------------------------------------------------------------------

def init_params(key, h, w, num_classes=12):
    ks = jax.random.split(key, 8)
    hp, wp = h // 2, w // 2
    fc_in = 32 * hp * wp    # == 32*75*75 for the original 150x150 input
    return {
        "w1": jax.random.normal(ks[0], (12, 3, 3, 3), jnp.float32) * 0.1,
        "b1": jax.random.normal(ks[1], (12,), jnp.float32) * 0.1,
        "bn1_g": jnp.ones((12,), jnp.float32),
        "bn1_b": jnp.zeros((12,), jnp.float32),
        "bn1_m": jnp.zeros((12,), jnp.float32),
        "bn1_v": jnp.ones((12,), jnp.float32),
        "w2": jax.random.normal(ks[2], (20, 12, 3, 3), jnp.float32) * 0.1,
        "b2": jax.random.normal(ks[3], (20,), jnp.float32) * 0.1,
        "w3": jax.random.normal(ks[4], (32, 20, 3, 3), jnp.float32) * 0.1,
        "b3": jax.random.normal(ks[5], (32,), jnp.float32) * 0.1,
        "bn3_g": jnp.ones((32,), jnp.float32),
        "bn3_b": jnp.zeros((32,), jnp.float32),
        "bn3_m": jnp.zeros((32,), jnp.float32),
        "bn3_v": jnp.ones((32,), jnp.float32),
        "wfc": jax.random.normal(ks[6], (num_classes, fc_in), jnp.float32) * 0.01,
        "bfc": jax.random.normal(ks[7], (num_classes,), jnp.float32) * 0.01,
    }


def prepare_params(params, h, w, num_classes=12):
    """One-time conversion from PyTorch layouts to the kernel layouts."""
    h2, w2 = h // 2, w // 2
    wq = w2 + 2
    p = h2 * wq

    # Sublane-aligned channel padding (multiples of 8); producers emit the
    # padded channel count so every patch tap is a full contiguous slab.
    cin_pad1, cout_pad1 = 8, 16     # conv1: 3 -> 8 in,  12 -> 16 out
    cin_pad2, cout_pad2 = 16, 24    # conv2: 12 -> 16 in, 20 -> 24 out
    cin_pad3, cout3 = 24, 32        # conv3: 20 -> 24 in, 32 out

    def conv_w(w_oihw, cin_pad, cout_pad):
        co, ci, kh, kw = w_oihw.shape
        wt = jnp.transpose(w_oihw, (0, 2, 3, 1))            # (co, kh, kw, ci)
        wt = jnp.pad(wt, ((0, cout_pad - co), (0, 0), (0, 0),
                          (0, cin_pad - ci)))
        return wt.reshape(cout_pad, kh * kw * cin_pad).astype(jnp.bfloat16)

    def bn_fold(bias, gamma, beta, mean, var, cout_pad, eps=1e-5):
        s = gamma / jnp.sqrt(var + eps)
        scale = jnp.pad(s, (0, cout_pad - s.shape[0]))
        shift = jnp.pad(s * (bias - mean) + beta, (0, cout_pad - s.shape[0]))
        return (scale[:, None].astype(jnp.float32),
                shift[:, None].astype(jnp.float32))

    scale1, shift1 = bn_fold(params["b1"], params["bn1_g"], params["bn1_b"],
                             params["bn1_m"], params["bn1_v"], cout_pad1)
    scale2 = jnp.pad(jnp.ones((20,), jnp.float32),
                     (0, cout_pad2 - 20))[:, None]
    shift2 = jnp.pad(params["b2"].astype(jnp.float32),
                     (0, cout_pad2 - 20))[:, None]
    scale3, shift3 = bn_fold(params["b3"], params["bn3_g"], params["bn3_b"],
                             params["bn3_m"], params["bn3_v"], cout3)

    # Lane mask shared by all three kernels (row stride wq, valid width w2).
    mask = ((jnp.arange(p) % wq) < w2).astype(jnp.float32)[None, :]

    # fc weight scattered into conv3's (c, h, padded-w) pixel layout, plus the
    # diagonal-select / per-class-sum constants for the fused classifier head.
    wfc4 = jnp.zeros((num_classes, cout3, h2, wq), jnp.float32)
    wfc4 = wfc4.at[:, :, :, :w2].set(
        params["wfc"].reshape(num_classes, cout3, h2, w2))
    wfc_flat = wfc4.reshape(num_classes * cout3, p).astype(jnp.bfloat16)
    r = jnp.arange(num_classes * cout3)
    eye = (r[:, None] % cout3 == jnp.arange(cout3)[None, :]).astype(jnp.float32)
    sel = (jnp.arange(num_classes)[:, None] ==
           (r[None, :] // cout3)).astype(jnp.float32)

    return {
        "cin_pad1": cin_pad1, "cin_pad2": cin_pad2, "cin_pad3": cin_pad3,
        "w1m": conv_w(params["w1"], cin_pad1, cout_pad1),
        "scale1": scale1, "shift1": shift1,
        "w2m": conv_w(params["w2"], cin_pad2, cout_pad2),
        "scale2": scale2, "shift2": shift2,
        "w3m": conv_w(params["w3"], cin_pad3, cout3),
        "scale3": scale3, "shift3": shift3,
        "mask": mask,
        "wfc_flat": wfc_flat, "eye": eye, "sel": sel,
        "bfc": params["bfc"][:, None].astype(jnp.float32),
    }


# --------------------------------------------------------------------------

if __name__ == "__main__":
    key = jax.random.PRNGKey(0)
    k_x, k_p = jax.random.split(key)
    N, C, H, W = 2, 3, 16, 16            # small stand-in for (N, 3, 150, 150)
    x = jax.random.normal(k_x, (N, C, H, W), jnp.float32)

    params = init_params(k_p, H, W, num_classes=12)
    prep = prepare_params(params, H, W, num_classes=12)

    fwd = jax.jit(functools.partial(convnet_forward, prep=prep))
    out = fwd(x)
    jax.block_until_ready(out)
    assert out.shape == (N, 12), out.shape
    assert bool(jnp.all(jnp.isfinite(out)))
    print("KERNEL_OK")
</pallas_src>

<mosaic_0001>
module attributes {stable_mosaic.version = 11 : i64} {
  func.func @_conv1_pool_kernel(%arg0: i32, %arg1: memref<1x4x8x100xbf16, #tpu.memory_space<vmem>>, %arg2: memref<16x72xbf16, #tpu.memory_space<vmem>>, %arg3: memref<16x1xf32, #tpu.memory_space<vmem>>, %arg4: memref<16x1xf32, #tpu.memory_space<vmem>>, %arg5: memref<1x80xf32, #tpu.memory_space<vmem>>, %arg6: memref<1x16x110xbf16, #tpu.memory_space<vmem>>, %arg7: memref<2x72x80xbf16, #tpu.memory_space<vmem>>) attributes {dimension_semantics = [#tpu.dimension_semantics<parallel>], iteration_bounds = array<i64: 2>, scalar_prefetch = 0 : i64, scratch_operands = 1 : i64, tpu.core_type = #tpu.core_type<tc>, window_params = [{transform_indices = @transform_0, window_bounds = array<i64: 1, 4, 8, 100>}, {pipeline_mode = #tpu.pipeline_mode<synchronous>, transform_indices = @transform_1, window_bounds = array<i64: 16, 72>}, {pipeline_mode = #tpu.pipeline_mode<synchronous>, transform_indices = @transform_2, window_bounds = array<i64: 16, 1>}, {pipeline_mode = #tpu.pipeline_mode<synchronous>, transform_indices = @transform_3, window_bounds = array<i64: 16, 1>}, {pipeline_mode = #tpu.pipeline_mode<synchronous>, transform_indices = @transform_4, window_bounds = array<i64: 1, 80>}, {transform_indices = @transform_5, window_bounds = array<i64: 1, 16, 110>}]} {
    %c0 = arith.constant 0 : index
    %c0_0 = arith.constant 0 : index
    %c0_1 = arith.constant 0 : index
    %c0_2 = arith.constant 0 : index
    %0 = vector.load %arg1[%c0, %c0_0, %c0_1, %c0_2] : memref<1x4x8x100xbf16, #tpu.memory_space<vmem>>, vector<1x1x8x80xbf16>
    %1 = vector.shape_cast %0 : vector<1x1x8x80xbf16> to vector<8x80xbf16>
    %c0_3 = arith.constant 0 : index
    %c0_4 = arith.constant 0 : index
    %c0_5 = arith.constant 0 : index
    %2 = vector.load %arg7[%c0_3, %c0_4, %c0_5] : memref<2x72x80xbf16, #tpu.memory_space<vmem>>, vector<1x8x80xbf16>
    %3 = vector.shape_cast %2 : vector<1x8x80xbf16> to vector<8x80xbf16>
    %4 = vector.shape_cast %1 : vector<8x80xbf16> to vector<1x8x80xbf16>
    tpu.vector_store %arg7[%c0_3, %c0_4, %c0_5], %4 {strides = array<i32>} : memref<2x72x80xbf16, #tpu.memory_space<vmem>>, vector<1x8x80xbf16>,
    %c0_6 = arith.constant 0 : index
    %c1 = arith.constant 1 : index
    %c0_7 = arith.constant 0 : index
    %c0_8 = arith.constant 0 : index
    %5 = vector.load %arg1[%c0_6, %c1, %c0_7, %c0_8] : memref<1x4x8x100xbf16, #tpu.memory_space<vmem>>, vector<1x1x8x80xbf16>
    %6 = vector.shape_cast %5 : vector<1x1x8x80xbf16> to vector<8x80xbf16>
    %c0_9 = arith.constant 0 : index
    %c8 = arith.constant 8 : index
    %c0_10 = arith.constant 0 : index
    %7 = vector.load %arg7[%c0_9, %c8, %c0_10] : memref<2x72x80xbf16, #tpu.memory_space<vmem>>, vector<1x8x80xbf16>
    %8 = vector.shape_cast %7 : vector<1x8x80xbf16> to vector<8x80xbf16>
    %9 = vector.shape_cast %6 : vector<8x80xbf16> to vector<1x8x80xbf16>
    tpu.vector_store %arg7[%c0_9, %c8, %c0_10], %9 {strides = array<i32>} : memref<2x72x80xbf16, #tpu.memory_space<vmem>>, vector<1x8x80xbf16>,
    %c0_11 = arith.constant 0 : index
    %c0_12 = arith.constant 0 : index
    %c0_13 = arith.constant 0 : index
    %c1_14 = arith.constant 1 : index
    %10 = vector.load %arg1[%c0_11, %c0_12, %c0_13, %c1_14] : memref<1x4x8x100xbf16, #tpu.memory_space<vmem>>, vector<1x1x8x80xbf16>
    %11 = vector.shape_cast %10 : vector<1x1x8x80xbf16> to vector<8x80xbf16>
    %c0_15 = arith.constant 0 : index
    %c16 = arith.constant 16 : index
    %c0_16 = arith.constant 0 : index
    %12 = vector.load %arg7[%c0_15, %c16, %c0_16] : memref<2x72x80xbf16, #tpu.memory_space<vmem>>, vector<1x8x80xbf16>
    %13 = vector.shape_cast %12 : vector<1x8x80xbf16> to vector<8x80xbf16>
    %14 = vector.shape_cast %11 : vector<8x80xbf16> to vector<1x8x80xbf16>
    tpu.vector_store %arg7[%c0_15, %c16, %c0_16], %14 {strides = array<i32>} : memref<2x72x80xbf16, #tpu.memory_space<vmem>>, vector<1x8x80xbf16>,
    %c0_17 = arith.constant 0 : index
    %c2 = arith.constant 2 : index
    %c0_18 = arith.constant 0 : index
    %c0_19 = arith.constant 0 : index
    %15 = vector.load %arg1[%c0_17, %c2, %c0_18, %c0_19] : memref<1x4x8x100xbf16, #tpu.memory_space<vmem>>, vector<1x1x8x80xbf16>
    %16 = vector.shape_cast %15 : vector<1x1x8x80xbf16> to vector<8x80xbf16>
    %c0_20 = arith.constant 0 : index
    %c24 = arith.constant 24 : index
    %c0_21 = arith.constant 0 : index
    %17 = vector.load %arg7[%c0_20, %c24, %c0_21] : memref<2x72x80xbf16, #tpu.memory_space<vmem>>, vector<1x8x80xbf16>
    %18 = vector.shape_cast %17 : vector<1x8x80xbf16> to vector<8x80xbf16>
    %19 = vector.shape_cast %16 : vector<8x80xbf16> to vector<1x8x80xbf16>
    tpu.vector_store %arg7[%c0_20, %c24, %c0_21], %19 {strides = array<i32>} : memref<2x72x80xbf16, #tpu.memory_space<vmem>>, vector<1x8x80xbf16>,
    %c0_22 = arith.constant 0 : index
    %c3 = arith.constant 3 : index
    %c0_23 = arith.constant 0 : index
    %c0_24 = arith.constant 0 : index
    %20 = vector.load %arg1[%c0_22, %c3, %c0_23, %c0_24] : memref<1x4x8x100xbf16, #tpu.memory_space<vmem>>, vector<1x1x8x80xbf16>
    %21 = vector.shape_cast %20 : vector<1x1x8x80xbf16> to vector<8x80xbf16>
    %c0_25 = arith.constant 0 : index
    %c32 = arith.constant 32 : index
    %c0_26 = arith.constant 0 : index
    %22 = vector.load %arg7[%c0_25, %c32, %c0_26] : memref<2x72x80xbf16, #tpu.memory_space<vmem>>, vector<1x8x80xbf16>
    %23 = vector.shape_cast %22 : vector<1x8x80xbf16> to vector<8x80xbf16>
    %24 = vector.shape_cast %21 : vector<8x80xbf16> to vector<1x8x80xbf16>
    tpu.vector_store %arg7[%c0_25, %c32, %c0_26], %24 {strides = array<i32>} : memref<2x72x80xbf16, #tpu.memory_space<vmem>>, vector<1x8x80xbf16>,
    %c0_27 = arith.constant 0 : index
    %c2_28 = arith.constant 2 : index
    %c0_29 = arith.constant 0 : index
    %c1_30 = arith.constant 1 : index
    %25 = vector.load %arg1[%c0_27, %c2_28, %c0_29, %c1_30] : memref<1x4x8x100xbf16, #tpu.memory_space<vmem>>, vector<1x1x8x80xbf16>
    %26 = vector.shape_cast %25 : vector<1x1x8x80xbf16> to vector<8x80xbf16>
    %c0_31 = arith.constant 0 : index
    %c40 = arith.constant 40 : index
    %c0_32 = arith.constant 0 : index
    %27 = vector.load %arg7[%c0_31, %c40, %c0_32] : memref<2x72x80xbf16, #tpu.memory_space<vmem>>, vector<1x8x80xbf16>
    %28 = vector.shape_cast %27 : vector<1x8x80xbf16> to vector<8x80xbf16>
    %29 = vector.shape_cast %26 : vector<8x80xbf16> to vector<1x8x80xbf16>
    tpu.vector_store %arg7[%c0_31, %c40, %c0_32], %29 {strides = array<i32>} : memref<2x72x80xbf16, #tpu.memory_space<vmem>>, vector<1x8x80xbf16>,
    %c0_33 = arith.constant 0 : index
    %c0_34 = arith.constant 0 : index
    %c0_35 = arith.constant 0 : index
    %c10 = arith.constant 10 : index
    %30 = vector.load %arg1[%c0_33, %c0_34, %c0_35, %c10] : memref<1x4x8x100xbf16, #tpu.memory_space<vmem>>, vector<1x1x8x80xbf16>
    %31 = vector.shape_cast %30 : vector<1x1x8x80xbf16> to vector<8x80xbf16>
    %c0_36 = arith.constant 0 : index
    %c48 = arith.constant 48 : index
    %c0_37 = arith.constant 0 : index
    %32 = vector.load %arg7[%c0_36, %c48, %c0_37] : memref<2x72x80xbf16, #tpu.memory_space<vmem>>, vector<1x8x80xbf16>
    %33 = vector.shape_cast %32 : vector<1x8x80xbf16> to vector<8x80xbf16>
    %34 = vector.shape_cast %31 : vector<8x80xbf16> to vector<1x8x80xbf16>
    tpu.vector_store %arg7[%c0_36, %c48, %c0_37], %34 {strides = array<i32>} : memref<2x72x80xbf16, #tpu.memory_space<vmem>>, vector<1x8x80xbf16>,
    %c0_38 = arith.constant 0 : index
    %c1_39 = arith.constant 1 : index
    %c0_40 = arith.constant 0 : index
    %c10_41 = arith.constant 10 : index
    %35 = vector.load %arg1[%c0_38, %c1_39, %c0_40, %c10_41] : memref<1x4x8x100xbf16, #tpu.memory_space<vmem>>, vector<1x1x8x80xbf16>
    %36 = vector.shape_cast %35 : vector<1x1x8x80xbf16> to vector<8x80xbf16>
    %c0_42 = arith.constant 0 : index
    %c56 = arith.constant 56 : index
    %c0_43 = arith.constant 0 : index
    %37 = vector.load %arg7[%c0_42, %c56, %c0_43] : memref<2x72x80xbf16, #tpu.memory_space<vmem>>, vector<1x8x80xbf16>
    %38 = vector.shape_cast %37 : vector<1x8x80xbf16> to vector<8x80xbf16>
    %39 = vector.shape_cast %36 : vector<8x80xbf16> to vector<1x8x80xbf16>
    tpu.vector_store %arg7[%c0_42, %c56, %c0_43], %39 {strides = array<i32>} : memref<2x72x80xbf16, #tpu.memory_space<vmem>>, vector<1x8x80xbf16>,
    %c0_44 = arith.constant 0 : index
    %c0_45 = arith.constant 0 : index
    %c0_46 = arith.constant 0 : index
    %c11 = arith.constant 11 : index
    %40 = vector.load %arg1[%c0_44, %c0_45, %c0_46, %c11] : memref<1x4x8x100xbf16, #tpu.memory_space<vmem>>, vector<1x1x8x80xbf16>
    %41 = vector.shape_cast %40 : vector<1x1x8x80xbf16> to vector<8x80xbf16>
    %c0_47 = arith.constant 0 : index
    %c64 = arith.constant 64 : index
    %c0_48 = arith.constant 0 : index
    %42 = vector.load %arg7[%c0_47, %c64, %c0_48] : memref<2x72x80xbf16, #tpu.memory_space<vmem>>, vector<1x8x80xbf16>
    %43 = vector.shape_cast %42 : vector<1x8x80xbf16> to vector<8x80xbf16>
    %44 = vector.shape_cast %41 : vector<8x80xbf16> to vector<1x8x80xbf16>
    tpu.vector_store %arg7[%c0_47, %c64, %c0_48], %44 {strides = array<i32>} : memref<2x72x80xbf16, #tpu.memory_space<vmem>>, vector<1x8x80xbf16>,
    %c0_49 = arith.constant 0 : index
    %c0_50 = arith.constant 0 : index
    %45 = vector.load %arg2[%c0_49, %c0_50] : memref<16x72xbf16, #tpu.memory_space<vmem>>, vector<16x72xbf16>
    %c0_51 = arith.constant 0 : index
    %c0_52 = arith.constant 0 : index
    %c0_53 = arith.constant 0 : index
    %46 = vector.load %arg7[%c0_51, %c0_52, %c0_53] : memref<2x72x80xbf16, #tpu.memory_space<vmem>>, vector<1x72x80xbf16>
    %47 = vector.shape_cast %46 : vector<1x72x80xbf16> to vector<72x80xbf16>
    %cst = arith.constant dense<0.000000e+00> : vector<16x80xf32>
    %48 = tpu.matmul %45, %47, %cst {dimension_numbers = #tpu.dot_dimension_numbers<[1], [0], [0], [1], [0, 0, 1, 1], [], []>} : vector<16x72xbf16>, vector<72x80xbf16>, vector<16x80xf32> -> vector<16x80xf32>
    %c0_54 = arith.constant 0 : index
    %c0_55 = arith.constant 0 : index
    %49 = vector.load %arg3[%c0_54, %c0_55] : memref<16x1xf32, #tpu.memory_space<vmem>>, vector<16x1xf32>
    %50 = vector.broadcast %49 : vector<16x1xf32> to vector<16x80xf32>
    %51 = arith.mulf %48, %50 : vector<16x80xf32>
    %c0_56 = arith.constant 0 : index
    %c0_57 = arith.constant 0 : index
    %52 = vector.load %arg4[%c0_56, %c0_57] : memref<16x1xf32, #tpu.memory_space<vmem>>, vector<16x1xf32>
    %53 = vector.broadcast %52 : vector<16x1xf32> to vector<16x80xf32>
    %54 = arith.addf %51, %53 : vector<16x80xf32>
    %cst_58 = arith.constant 0.000000e+00 : f32
    %55 = vector.broadcast %cst_58 : f32 to vector<16x80xf32>
    %56 = arith.maximumf %54, %55 : vector<16x80xf32>
    %c0_59 = arith.constant 0 : index
    %c1_60 = arith.constant 1 : index
    %c0_61 = arith.constant 0 : index
    %c0_62 = arith.constant 0 : index
    %57 = vector.load %arg1[%c0_59, %c1_60, %c0_61, %c0_62] : memref<1x4x8x100xbf16, #tpu.memory_space<vmem>>, vector<1x1x8x80xbf16>
    %58 = vector.shape_cast %57 : vector<1x1x8x80xbf16> to vector<8x80xbf16>
    %c1_63 = arith.constant 1 : index
    %c0_64 = arith.constant 0 : index
    %c0_65 = arith.constant 0 : index
    %59 = vector.load %arg7[%c1_63, %c0_64, %c0_65] : memref<2x72x80xbf16, #tpu.memory_space<vmem>>, vector<1x8x80xbf16>
    %60 = vector.shape_cast %59 : vector<1x8x80xbf16> to vector<8x80xbf16>
    %61 = vector.shape_cast %58 : vector<8x80xbf16> to vector<1x8x80xbf16>
    tpu.vector_store %arg7[%c1_63, %c0_64, %c0_65], %61 {strides = array<i32>} : memref<2x72x80xbf16, #tpu.memory_space<vmem>>, vector<1x8x80xbf16>,
    %c0_66 = arith.constant 0 : index
    %c0_67 = arith.constant 0 : index
    %c0_68 = arith.constant 0 : index
    %c1_69 = arith.constant 1 : index
    %62 = vector.load %arg1[%c0_66, %c0_67, %c0_68, %c1_69] : memref<1x4x8x100xbf16, #tpu.memory_space<vmem>>, vector<1x1x8x80xbf16>
    %63 = vector.shape_cast %62 : vector<1x1x8x80xbf16> to vector<8x80xbf16>
    %c1_70 = arith.constant 1 : index
    %c8_71 = arith.constant 8 : index
    %c0_72 = arith.constant 0 : index
    %64 = vector.load %arg7[%c1_70, %c8_71, %c0_72] : memref<2x72x80xbf16, #tpu.memory_space<vmem>>, vector<1x8x80xbf16>
    %65 = vector.shape_cast %64 : vector<1x8x80xbf16> to vector<8x80xbf16>
    %66 = vector.shape_cast %63 : vector<8x80xbf16> to vector<1x8x80xbf16>
    tpu.vector_store %arg7[%c1_70, %c8_71, %c0_72], %66 {strides = array<i32>} : memref<2x72x80xbf16, #tpu.memory_space<vmem>>, vector<1x8x80xbf16>,
    %c0_73 = arith.constant 0 : index
    %c1_74 = arith.constant 1 : index
    %c0_75 = arith.constant 0 : index
    %c1_76 = arith.constant 1 : index
    %67 = vector.load %arg1[%c0_73, %c1_74, %c0_75, %c1_76] : memref<1x4x8x100xbf16, #tpu.memory_space<vmem>>, vector<1x1x8x80xbf16>
    %68 = vector.shape_cast %67 : vector<1x1x8x80xbf16> to vector<8x80xbf16>
    %c1_77 = arith.constant 1 : index
    %c16_78 = arith.constant 16 : index
    %c0_79 = arith.constant 0 : index
    %69 = vector.load %arg7[%c1_77, %c16_78, %c0_79] : memref<2x72x80xbf16, #tpu.memory_space<vmem>>, vector<1x8x80xbf16>
    %70 = vector.shape_cast %69 : vector<1x8x80xbf16> to vector<8x80xbf16>
    %71 = vector.shape_cast %68 : vector<8x80xbf16> to vector<1x8x80xbf16>
    tpu.vector_store %arg7[%c1_77, %c16_78, %c0_79], %71 {strides = array<i32>} : memref<2x72x80xbf16, #tpu.memory_space<vmem>>, vector<1x8x80xbf16>,
    %c0_80 = arith.constant 0 : index
    %c3_81 = arith.constant 3 : index
    %c0_82 = arith.constant 0 : index
    %c0_83 = arith.constant 0 : index
    %72 = vector.load %arg1[%c0_80, %c3_81, %c0_82, %c0_83] : memref<1x4x8x100xbf16, #tpu.memory_space<vmem>>, vector<1x1x8x80xbf16>
    %73 = vector.shape_cast %72 : vector<1x1x8x80xbf16> to vector<8x80xbf16>
    %c1_84 = arith.constant 1 : index
    %c24_85 = arith.constant 24 : index
    %c0_86 = arith.constant 0 : index
    %74 = vector.load %arg7[%c1_84, %c24_85, %c0_86] : memref<2x72x80xbf16, #tpu.memory_space<vmem>>, vector<1x8x80xbf16>
    %75 = vector.shape_cast %74 : vector<1x8x80xbf16> to vector<8x80xbf16>
    %76 = vector.shape_cast %73 : vector<8x80xbf16> to vector<1x8x80xbf16>
    tpu.vector_store %arg7[%c1_84, %c24_85, %c0_86], %76 {strides = array<i32>} : memref<2x72x80xbf16, #tpu.memory_space<vmem>>, vector<1x8x80xbf16>,
    %c0_87 = arith.constant 0 : index
    %c2_88 = arith.constant 2 : index
    %c0_89 = arith.constant 0 : index
    %c1_90 = arith.constant 1 : index
    %77 = vector.load %arg1[%c0_87, %c2_88, %c0_89, %c1_90] : memref<1x4x8x100xbf16, #tpu.memory_space<vmem>>, vector<1x1x8x80xbf16>
    %78 = vector.shape_cast %77 : vector<1x1x8x80xbf16> to vector<8x80xbf16>
    %c1_91 = arith.constant 1 : index
    %c32_92 = arith.constant 32 : index
    %c0_93 = arith.constant 0 : index
    %79 = vector.load %arg7[%c1_91, %c32_92, %c0_93] : memref<2x72x80xbf16, #tpu.memory_space<vmem>>, vector<1x8x80xbf16>
    %80 = vector.shape_cast %79 : vector<1x8x80xbf16> to vector<8x80xbf16>
    %81 = vector.shape_cast %78 : vector<8x80xbf16> to vector<1x8x80xbf16>
    tpu.vector_store %arg7[%c1_91, %c32_92, %c0_93], %81 {strides = array<i32>} : memref<2x72x80xbf16, #tpu.memory_space<vmem>>, vector<1x8x80xbf16>,
    %c0_94 = arith.constant 0 : index
    %c3_95 = arith.constant 3 : index
    %c0_96 = arith.constant 0 : index
    %c1_97 = arith.constant 1 : index
    %82 = vector.load %arg1[%c0_94, %c3_95, %c0_96, %c1_97] : memref<1x4x8x100xbf16, #tpu.memory_space<vmem>>, vector<1x1x8x80xbf16>
    %83 = vector.shape_cast %82 : vector<1x1x8x80xbf16> to vector<8x80xbf16>
    %c1_98 = arith.constant 1 : index
    %c40_99 = arith.constant 40 : index
    %c0_100 = arith.constant 0 : index
    %84 = vector.load %arg7[%c1_98, %c40_99, %c0_100] : memref<2x72x80xbf16, #tpu.memory_space<vmem>>, vector<1x8x80xbf16>
    %85 = vector.shape_cast %84 : vector<1x8x80xbf16> to vector<8x80xbf16>
    %86 = vector.shape_cast %83 : vector<8x80xbf16> to vector<1x8x80xbf16>
    tpu.vector_store %arg7[%c1_98, %c40_99, %c0_100], %86 {strides = array<i32>} : memref<2x72x80xbf16, #tpu.memory_space<vmem>>, vector<1x8x80xbf16>,
    %c0_101 = arith.constant 0 : index
    %c1_102 = arith.constant 1 : index
    %c0_103 = arith.constant 0 : index
    %c10_104 = arith.constant 10 : index
    %87 = vector.load %arg1[%c0_101, %c1_102, %c0_103, %c10_104] : memref<1x4x8x100xbf16, #tpu.memory_space<vmem>>, vector<1x1x8x80xbf16>
    %88 = vector.shape_cast %87 : vector<1x1x8x80xbf16> to vector<8x80xbf16>
    %c1_105 = arith.constant 1 : index
    %c48_106 = arith.constant 48 : index
    %c0_107 = arith.constant 0 : index
    %89 = vector.load %arg7[%c1_105, %c48_106, %c0_107] : memref<2x72x80xbf16, #tpu.memory_space<vmem>>, vector<1x8x80xbf16>
    %90 = vector.shape_cast %89 : vector<1x8x80xbf16> to vector<8x80xbf16>
    %91 = vector.shape_cast %88 : vector<8x80xbf16> to vector<1x8x80xbf16>
    tpu.vector_store %arg7[%c1_105, %c48_106, %c0_107], %91 {strides = array<i32>} : memref<2x72x80xbf16, #tpu.memory_space<vmem>>, vector<1x8x80xbf16>,
    %c0_108 = arith.constant 0 : index
    %c0_109 = arith.constant 0 : index
    %c0_110 = arith.constant 0 : index
    %c11_111 = arith.constant 11 : index
    %92 = vector.load %arg1[%c0_108, %c0_109, %c0_110, %c11_111] : memref<1x4x8x100xbf16, #tpu.memory_space<vmem>>, vector<1x1x8x80xbf16>
    %93 = vector.shape_cast %92 : vector<1x1x8x80xbf16> to vector<8x80xbf16>
    %c1_112 = arith.constant 1 : index
    %c56_113 = arith.constant 56 : index
    %c0_114 = arith.constant 0 : index
    %94 = vector.load %arg7[%c1_112, %c56_113, %c0_114] : memref<2x72x80xbf16, #tpu.memory_space<vmem>>, vector<1x8x80xbf16>
    %95 = vector.shape_cast %94 : vector<1x8x80xbf16> to vector<8x80xbf16>
    %96 = vector.shape_cast %93 : vector<8x80xbf16> to vector<1x8x80xbf16>
    tpu.vector_store %arg7[%c1_112, %c56_113, %c0_114], %96 {strides = array<i32>} : memref<2x72x80xbf16, #tpu.memory_space<vmem>>, vector<1x8x80xbf16>,
    %c0_115 = arith.constant 0 : index
    %c1_116 = arith.constant 1 : index
    %c0_117 = arith.constant 0 : index
    %c11_118 = arith.constant 11 : index
    %97 = vector.load %arg1[%c0_115, %c1_116, %c0_117, %c11_118] : memref<1x4x8x100xbf16, #tpu.memory_space<vmem>>, vector<1x1x8x80xbf16>
    %98 = vector.shape_cast %97 : vector<1x1x8x80xbf16> to vector<8x80xbf16>
    %c1_119 = arith.constant 1 : index
    %c64_120 = arith.constant 64 : index
    %c0_121 = arith.constant 0 : index
    %99 = vector.load %arg7[%c1_119, %c64_120, %c0_121] : memref<2x72x80xbf16, #tpu.memory_space<vmem>>, vector<1x8x80xbf16>
    %100 = vector.shape_cast %99 : vector<1x8x80xbf16> to vector<8x80xbf16>
    %101 = vector.shape_cast %98 : vector<8x80xbf16> to vector<1x8x80xbf16>
    tpu.vector_store %arg7[%c1_119, %c64_120, %c0_121], %101 {strides = array<i32>} : memref<2x72x80xbf16, #tpu.memory_space<vmem>>, vector<1x8x80xbf16>,
    %c0_122 = arith.constant 0 : index
    %c0_123 = arith.constant 0 : index
    %102 = vector.load %arg2[%c0_122, %c0_123] : memref<16x72xbf16, #tpu.memory_space<vmem>>, vector<16x72xbf16>
    %c1_124 = arith.constant 1 : index
    %c0_125 = arith.constant 0 : index
    %c0_126 = arith.constant 0 : index
    %103 = vector.load %arg7[%c1_124, %c0_125, %c0_126] : memref<2x72x80xbf16, #tpu.memory_space<vmem>>, vector<1x72x80xbf16>
    %104 = vector.shape_cast %103 : vector<1x72x80xbf16> to vector<72x80xbf16>
    %cst_127 = arith.constant dense<0.000000e+00> : vector<16x80xf32>
    %105 = tpu.matmul %102, %104, %cst_127 {dimension_numbers = #tpu.dot_dimension_numbers<[1], [0], [0], [1], [0, 0, 1, 1], [], []>} : vector<16x72xbf16>, vector<72x80xbf16>, vector<16x80xf32> -> vector<16x80xf32>
    %c0_128 = arith.constant 0 : index
    %c0_129 = arith.constant 0 : index
    %106 = vector.load %arg3[%c0_128, %c0_129] : memref<16x1xf32, #tpu.memory_space<vmem>>, vector<16x1xf32>
    %107 = vector.broadcast %106 : vector<16x1xf32> to vector<16x80xf32>
    %108 = arith.mulf %105, %107 : vector<16x80xf32>
    %c0_130 = arith.constant 0 : index
    %c0_131 = arith.constant 0 : index
    %109 = vector.load %arg4[%c0_130, %c0_131] : memref<16x1xf32, #tpu.memory_space<vmem>>, vector<16x1xf32>
    %110 = vector.broadcast %109 : vector<16x1xf32> to vector<16x80xf32>
    %111 = arith.addf %108, %110 : vector<16x80xf32>
    %cst_132 = arith.constant 0.000000e+00 : f32
    %112 = vector.broadcast %cst_132 : f32 to vector<16x80xf32>
    %113 = arith.maximumf %111, %112 : vector<16x80xf32>
    %114 = arith.maximumf %56, %113 : vector<16x80xf32>
    %c0_133 = arith.constant 0 : index
    %c2_134 = arith.constant 2 : index
    %c0_135 = arith.constant 0 : index
    %c0_136 = arith.constant 0 : index
    %115 = vector.load %arg1[%c0_133, %c2_134, %c0_135, %c0_136] : memref<1x4x8x100xbf16, #tpu.memory_space<vmem>>, vector<1x1x8x80xbf16>
    %116 = vector.shape_cast %115 : vector<1x1x8x80xbf16> to vector<8x80xbf16>
    %c0_137 = arith.constant 0 : index
    %c0_138 = arith.constant 0 : index
    %c0_139 = arith.constant 0 : index
    %117 = vector.load %arg7[%c0_137, %c0_138, %c0_139] : memref<2x72x80xbf16, #tpu.memory_space<vmem>>, vector<1x8x80xbf16>
    %118 = vector.shape_cast %117 : vector<1x8x80xbf16> to vector<8x80xbf16>
    %119 = vector.shape_cast %116 : vector<8x80xbf16> to vector<1x8x80xbf16>
    tpu.vector_store %arg7[%c0_137, %c0_138, %c0_139], %119 {strides = array<i32>} : memref<2x72x80xbf16, #tpu.memory_space<vmem>>, vector<1x8x80xbf16>,
    %c0_140 = arith.constant 0 : index
    %c3_141 = arith.constant 3 : index
    %c0_142 = arith.constant 0 : index
    %c0_143 = arith.constant 0 : index
    %120 = vector.load %arg1[%c0_140, %c3_141, %c0_142, %c0_143] : memref<1x4x8x100xbf16, #tpu.memory_space<vmem>>, vector<1x1x8x80xbf16>
    %121 = vector.shape_cast %120 : vector<1x1x8x80xbf16> to vector<8x80xbf16>
    %c0_144 = arith.constant 0 : index
    %c8_145 = arith.constant 8 : index
    %c0_146 = arith.constant 0 : index
    %122 = vector.load %arg7[%c0_144, %c8_145, %c0_146] : memref<2x72x80xbf16, #tpu.memory_space<vmem>>, vector<1x8x80xbf16>
    %123 = vector.shape_cast %122 : vector<1x8x80xbf16> to vector<8x80xbf16>
    %124 = vector.shape_cast %121 : vector<8x80xbf16> to vector<1x8x80xbf16>
    tpu.vector_store %arg7[%c0_144, %c8_145, %c0_146], %124 {strides = array<i32>} : memref<2x72x80xbf16, #tpu.memory_space<vmem>>, vector<1x8x80xbf16>,
    %c0_147 = arith.constant 0 : index
    %c2_148 = arith.constant 2 : index
    %c0_149 = arith.constant 0 : index
    %c1_150 = arith.constant 1 : index
    %125 = vector.load %arg1[%c0_147, %c2_148, %c0_149, %c1_150] : memref<1x4x8x100xbf16, #tpu.memory_space<vmem>>, vector<1x1x8x80xbf16>
    %126 = vector.shape_cast %125 : vector<1x1x8x80xbf16> to vector<8x80xbf16>
    %c0_151 = arith.constant 0 : index
    %c16_152 = arith.constant 16 : index
    %c0_153 = arith.constant 0 : index
    %127 = vector.load %arg7[%c0_151, %c16_152, %c0_153] : memref<2x72x80xbf16, #tpu.memory_space<vmem>>, vector<1x8x80xbf16>
    %128 = vector.shape_cast %127 : vector<1x8x80xbf16> to vector<8x80xbf16>
    %129 = vector.shape_cast %126 : vector<8x80xbf16> to vector<1x8x80xbf16>
    tpu.vector_store %arg7[%c0_151, %c16_152, %c0_153], %129 {strides = array<i32>} : memref<2x72x80xbf16, #tpu.memory_space<vmem>>, vector<1x8x80xbf16>,
    %c0_154 = arith.constant 0 : index
    %c0_155 = arith.constant 0 : index
    %c0_156 = arith.constant 0 : index
    %c10_157 = arith.constant 10 : index
    %130 = vector.load %arg1[%c0_154, %c0_155, %c0_156, %c10_157] : memref<1x4x8x100xbf16, #tpu.memory_space<vmem>>, vector<1x1x8x80xbf16>
    %131 = vector.shape_cast %130 : vector<1x1x8x80xbf16> to vector<8x80xbf16>
    %c0_158 = arith.constant 0 : index
    %c24_159 = arith.constant 24 : index
    %c0_160 = arith.constant 0 : index
    %132 = vector.load %arg7[%c0_158, %c24_159, %c0_160] : memref<2x72x80xbf16, #tpu.memory_space<vmem>>, vector<1x8x80xbf16>
    %133 = vector.shape_cast %132 : vector<1x8x80xbf16> to vector<8x80xbf16>
    %134 = vector.shape_cast %131 : vector<8x80xbf16> to vector<1x8x80xbf16>
    tpu.vector_store %arg7[%c0_158, %c24_159, %c0_160], %134 {strides = array<i32>} : memref<2x72x80xbf16, #tpu.memory_space<vmem>>, vector<1x8x80xbf16>,
    %c0_161 = arith.constant 0 : index
    %c1_162 = arith.constant 1 : index
    %c0_163 = arith.constant 0 : index
    %c10_164 = arith.constant 10 : index
    %135 = vector.load %arg1[%c0_161, %c1_162, %c0_163, %c10_164] : memref<1x4x8x100xbf16, #tpu.memory_space<vmem>>, vector<1x1x8x80xbf16>
    %136 = vector.shape_cast %135 : vector<1x1x8x80xbf16> to vector<8x80xbf16>
    %c0_165 = arith.constant 0 : index
    %c32_166 = arith.constant 32 : index
    %c0_167 = arith.constant 0 : index
    %137 = vector.load %arg7[%c0_165, %c32_166, %c0_167] : memref<2x72x80xbf16, #tpu.memory_space<vmem>>, vector<1x8x80xbf16>
    %138 = vector.shape_cast %137 : vector<1x8x80xbf16> to vector<8x80xbf16>
    %139 = vector.shape_cast %136 : vector<8x80xbf16> to vector<1x8x80xbf16>
    tpu.vector_store %arg7[%c0_165, %c32_166, %c0_167], %139 {strides = array<i32>} : memref<2x72x80xbf16, #tpu.memory_space<vmem>>, vector<1x8x80xbf16>,
    %c0_168 = arith.constant 0 : index
    %c0_169 = arith.constant 0 : index
    %c0_170 = arith.constant 0 : index
    %c11_171 = arith.constant 11 : index
    %140 = vector.load %arg1[%c0_168, %c0_169, %c0_170, %c11_171] : memref<1x4x8x100xbf16, #tpu.memory_space<vmem>>, vector<1x1x8x80xbf16>
    %141 = vector.shape_cast %140 : vector<1x1x8x80xbf16> to vector<8x80xbf16>
    %c0_172 = arith.constant 0 : index
    %c40_173 = arith.constant 40 : index
    %c0_174 = arith.constant 0 : index
    %142 = vector.load %arg7[%c0_172, %c40_173, %c0_174] : memref<2x72x80xbf16, #tpu.memory_space<vmem>>, vector<1x8x80xbf16>
    %143 = vector.shape_cast %142 : vector<1x8x80xbf16> to vector<8x80xbf16>
    %144 = vector.shape_cast %141 : vector<8x80xbf16> to vector<1x8x80xbf16>
    tpu.vector_store %arg7[%c0_172, %c40_173, %c0_174], %144 {strides = array<i32>} : memref<2x72x80xbf16, #tpu.memory_space<vmem>>, vector<1x8x80xbf16>,
    %c0_175 = arith.constant 0 : index
    %c2_176 = arith.constant 2 : index
    %c0_177 = arith.constant 0 : index
    %c10_178 = arith.constant 10 : index
    %145 = vector.load %arg1[%c0_175, %c2_176, %c0_177, %c10_178] : memref<1x4x8x100xbf16, #tpu.memory_space<vmem>>, vector<1x1x8x80xbf16>
    %146 = vector.shape_cast %145 : vector<1x1x8x80xbf16> to vector<8x80xbf16>
    %c0_179 = arith.constant 0 : index
    %c48_180 = arith.constant 48 : index
    %c0_181 = arith.constant 0 : index
    %147 = vector.load %arg7[%c0_179, %c48_180, %c0_181] : memref<2x72x80xbf16, #tpu.memory_space<vmem>>, vector<1x8x80xbf16>
    %148 = vector.shape_cast %147 : vector<1x8x80xbf16> to vector<8x80xbf16>
    %149 = vector.shape_cast %146 : vector<8x80xbf16> to vector<1x8x80xbf16>
    tpu.vector_store %arg7[%c0_179, %c48_180, %c0_181], %149 {strides = array<i32>} : memref<2x72x80xbf16, #tpu.memory_space<vmem>>, vector<1x8x80xbf16>,
    %c0_182 = arith.constant 0 : index
    %c3_183 = arith.constant 3 : index
    %c0_184 = arith.constant 0 : index
    %c10_185 = arith.constant 10 : index
    %150 = vector.load %arg1[%c0_182, %c3_183, %c0_184, %c10_185] : memref<1x4x8x100xbf16, #tpu.memory_space<vmem>>, vector<1x1x8x80xbf16>
    %151 = vector.shape_cast %150 : vector<1x1x8x80xbf16> to vector<8x80xbf16>
    %c0_186 = arith.constant 0 : index
    %c56_187 = arith.constant 56 : index
    %c0_188 = arith.constant 0 : index
    %152 = vector.load %arg7[%c0_186, %c56_187, %c0_188] : memref<2x72x80xbf16, #tpu.memory_space<vmem>>, vector<1x8x80xbf16>
    %153 = vector.shape_cast %152 : vector<1x8x80xbf16> to vector<8x80xbf16>
    %154 = vector.shape_cast %151 : vector<8x80xbf16> to vector<1x8x80xbf16>
    tpu.vector_store %arg7[%c0_186, %c56_187, %c0_188], %154 {strides = array<i32>} : memref<2x72x80xbf16, #tpu.memory_space<vmem>>, vector<1x8x80xbf16>,
    %c0_189 = arith.constant 0 : index
    %c2_190 = arith.constant 2 : index
    %c0_191 = arith.constant 0 : index
    %c11_192 = arith.constant 11 : index
    %155 = vector.load %arg1[%c0_189, %c2_190, %c0_191, %c11_192] : memref<1x4x8x100xbf16, #tpu.memory_space<vmem>>, vector<1x1x8x80xbf16>
    %156 = vector.shape_cast %155 : vector<1x1x8x80xbf16> to vector<8x80xbf16>
    %c0_193 = arith.constant 0 : index
    %c64_194 = arith.constant 64 : index
    %c0_195 = arith.constant 0 : index
    %157 = vector.load %arg7[%c0_193, %c64_194, %c0_195] : memref<2x72x80xbf16, #tpu.memory_space<vmem>>, vector<1x8x80xbf16>
    %158 = vector.shape_cast %157 : vector<1x8x80xbf16> to vector<8x80xbf16>
    %159 = vector.shape_cast %156 : vector<8x80xbf16> to vector<1x8x80xbf16>
    tpu.vector_store %arg7[%c0_193, %c64_194, %c0_195], %159 {strides = array<i32>} : memref<2x72x80xbf16, #tpu.memory_space<vmem>>, vector<1x8x80xbf16>,
    %c0_196 = arith.constant 0 : index
    %c0_197 = arith.constant 0 : index
    %160 = vector.load %arg2[%c0_196, %c0_197] : memref<16x72xbf16, #tpu.memory_space<vmem>>, vector<16x72xbf16>
    %c0_198 = arith.constant 0 : index
    %c0_199 = arith.constant 0 : index
    %c0_200 = arith.constant 0 : index
    %161 = vector.load %arg7[%c0_198, %c0_199, %c0_200] : memref<2x72x80xbf16, #tpu.memory_space<vmem>>, vector<1x72x80xbf16>
    %162 = vector.shape_cast %161 : vector<1x72x80xbf16> to vector<72x80xbf16>
    %cst_201 = arith.constant dense<0.000000e+00> : vector<16x80xf32>
    %163 = tpu.matmul %160, %162, %cst_201 {dimension_numbers = #tpu.dot_dimension_numbers<[1], [0], [0], [1], [0, 0, 1, 1], [], []>} : vector<16x72xbf16>, vector<72x80xbf16>, vector<16x80xf32> -> vector<16x80xf32>
    %c0_202 = arith.constant 0 : index
    %c0_203 = arith.constant 0 : index
    %164 = vector.load %arg3[%c0_202, %c0_203] : memref<16x1xf32, #tpu.memory_space<vmem>>, vector<16x1xf32>
    %165 = vector.broadcast %164 : vector<16x1xf32> to vector<16x80xf32>
    %166 = arith.mulf %163, %165 : vector<16x80xf32>
    %c0_204 = arith.constant 0 : index
    %c0_205 = arith.constant 0 : index
    %167 = vector.load %arg4[%c0_204, %c0_205] : memref<16x1xf32, #tpu.memory_space<vmem>>, vector<16x1xf32>
    %168 = vector.broadcast %167 : vector<16x1xf32> to vector<16x80xf32>
    %169 = arith.addf %166, %168 : vector<16x80xf32>
    %cst_206 = arith.constant 0.000000e+00 : f32
    %170 = vector.broadcast %cst_206 : f32 to vector<16x80xf32>
    %171 = arith.maximumf %169, %170 : vector<16x80xf32>
    %172 = arith.maximumf %114, %171 : vector<16x80xf32>
    %c0_207 = arith.constant 0 : index
    %c3_208 = arith.constant 3 : index
    %c0_209 = arith.constant 0 : index
    %c0_210 = arith.constant 0 : index
    %173 = vector.load %arg1[%c0_207, %c3_208, %c0_209, %c0_210] : memref<1x4x8x100xbf16, #tpu.memory_space<vmem>>, vector<1x1x8x80xbf16>
    %174 = vector.shape_cast %173 : vector<1x1x8x80xbf16> to vector<8x80xbf16>
    %c1_211 = arith.constant 1 : index
    %c0_212 = arith.constant 0 : index
    %c0_213 = arith.constant 0 : index
    %175 = vector.load %arg7[%c1_211, %c0_212, %c0_213] : memref<2x72x80xbf16, #tpu.memory_space<vmem>>, vector<1x8x80xbf16>
    %176 = vector.shape_cast %175 : vector<1x8x80xbf16> to vector<8x80xbf16>
    %177 = vector.shape_cast %174 : vector<8x80xbf16> to vector<1x8x80xbf16>
    tpu.vector_store %arg7[%c1_211, %c0_212, %c0_213], %177 {strides = array<i32>} : memref<2x72x80xbf16, #tpu.memory_space<vmem>>, vector<1x8x80xbf16>,
    %c0_214 = arith.constant 0 : index
    %c2_215 = arith.constant 2 : index
    %c0_216 = arith.constant 0 : index
    %c1_217 = arith.constant 1 : index
    %178 = vector.load %arg1[%c0_214, %c2_215, %c0_216, %c1_217] : memref<1x4x8x100xbf16, #tpu.memory_space<vmem>>, vector<1x1x8x80xbf16>
    %179 = vector.shape_cast %178 : vector<1x1x8x80xbf16> to vector<8x80xbf16>
    %c1_218 = arith.constant 1 : index
    %c8_219 = arith.constant 8 : index
    %c0_220 = arith.constant 0 : index
    %180 = vector.load %arg7[%c1_218, %c8_219, %c0_220] : memref<2x72x80xbf16, #tpu.memory_space<vmem>>, vector<1x8x80xbf16>
    %181 = vector.shape_cast %180 : vector<1x8x80xbf16> to vector<8x80xbf16>
    %182 = vector.shape_cast %179 : vector<8x80xbf16> to vector<1x8x80xbf16>
    tpu.vector_store %arg7[%c1_218, %c8_219, %c0_220], %182 {strides = array<i32>} : memref<2x72x80xbf16, #tpu.memory_space<vmem>>, vector<1x8x80xbf16>,
    %c0_221 = arith.constant 0 : index
    %c3_222 = arith.constant 3 : index
    %c0_223 = arith.constant 0 : index
    %c1_224 = arith.constant 1 : index
    %183 = vector.load %arg1[%c0_221, %c3_222, %c0_223, %c1_224] : memref<1x4x8x100xbf16, #tpu.memory_space<vmem>>, vector<1x1x8x80xbf16>
    %184 = vector.shape_cast %183 : vector<1x1x8x80xbf16> to vector<8x80xbf16>
    %c1_225 = arith.constant 1 : index
    %c16_226 = arith.constant 16 : index
    %c0_227 = arith.constant 0 : index
    %185 = vector.load %arg7[%c1_225, %c16_226, %c0_227] : memref<2x72x80xbf16, #tpu.memory_space<vmem>>, vector<1x8x80xbf16>
    %186 = vector.shape_cast %185 : vector<1x8x80xbf16> to vector<8x80xbf16>
    %187 = vector.shape_cast %184 : vector<8x80xbf16> to vector<1x8x80xbf16>
    tpu.vector_store %arg7[%c1_225, %c16_226, %c0_227], %187 {strides = array<i32>} : memref<2x72x80xbf16, #tpu.memory_space<vmem>>, vector<1x8x80xbf16>,
    %c0_228 = arith.constant 0 : index
    %c1_229 = arith.constant 1 : index
    %c0_230 = arith.constant 0 : index
    %c10_231 = arith.constant 10 : index
    %188 = vector.load %arg1[%c0_228, %c1_229, %c0_230, %c10_231] : memref<1x4x8x100xbf16, #tpu.memory_space<vmem>>, vector<1x1x8x80xbf16>
    %189 = vector.shape_cast %188 : vector<1x1x8x80xbf16> to vector<8x80xbf16>
    %c1_232 = arith.constant 1 : index
    %c24_233 = arith.constant 24 : index
    %c0_234 = arith.constant 0 : index
    %190 = vector.load %arg7[%c1_232, %c24_233, %c0_234] : memref<2x72x80xbf16, #tpu.memory_space<vmem>>, vector<1x8x80xbf16>
    %191 = vector.shape_cast %190 : vector<1x8x80xbf16> to vector<8x80xbf16>
    %192 = vector.shape_cast %189 : vector<8x80xbf16> to vector<1x8x80xbf16>
    tpu.vector_store %arg7[%c1_232, %c24_233, %c0_234], %192 {strides = array<i32>} : memref<2x72x80xbf16, #tpu.memory_space<vmem>>, vector<1x8x80xbf16>,
    %c0_235 = arith.constant 0 : index
    %c0_236 = arith.constant 0 : index
    %c0_237 = arith.constant 0 : index
    %c11_238 = arith.constant 11 : index
    %193 = vector.load %arg1[%c0_235, %c0_236, %c0_237, %c11_238] : memref<1x4x8x100xbf16, #tpu.memory_space<vmem>>, vector<1x1x8x80xbf16>
    %194 = vector.shape_cast %193 : vector<1x1x8x80xbf16> to vector<8x80xbf16>
    %c1_239 = arith.constant 1 : index
    %c32_240 = arith.constant 32 : index
    %c0_241 = arith.constant 0 : index
    %195 = vector.load %arg7[%c1_239, %c32_240, %c0_241] : memref<2x72x80xbf16, #tpu.memory_space<vmem>>, vector<1x8x80xbf16>
    %196 = vector.shape_cast %195 : vector<1x8x80xbf16> to vector<8x80xbf16>
    %197 = vector.shape_cast %194 : vector<8x80xbf16> to vector<1x8x80xbf16>
    tpu.vector_store %arg7[%c1_239, %c32_240, %c0_241], %197 {strides = array<i32>} : memref<2x72x80xbf16, #tpu.memory_space<vmem>>, vector<1x8x80xbf16>,
    %c0_242 = arith.constant 0 : index
    %c1_243 = arith.constant 1 : index
    %c0_244 = arith.constant 0 : index
    %c11_245 = arith.constant 11 : index
    %198 = vector.load %arg1[%c0_242, %c1_243, %c0_244, %c11_245] : memref<1x4x8x100xbf16, #tpu.memory_space<vmem>>, vector<1x1x8x80xbf16>
    %199 = vector.shape_cast %198 : vector<1x1x8x80xbf16> to vector<8x80xbf16>
    %c1_246 = arith.constant 1 : index
    %c40_247 = arith.constant 40 : index
    %c0_248 = arith.constant 0 : index
    %200 = vector.load %arg7[%c1_246, %c40_247, %c0_248] : memref<2x72x80xbf16, #tpu.memory_space<vmem>>, vector<1x8x80xbf16>
    %201 = vector.shape_cast %200 : vector<1x8x80xbf16> to vector<8x80xbf16>
    %202 = vector.shape_cast %199 : vector<8x80xbf16> to vector<1x8x80xbf16>
    tpu.vector_store %arg7[%c1_246, %c40_247, %c0_248], %202 {strides = array<i32>} : memref<2x72x80xbf16, #tpu.memory_space<vmem>>, vector<1x8x80xbf16>,
    %c0_249 = arith.constant 0 : index
    %c3_250 = arith.constant 3 : index
    %c0_251 = arith.constant 0 : index
    %c10_252 = arith.constant 10 : index
    %203 = vector.load %arg1[%c0_249, %c3_250, %c0_251, %c10_252] : memref<1x4x8x100xbf16, #tpu.memory_space<vmem>>, vector<1x1x8x80xbf16>
    %204 = vector.shape_cast %203 : vector<1x1x8x80xbf16> to vector<8x80xbf16>
    %c1_253 = arith.constant 1 : index
    %c48_254 = arith.constant 48 : index
    %c0_255 = arith.constant 0 : index
    %205 = vector.load %arg7[%c1_253, %c48_254, %c0_255] : memref<2x72x80xbf16, #tpu.memory_space<vmem>>, vector<1x8x80xbf16>
    %206 = vector.shape_cast %205 : vector<1x8x80xbf16> to vector<8x80xbf16>
    %207 = vector.shape_cast %204 : vector<8x80xbf16> to vector<1x8x80xbf16>
    tpu.vector_store %arg7[%c1_253, %c48_254, %c0_255], %207 {strides = array<i32>} : memref<2x72x80xbf16, #tpu.memory_space<vmem>>, vector<1x8x80xbf16>,
    %c0_256 = arith.constant 0 : index
    %c2_257 = arith.constant 2 : index
    %c0_258 = arith.constant 0 : index
    %c11_259 = arith.constant 11 : index
    %208 = vector.load %arg1[%c0_256, %c2_257, %c0_258, %c11_259] : memref<1x4x8x100xbf16, #tpu.memory_space<vmem>>, vector<1x1x8x80xbf16>
    %209 = vector.shape_cast %208 : vector<1x1x8x80xbf16> to vector<8x80xbf16>
    %c1_260 = arith.constant 1 : index
    %c56_261 = arith.constant 56 : index
    %c0_262 = arith.constant 0 : index
    %210 = vector.load %arg7[%c1_260, %c56_261, %c0_262] : memref<2x72x80xbf16, #tpu.memory_space<vmem>>, vector<1x8x80xbf16>
    %211 = vector.shape_cast %210 : vector<1x8x80xbf16> to vector<8x80xbf16>
    %212 = vector.shape_cast %209 : vector<8x80xbf16> to vector<1x8x80xbf16>
    tpu.vector_store %arg7[%c1_260, %c56_261, %c0_262], %212 {strides = array<i32>} : memref<2x72x80xbf16, #tpu.memory_space<vmem>>, vector<1x8x80xbf16>,
    %c0_263 = arith.constant 0 : index
    %c3_264 = arith.constant 3 : index
    %c0_265 = arith.constant 0 : index
    %c11_266 = arith.constant 11 : index
    %213 = vector.load %arg1[%c0_263, %c3_264, %c0_265, %c11_266] : memref<1x4x8x100xbf16, #tpu.memory_space<vmem>>, vector<1x1x8x80xbf16>
    %214 = vector.shape_cast %213 : vector<1x1x8x80xbf16> to vector<8x80xbf16>
    %c1_267 = arith.constant 1 : index
    %c64_268 = arith.constant 64 : index
    %c0_269 = arith.constant 0 : index
    %215 = vector.load %arg7[%c1_267, %c64_268, %c0_269] : memref<2x72x80xbf16, #tpu.memory_space<vmem>>, vector<1x8x80xbf16>
    %216 = vector.shape_cast %215 : vector<1x8x80xbf16> to vector<8x80xbf16>
    %217 = vector.shape_cast %214 : vector<8x80xbf16> to vector<1x8x80xbf16>
    tpu.vector_store %arg7[%c1_267, %c64_268, %c0_269], %217 {strides = array<i32>} : memref<2x72x80xbf16, #tpu.memory_space<vmem>>, vector<1x8x80xbf16>,
    %c0_270 = arith.constant 0 : index
    %c0_271 = arith.constant 0 : index
    %218 = vector.load %arg2[%c0_270, %c0_271] : memref<16x72xbf16, #tpu.memory_space<vmem>>, vector<16x72xbf16>
    %c1_272 = arith.constant 1 : index
    %c0_273 = arith.constant 0 : index
    %c0_274 = arith.constant 0 : index
    %219 = vector.load %arg7[%c1_272, %c0_273, %c0_274] : memref<2x72x80xbf16, #tpu.memory_space<vmem>>, vector<1x72x80xbf16>
    %220 = vector.shape_cast %219 : vector<1x72x80xbf16> to vector<72x80xbf16>
    %cst_275 = arith.constant dense<0.000000e+00> : vector<16x80xf32>
    %221 = tpu.matmul %218, %220, %cst_275 {dimension_numbers = #tpu.dot_dimension_numbers<[1], [0], [0], [1], [0, 0, 1, 1], [], []>} : vector<16x72xbf16>, vector<72x80xbf16>, vector<16x80xf32> -> vector<16x80xf32>
    %c0_276 = arith.constant 0 : index
    %c0_277 = arith.constant 0 : index
    %222 = vector.load %arg3[%c0_276, %c0_277] : memref<16x1xf32, #tpu.memory_space<vmem>>, vector<16x1xf32>
    %223 = vector.broadcast %222 : vector<16x1xf32> to vector<16x80xf32>
    %224 = arith.mulf %221, %223 : vector<16x80xf32>
    %c0_278 = arith.constant 0 : index
    %c0_279 = arith.constant 0 : index
    %225 = vector.load %arg4[%c0_278, %c0_279] : memref<16x1xf32, #tpu.memory_space<vmem>>, vector<16x1xf32>
    %226 = vector.broadcast %225 : vector<16x1xf32> to vector<16x80xf32>
    %227 = arith.addf %224, %226 : vector<16x80xf32>
    %cst_280 = arith.constant 0.000000e+00 : f32
    %228 = vector.broadcast %cst_280 : f32 to vector<16x80xf32>
    %229 = arith.maximumf %227, %228 : vector<16x80xf32>
    %230 = arith.maximumf %172, %229 : vector<16x80xf32>
    %c0_281 = arith.constant 0 : index
    %c0_282 = arith.constant 0 : index
    %231 = vector.load %arg5[%c0_281, %c0_282] : memref<1x80xf32, #tpu.memory_space<vmem>>, vector<1x80xf32>
    %232 = vector.broadcast %231 : vector<1x80xf32> to vector<16x80xf32>
    %233 = arith.mulf %230, %232 : vector<16x80xf32>
    %cst_283 = arith.constant 0.000000e+00 : bf16
    %234 = vector.broadcast %cst_283 : bf16 to vector<16x110xbf16>
    %c0_284 = arith.constant 0 : index
    %c0_285 = arith.constant 0 : index
    %c0_286 = arith.constant 0 : index
    %235 = vector.load %arg6[%c0_284, %c0_285, %c0_286] : memref<1x16x110xbf16, #tpu.memory_space<vmem>>, vector<1x16x110xbf16>
    %236 = vector.shape_cast %235 : vector<1x16x110xbf16> to vector<16x110xbf16>
    %237 = vector.shape_cast %234 : vector<16x110xbf16> to vector<1x16x110xbf16>
    tpu.vector_store %arg6[%c0_284, %c0_285, %c0_286], %237 {strides = array<i32>} : memref<1x16x110xbf16, #tpu.memory_space<vmem>>, vector<1x16x110xbf16>,
    %238 = arith.truncf %233 : vector<16x80xf32> to vector<16x80xbf16>
    %c0_287 = arith.constant 0 : index
    %c0_288 = arith.constant 0 : index
    %c11_289 = arith.constant 11 : index
    %239 = vector.load %arg6[%c0_287, %c0_288, %c11_289] : memref<1x16x110xbf16, #tpu.memory_space<vmem>>, vector<1x16x80xbf16>
    %240 = vector.shape_cast %239 : vector<1x16x80xbf16> to vector<16x80xbf16>
    %241 = vector.shape_cast %238 : vector<16x80xbf16> to vector<1x16x80xbf16>
    tpu.vector_store %arg6[%c0_287, %c0_288, %c11_289], %241 {strides = array<i32>} : memref<1x16x110xbf16, #tpu.memory_space<vmem>>, vector<1x16x80xbf16>,
    return
  }
  func.func @transform_0(%arg0: i32) -> (i32, i32, i32, i32) {
    %c0_i32 = arith.constant 0 : i32
    %c0_i32_0 = arith.constant 0 : i32
    %c0_i32_1 = arith.constant 0 : i32
    %c0_i32_2 = arith.constant 0 : i32
    return %arg0, %c0_i32, %c0_i32_0, %c0_i32_1 : i32, i32, i32, i32
  }
  func.func @transform_1(%arg0: i32) -> (i32, i32) {
    %c0_i32 = arith.constant 0 : i32
    %c0_i32_0 = arith.constant 0 : i32
    %c0_i32_1 = arith.constant 0 : i32
    return %c0_i32, %c0_i32_0 : i32, i32
  }
  func.func @transform_2(%arg0: i32) -> (i32, i32) {
    %c0_i32 = arith.constant 0 : i32
    %c0_i32_0 = arith.constant 0 : i32
    %c0_i32_1 = arith.constant 0 : i32
    return %c0_i32, %c0_i32_0 : i32, i32
  }
  func.func @transform_3(%arg0: i32) -> (i32, i32) {
    %c0_i32 = arith.constant 0 : i32
    %c0_i32_0 = arith.constant 0 : i32
    %c0_i32_1 = arith.constant 0 : i32
    return %c0_i32, %c0_i32_0 : i32, i32
  }
  func.func @transform_4(%arg0: i32) -> (i32, i32) {
    %c0_i32 = arith.constant 0 : i32
    %c0_i32_0 = arith.constant 0 : i32
    %c0_i32_1 = arith.constant 0 : i32
    return %c0_i32, %c0_i32_0 : i32, i32
  }
  func.func @transform_5(%arg0: i32) -> (i32, i32, i32) {
    %c0_i32 = arith.constant 0 : i32
    %c0_i32_0 = arith.constant 0 : i32
    %c0_i32_1 = arith.constant 0 : i32
    return %arg0, %c0_i32, %c0_i32_0 : i32, i32, i32
  }
}

module attributes {stable_mosaic.version = 11 : i64} {
  func.func @_conv_mid_kernel(%arg0: i32, %arg1: memref<1x16x110xbf16, #tpu.memory_space<vmem>>, %arg2: memref<24x144xbf16, #tpu.memory_space<vmem>>, %arg3: memref<24x1xf32, #tpu.memory_space<vmem>>, %arg4: memref<24x1xf32, #tpu.memory_space<vmem>>, %arg5: memref<1x80xf32, #tpu.memory_space<vmem>>, %arg6: memref<1x24x110xbf16, #tpu.memory_space<vmem>>, %arg7: memref<144x80xbf16, #tpu.memory_space<vmem>>) attributes {dimension_semantics = [#tpu.dimension_semantics<parallel>], iteration_bounds = array<i64: 2>, scalar_prefetch = 0 : i64, scratch_operands = 1 : i64, tpu.core_type = #tpu.core_type<tc>, window_params = [{transform_indices = @transform_0, window_bounds = array<i64: 1, 16, 110>}, {pipeline_mode = #tpu.pipeline_mode<synchronous>, transform_indices = @transform_1, window_bounds = array<i64: 24, 144>}, {pipeline_mode = #tpu.pipeline_mode<synchronous>, transform_indices = @transform_2, window_bounds = array<i64: 24, 1>}, {pipeline_mode = #tpu.pipeline_mode<synchronous>, transform_indices = @transform_3, window_bounds = array<i64: 24, 1>}, {pipeline_mode = #tpu.pipeline_mode<synchronous>, transform_indices = @transform_4, window_bounds = array<i64: 1, 80>}, {transform_indices = @transform_5, window_bounds = array<i64: 1, 24, 110>}]} {
    %c0 = arith.constant 0 : index
    %c0_0 = arith.constant 0 : index
    %c0_1 = arith.constant 0 : index
    %0 = vector.load %arg1[%c0, %c0_0, %c0_1] : memref<1x16x110xbf16, #tpu.memory_space<vmem>>, vector<1x16x80xbf16>
    %1 = vector.shape_cast %0 : vector<1x16x80xbf16> to vector<16x80xbf16>
    %c0_2 = arith.constant 0 : index
    %c0_3 = arith.constant 0 : index
    %2 = vector.load %arg7[%c0_2, %c0_3] : memref<144x80xbf16, #tpu.memory_space<vmem>>, vector<16x80xbf16>
    tpu.vector_store %arg7[%c0_2, %c0_3], %1 {strides = array<i32>} : memref<144x80xbf16, #tpu.memory_space<vmem>>, vector<16x80xbf16>,
    %c0_4 = arith.constant 0 : index
    %c0_5 = arith.constant 0 : index
    %c1 = arith.constant 1 : index
    %3 = vector.load %arg1[%c0_4, %c0_5, %c1] : memref<1x16x110xbf16, #tpu.memory_space<vmem>>, vector<1x16x80xbf16>
    %4 = vector.shape_cast %3 : vector<1x16x80xbf16> to vector<16x80xbf16>
    %c16 = arith.constant 16 : index
    %c0_6 = arith.constant 0 : index
    %5 = vector.load %arg7[%c16, %c0_6] : memref<144x80xbf16, #tpu.memory_space<vmem>>, vector<16x80xbf16>
    tpu.vector_store %arg7[%c16, %c0_6], %4 {strides = array<i32>} : memref<144x80xbf16, #tpu.memory_space<vmem>>, vector<16x80xbf16>,
    %c0_7 = arith.constant 0 : index
    %c0_8 = arith.constant 0 : index
    %c2 = arith.constant 2 : index
    %6 = vector.load %arg1[%c0_7, %c0_8, %c2] : memref<1x16x110xbf16, #tpu.memory_space<vmem>>, vector<1x16x80xbf16>
    %7 = vector.shape_cast %6 : vector<1x16x80xbf16> to vector<16x80xbf16>
    %c32 = arith.constant 32 : index
    %c0_9 = arith.constant 0 : index
    %8 = vector.load %arg7[%c32, %c0_9] : memref<144x80xbf16, #tpu.memory_space<vmem>>, vector<16x80xbf16>
    tpu.vector_store %arg7[%c32, %c0_9], %7 {strides = array<i32>} : memref<144x80xbf16, #tpu.memory_space<vmem>>, vector<16x80xbf16>,
    %c0_10 = arith.constant 0 : index
    %c0_11 = arith.constant 0 : index
    %c10 = arith.constant 10 : index
    %9 = vector.load %arg1[%c0_10, %c0_11, %c10] : memref<1x16x110xbf16, #tpu.memory_space<vmem>>, vector<1x16x80xbf16>
    %10 = vector.shape_cast %9 : vector<1x16x80xbf16> to vector<16x80xbf16>
    %c48 = arith.constant 48 : index
    %c0_12 = arith.constant 0 : index
    %11 = vector.load %arg7[%c48, %c0_12] : memref<144x80xbf16, #tpu.memory_space<vmem>>, vector<16x80xbf16>
    tpu.vector_store %arg7[%c48, %c0_12], %10 {strides = array<i32>} : memref<144x80xbf16, #tpu.memory_space<vmem>>, vector<16x80xbf16>,
    %c0_13 = arith.constant 0 : index
    %c0_14 = arith.constant 0 : index
    %c11 = arith.constant 11 : index
    %12 = vector.load %arg1[%c0_13, %c0_14, %c11] : memref<1x16x110xbf16, #tpu.memory_space<vmem>>, vector<1x16x80xbf16>
    %13 = vector.shape_cast %12 : vector<1x16x80xbf16> to vector<16x80xbf16>
    %c64 = arith.constant 64 : index
    %c0_15 = arith.constant 0 : index
    %14 = vector.load %arg7[%c64, %c0_15] : memref<144x80xbf16, #tpu.memory_space<vmem>>, vector<16x80xbf16>
    tpu.vector_store %arg7[%c64, %c0_15], %13 {strides = array<i32>} : memref<144x80xbf16, #tpu.memory_space<vmem>>, vector<16x80xbf16>,
    %c0_16 = arith.constant 0 : index
    %c0_17 = arith.constant 0 : index
    %c12 = arith.constant 12 : index
    %15 = vector.load %arg1[%c0_16, %c0_17, %c12] : memref<1x16x110xbf16, #tpu.memory_space<vmem>>, vector<1x16x80xbf16>
    %16 = vector.shape_cast %15 : vector<1x16x80xbf16> to vector<16x80xbf16>
    %c80 = arith.constant 80 : index
    %c0_18 = arith.constant 0 : index
    %17 = vector.load %arg7[%c80, %c0_18] : memref<144x80xbf16, #tpu.memory_space<vmem>>, vector<16x80xbf16>
    tpu.vector_store %arg7[%c80, %c0_18], %16 {strides = array<i32>} : memref<144x80xbf16, #tpu.memory_space<vmem>>, vector<16x80xbf16>,
    %c0_19 = arith.constant 0 : index
    %c0_20 = arith.constant 0 : index
    %c20 = arith.constant 20 : index
    %18 = vector.load %arg1[%c0_19, %c0_20, %c20] : memref<1x16x110xbf16, #tpu.memory_space<vmem>>, vector<1x16x80xbf16>
    %19 = vector.shape_cast %18 : vector<1x16x80xbf16> to vector<16x80xbf16>
    %c96 = arith.constant 96 : index
    %c0_21 = arith.constant 0 : index
    %20 = vector.load %arg7[%c96, %c0_21] : memref<144x80xbf16, #tpu.memory_space<vmem>>, vector<16x80xbf16>
    tpu.vector_store %arg7[%c96, %c0_21], %19 {strides = array<i32>} : memref<144x80xbf16, #tpu.memory_space<vmem>>, vector<16x80xbf16>,
    %c0_22 = arith.constant 0 : index
    %c0_23 = arith.constant 0 : index
    %c21 = arith.constant 21 : index
    %21 = vector.load %arg1[%c0_22, %c0_23, %c21] : memref<1x16x110xbf16, #tpu.memory_space<vmem>>, vector<1x16x80xbf16>
    %22 = vector.shape_cast %21 : vector<1x16x80xbf16> to vector<16x80xbf16>
    %c112 = arith.constant 112 : index
    %c0_24 = arith.constant 0 : index
    %23 = vector.load %arg7[%c112, %c0_24] : memref<144x80xbf16, #tpu.memory_space<vmem>>, vector<16x80xbf16>
    tpu.vector_store %arg7[%c112, %c0_24], %22 {strides = array<i32>} : memref<144x80xbf16, #tpu.memory_space<vmem>>, vector<16x80xbf16>,
    %c0_25 = arith.constant 0 : index
    %c0_26 = arith.constant 0 : index
    %c22 = arith.constant 22 : index
    %24 = vector.load %arg1[%c0_25, %c0_26, %c22] : memref<1x16x110xbf16, #tpu.memory_space<vmem>>, vector<1x16x80xbf16>
    %25 = vector.shape_cast %24 : vector<1x16x80xbf16> to vector<16x80xbf16>
    %c128 = arith.constant 128 : index
    %c0_27 = arith.constant 0 : index
    %26 = vector.load %arg7[%c128, %c0_27] : memref<144x80xbf16, #tpu.memory_space<vmem>>, vector<16x80xbf16>
    tpu.vector_store %arg7[%c128, %c0_27], %25 {strides = array<i32>} : memref<144x80xbf16, #tpu.memory_space<vmem>>, vector<16x80xbf16>,
    %c0_28 = arith.constant 0 : index
    %c0_29 = arith.constant 0 : index
    %27 = vector.load %arg2[%c0_28, %c0_29] : memref<24x144xbf16, #tpu.memory_space<vmem>>, vector<24x144xbf16>
    %c0_30 = arith.constant 0 : index
    %c0_31 = arith.constant 0 : index
    %28 = vector.load %arg7[%c0_30, %c0_31] : memref<144x80xbf16, #tpu.memory_space<vmem>>, vector<144x80xbf16>
    %cst = arith.constant dense<0.000000e+00> : vector<24x80xf32>
    %29 = tpu.matmul %27, %28, %cst {dimension_numbers = #tpu.dot_dimension_numbers<[1], [0], [0], [1], [0, 0, 1, 1], [], []>} : vector<24x144xbf16>, vector<144x80xbf16>, vector<24x80xf32> -> vector<24x80xf32>
    %c0_32 = arith.constant 0 : index
    %c0_33 = arith.constant 0 : index
    %30 = vector.load %arg3[%c0_32, %c0_33] : memref<24x1xf32, #tpu.memory_space<vmem>>, vector<24x1xf32>
    %31 = vector.broadcast %30 : vector<24x1xf32> to vector<24x80xf32>
    %32 = arith.mulf %29, %31 : vector<24x80xf32>
    %c0_34 = arith.constant 0 : index
    %c0_35 = arith.constant 0 : index
    %33 = vector.load %arg4[%c0_34, %c0_35] : memref<24x1xf32, #tpu.memory_space<vmem>>, vector<24x1xf32>
    %34 = vector.broadcast %33 : vector<24x1xf32> to vector<24x80xf32>
    %35 = arith.addf %32, %34 : vector<24x80xf32>
    %cst_36 = arith.constant 0.000000e+00 : f32
    %36 = vector.broadcast %cst_36 : f32 to vector<24x80xf32>
    %37 = arith.maximumf %35, %36 : vector<24x80xf32>
    %c0_37 = arith.constant 0 : index
    %c0_38 = arith.constant 0 : index
    %38 = vector.load %arg5[%c0_37, %c0_38] : memref<1x80xf32, #tpu.memory_space<vmem>>, vector<1x80xf32>
    %39 = vector.broadcast %38 : vector<1x80xf32> to vector<24x80xf32>
    %40 = arith.mulf %37, %39 : vector<24x80xf32>
    %cst_39 = arith.constant 0.000000e+00 : bf16
    %41 = vector.broadcast %cst_39 : bf16 to vector<24x110xbf16>
    %c0_40 = arith.constant 0 : index
    %c0_41 = arith.constant 0 : index
    %c0_42 = arith.constant 0 : index
    %42 = vector.load %arg6[%c0_40, %c0_41, %c0_42] : memref<1x24x110xbf16, #tpu.memory_space<vmem>>, vector<1x24x110xbf16>
    %43 = vector.shape_cast %42 : vector<1x24x110xbf16> to vector<24x110xbf16>
    %44 = vector.shape_cast %41 : vector<24x110xbf16> to vector<1x24x110xbf16>
    tpu.vector_store %arg6[%c0_40, %c0_41, %c0_42], %44 {strides = array<i32>} : memref<1x24x110xbf16, #tpu.memory_space<vmem>>, vector<1x24x110xbf16>,
    %45 = arith.truncf %40 : vector<24x80xf32> to vector<24x80xbf16>
    %c0_43 = arith.constant 0 : index
    %c0_44 = arith.constant 0 : index
    %c11_45 = arith.constant 11 : index
    %46 = vector.load %arg6[%c0_43, %c0_44, %c11_45] : memref<1x24x110xbf16, #tpu.memory_space<vmem>>, vector<1x24x80xbf16>
    %47 = vector.shape_cast %46 : vector<1x24x80xbf16> to vector<24x80xbf16>
    %48 = vector.shape_cast %45 : vector<24x80xbf16> to vector<1x24x80xbf16>
    tpu.vector_store %arg6[%c0_43, %c0_44, %c11_45], %48 {strides = array<i32>} : memref<1x24x110xbf16, #tpu.memory_space<vmem>>, vector<1x24x80xbf16>,
    return
  }
  func.func @transform_0(%arg0: i32) -> (i32, i32, i32) {
    %c0_i32 = arith.constant 0 : i32
    %c0_i32_0 = arith.constant 0 : i32
    %c0_i32_1 = arith.constant 0 : i32
    return %arg0, %c0_i32, %c0_i32_0 : i32, i32, i32
  }
  func.func @transform_1(%arg0: i32) -> (i32, i32) {
    %c0_i32 = arith.constant 0 : i32
    %c0_i32_0 = arith.constant 0 : i32
    %c0_i32_1 = arith.constant 0 : i32
    return %c0_i32, %c0_i32_0 : i32, i32
  }
  func.func @transform_2(%arg0: i32) -> (i32, i32) {
    %c0_i32 = arith.constant 0 : i32
    %c0_i32_0 = arith.constant 0 : i32
    %c0_i32_1 = arith.constant 0 : i32
    return %c0_i32, %c0_i32_0 : i32, i32
  }
  func.func @transform_3(%arg0: i32) -> (i32, i32) {
    %c0_i32 = arith.constant 0 : i32
    %c0_i32_0 = arith.constant 0 : i32
    %c0_i32_1 = arith.constant 0 : i32
    return %c0_i32, %c0_i32_0 : i32, i32
  }
  func.func @transform_4(%arg0: i32) -> (i32, i32) {
    %c0_i32 = arith.constant 0 : i32
    %c0_i32_0 = arith.constant 0 : i32
    %c0_i32_1 = arith.constant 0 : i32
    return %c0_i32, %c0_i32_0 : i32, i32
  }
  func.func @transform_5(%arg0: i32) -> (i32, i32, i32) {
    %c0_i32 = arith.constant 0 : i32
    %c0_i32_0 = arith.constant 0 : i32
    %c0_i32_1 = arith.constant 0 : i32
    return %arg0, %c0_i32, %c0_i32_0 : i32, i32, i32
  }
}

module attributes {stable_mosaic.version = 11 : i64} {
  func.func @_conv_fc_kernel(%arg0: i32, %arg1: memref<1x24x110xbf16, #tpu.memory_space<vmem>>, %arg2: memref<32x216xbf16, #tpu.memory_space<vmem>>, %arg3: memref<32x1xf32, #tpu.memory_space<vmem>>, %arg4: memref<32x1xf32, #tpu.memory_space<vmem>>, %arg5: memref<1x80xf32, #tpu.memory_space<vmem>>, %arg6: memref<384x80xbf16, #tpu.memory_space<vmem>>, %arg7: memref<384x32xf32, #tpu.memory_space<vmem>>, %arg8: memref<12x384xf32, #tpu.memory_space<vmem>>, %arg9: memref<12x1xf32, #tpu.memory_space<vmem>>, %arg10: memref<1x12x1xf32, #tpu.memory_space<vmem>>, %arg11: memref<216x80xbf16, #tpu.memory_space<vmem>>) attributes {dimension_semantics = [#tpu.dimension_semantics<parallel>], iteration_bounds = array<i64: 2>, scalar_prefetch = 0 : i64, scratch_operands = 1 : i64, tpu.core_type = #tpu.core_type<tc>, window_params = [{transform_indices = @transform_0, window_bounds = array<i64: 1, 24, 110>}, {pipeline_mode = #tpu.pipeline_mode<synchronous>, transform_indices = @transform_1, window_bounds = array<i64: 32, 216>}, {pipeline_mode = #tpu.pipeline_mode<synchronous>, transform_indices = @transform_2, window_bounds = array<i64: 32, 1>}, {pipeline_mode = #tpu.pipeline_mode<synchronous>, transform_indices = @transform_3, window_bounds = array<i64: 32, 1>}, {pipeline_mode = #tpu.pipeline_mode<synchronous>, transform_indices = @transform_4, window_bounds = array<i64: 1, 80>}, {pipeline_mode = #tpu.pipeline_mode<synchronous>, transform_indices = @transform_5, window_bounds = array<i64: 384, 80>}, {pipeline_mode = #tpu.pipeline_mode<synchronous>, transform_indices = @transform_6, window_bounds = array<i64: 384, 32>}, {pipeline_mode = #tpu.pipeline_mode<synchronous>, transform_indices = @transform_7, window_bounds = array<i64: 12, 384>}, {pipeline_mode = #tpu.pipeline_mode<synchronous>, transform_indices = @transform_8, window_bounds = array<i64: 12, 1>}, {transform_indices = @transform_9, window_bounds = array<i64: 1, 12, 1>}]} {
    %c0 = arith.constant 0 : index
    %c0_0 = arith.constant 0 : index
    %c0_1 = arith.constant 0 : index
    %0 = vector.load %arg1[%c0, %c0_0, %c0_1] : memref<1x24x110xbf16, #tpu.memory_space<vmem>>, vector<1x24x80xbf16>
    %1 = vector.shape_cast %0 : vector<1x24x80xbf16> to vector<24x80xbf16>
    %c0_2 = arith.constant 0 : index
    %c0_3 = arith.constant 0 : index
    %2 = vector.load %arg11[%c0_2, %c0_3] : memref<216x80xbf16, #tpu.memory_space<vmem>>, vector<24x80xbf16>
    tpu.vector_store %arg11[%c0_2, %c0_3], %1 {strides = array<i32>} : memref<216x80xbf16, #tpu.memory_space<vmem>>, vector<24x80xbf16>,
    %c0_4 = arith.constant 0 : index
    %c0_5 = arith.constant 0 : index
    %c1 = arith.constant 1 : index
    %3 = vector.load %arg1[%c0_4, %c0_5, %c1] : memref<1x24x110xbf16, #tpu.memory_space<vmem>>, vector<1x24x80xbf16>
    %4 = vector.shape_cast %3 : vector<1x24x80xbf16> to vector<24x80xbf16>
    %c24 = arith.constant 24 : index
    %c0_6 = arith.constant 0 : index
    %5 = vector.load %arg11[%c24, %c0_6] : memref<216x80xbf16, #tpu.memory_space<vmem>>, vector<24x80xbf16>
    tpu.vector_store %arg11[%c24, %c0_6], %4 {strides = array<i32>} : memref<216x80xbf16, #tpu.memory_space<vmem>>, vector<24x80xbf16>,
    %c0_7 = arith.constant 0 : index
    %c0_8 = arith.constant 0 : index
    %c2 = arith.constant 2 : index
    %6 = vector.load %arg1[%c0_7, %c0_8, %c2] : memref<1x24x110xbf16, #tpu.memory_space<vmem>>, vector<1x24x80xbf16>
    %7 = vector.shape_cast %6 : vector<1x24x80xbf16> to vector<24x80xbf16>
    %c48 = arith.constant 48 : index
    %c0_9 = arith.constant 0 : index
    %8 = vector.load %arg11[%c48, %c0_9] : memref<216x80xbf16, #tpu.memory_space<vmem>>, vector<24x80xbf16>
    tpu.vector_store %arg11[%c48, %c0_9], %7 {strides = array<i32>} : memref<216x80xbf16, #tpu.memory_space<vmem>>, vector<24x80xbf16>,
    %c0_10 = arith.constant 0 : index
    %c0_11 = arith.constant 0 : index
    %c10 = arith.constant 10 : index
    %9 = vector.load %arg1[%c0_10, %c0_11, %c10] : memref<1x24x110xbf16, #tpu.memory_space<vmem>>, vector<1x24x80xbf16>
    %10 = vector.shape_cast %9 : vector<1x24x80xbf16> to vector<24x80xbf16>
    %c72 = arith.constant 72 : index
    %c0_12 = arith.constant 0 : index
    %11 = vector.load %arg11[%c72, %c0_12] : memref<216x80xbf16, #tpu.memory_space<vmem>>, vector<24x80xbf16>
    tpu.vector_store %arg11[%c72, %c0_12], %10 {strides = array<i32>} : memref<216x80xbf16, #tpu.memory_space<vmem>>, vector<24x80xbf16>,
    %c0_13 = arith.constant 0 : index
    %c0_14 = arith.constant 0 : index
    %c11 = arith.constant 11 : index
    %12 = vector.load %arg1[%c0_13, %c0_14, %c11] : memref<1x24x110xbf16, #tpu.memory_space<vmem>>, vector<1x24x80xbf16>
    %13 = vector.shape_cast %12 : vector<1x24x80xbf16> to vector<24x80xbf16>
    %c96 = arith.constant 96 : index
    %c0_15 = arith.constant 0 : index
    %14 = vector.load %arg11[%c96, %c0_15] : memref<216x80xbf16, #tpu.memory_space<vmem>>, vector<24x80xbf16>
    tpu.vector_store %arg11[%c96, %c0_15], %13 {strides = array<i32>} : memref<216x80xbf16, #tpu.memory_space<vmem>>, vector<24x80xbf16>,
    %c0_16 = arith.constant 0 : index
    %c0_17 = arith.constant 0 : index
    %c12 = arith.constant 12 : index
    %15 = vector.load %arg1[%c0_16, %c0_17, %c12] : memref<1x24x110xbf16, #tpu.memory_space<vmem>>, vector<1x24x80xbf16>
    %16 = vector.shape_cast %15 : vector<1x24x80xbf16> to vector<24x80xbf16>
    %c120 = arith.constant 120 : index
    %c0_18 = arith.constant 0 : index
    %17 = vector.load %arg11[%c120, %c0_18] : memref<216x80xbf16, #tpu.memory_space<vmem>>, vector<24x80xbf16>
    tpu.vector_store %arg11[%c120, %c0_18], %16 {strides = array<i32>} : memref<216x80xbf16, #tpu.memory_space<vmem>>, vector<24x80xbf16>,
    %c0_19 = arith.constant 0 : index
    %c0_20 = arith.constant 0 : index
    %c20 = arith.constant 20 : index
    %18 = vector.load %arg1[%c0_19, %c0_20, %c20] : memref<1x24x110xbf16, #tpu.memory_space<vmem>>, vector<1x24x80xbf16>
    %19 = vector.shape_cast %18 : vector<1x24x80xbf16> to vector<24x80xbf16>
    %c144 = arith.constant 144 : index
    %c0_21 = arith.constant 0 : index
    %20 = vector.load %arg11[%c144, %c0_21] : memref<216x80xbf16, #tpu.memory_space<vmem>>, vector<24x80xbf16>
    tpu.vector_store %arg11[%c144, %c0_21], %19 {strides = array<i32>} : memref<216x80xbf16, #tpu.memory_space<vmem>>, vector<24x80xbf16>,
    %c0_22 = arith.constant 0 : index
    %c0_23 = arith.constant 0 : index
    %c21 = arith.constant 21 : index
    %21 = vector.load %arg1[%c0_22, %c0_23, %c21] : memref<1x24x110xbf16, #tpu.memory_space<vmem>>, vector<1x24x80xbf16>
    %22 = vector.shape_cast %21 : vector<1x24x80xbf16> to vector<24x80xbf16>
    %c168 = arith.constant 168 : index
    %c0_24 = arith.constant 0 : index
    %23 = vector.load %arg11[%c168, %c0_24] : memref<216x80xbf16, #tpu.memory_space<vmem>>, vector<24x80xbf16>
    tpu.vector_store %arg11[%c168, %c0_24], %22 {strides = array<i32>} : memref<216x80xbf16, #tpu.memory_space<vmem>>, vector<24x80xbf16>,
    %c0_25 = arith.constant 0 : index
    %c0_26 = arith.constant 0 : index
    %c22 = arith.constant 22 : index
    %24 = vector.load %arg1[%c0_25, %c0_26, %c22] : memref<1x24x110xbf16, #tpu.memory_space<vmem>>, vector<1x24x80xbf16>
    %25 = vector.shape_cast %24 : vector<1x24x80xbf16> to vector<24x80xbf16>
    %c192 = arith.constant 192 : index
    %c0_27 = arith.constant 0 : index
    %26 = vector.load %arg11[%c192, %c0_27] : memref<216x80xbf16, #tpu.memory_space<vmem>>, vector<24x80xbf16>
    tpu.vector_store %arg11[%c192, %c0_27], %25 {strides = array<i32>} : memref<216x80xbf16, #tpu.memory_space<vmem>>, vector<24x80xbf16>,
    %c0_28 = arith.constant 0 : index
    %c0_29 = arith.constant 0 : index
    %27 = vector.load %arg2[%c0_28, %c0_29] : memref<32x216xbf16, #tpu.memory_space<vmem>>, vector<32x216xbf16>
    %c0_30 = arith.constant 0 : index
    %c0_31 = arith.constant 0 : index
    %28 = vector.load %arg11[%c0_30, %c0_31] : memref<216x80xbf16, #tpu.memory_space<vmem>>, vector<216x80xbf16>
    %cst = arith.constant dense<0.000000e+00> : vector<32x80xf32>
    %29 = tpu.matmul %27, %28, %cst {dimension_numbers = #tpu.dot_dimension_numbers<[1], [0], [0], [1], [0, 0, 1, 1], [], []>} : vector<32x216xbf16>, vector<216x80xbf16>, vector<32x80xf32> -> vector<32x80xf32>
    %c0_32 = arith.constant 0 : index
    %c0_33 = arith.constant 0 : index
    %30 = vector.load %arg3[%c0_32, %c0_33] : memref<32x1xf32, #tpu.memory_space<vmem>>, vector<32x1xf32>
    %31 = vector.broadcast %30 : vector<32x1xf32> to vector<32x80xf32>
    %32 = arith.mulf %29, %31 : vector<32x80xf32>
    %c0_34 = arith.constant 0 : index
    %c0_35 = arith.constant 0 : index
    %33 = vector.load %arg4[%c0_34, %c0_35] : memref<32x1xf32, #tpu.memory_space<vmem>>, vector<32x1xf32>
    %34 = vector.broadcast %33 : vector<32x1xf32> to vector<32x80xf32>
    %35 = arith.addf %32, %34 : vector<32x80xf32>
    %cst_36 = arith.constant 0.000000e+00 : f32
    %36 = vector.broadcast %cst_36 : f32 to vector<32x80xf32>
    %37 = arith.maximumf %35, %36 : vector<32x80xf32>
    %c0_37 = arith.constant 0 : index
    %c0_38 = arith.constant 0 : index
    %38 = vector.load %arg5[%c0_37, %c0_38] : memref<1x80xf32, #tpu.memory_space<vmem>>, vector<1x80xf32>
    %39 = vector.broadcast %38 : vector<1x80xf32> to vector<32x80xf32>
    %40 = arith.mulf %37, %39 : vector<32x80xf32>
    %c0_39 = arith.constant 0 : index
    %c0_40 = arith.constant 0 : index
    %41 = vector.load %arg6[%c0_39, %c0_40] : memref<384x80xbf16, #tpu.memory_space<vmem>>, vector<384x80xbf16>
    %42 = arith.truncf %40 : vector<32x80xf32> to vector<32x80xbf16>
    %cst_41 = arith.constant dense<0.000000e+00> : vector<384x32xf32>
    %43 = tpu.matmul %41, %42, %cst_41 {dimension_numbers = #tpu.dot_dimension_numbers<[1], [1], [0], [0], [0, 0, 1, 0], [], []>} : vector<384x80xbf16>, vector<32x80xbf16>, vector<384x32xf32> -> vector<384x32xf32>
    %c0_42 = arith.constant 0 : index
    %c0_43 = arith.constant 0 : index
    %44 = vector.load %arg7[%c0_42, %c0_43] : memref<384x32xf32, #tpu.memory_space<vmem>>, vector<384x32xf32>
    %45 = arith.mulf %43, %44 : vector<384x32xf32>
    %cst_44 = arith.constant dense<0.000000e+00> : vector<384xf32>
    %46 = vector.multi_reduction <add>, %45, %cst_44 [1] : vector<384x32xf32> to vector<384xf32>
    %47 = vector.shape_cast %46 : vector<384xf32> to vector<384x1xf32>
    %c0_45 = arith.constant 0 : index
    %c0_46 = arith.constant 0 : index
    %48 = vector.load %arg8[%c0_45, %c0_46] : memref<12x384xf32, #tpu.memory_space<vmem>>, vector<12x384xf32>
    %cst_47 = arith.constant dense<0.000000e+00> : vector<12x1xf32>
    %49 = tpu.matmul %48, %47, %cst_47 {dimension_numbers = #tpu.dot_dimension_numbers<[1], [0], [0], [1], [0, 0, 1, 1], [], []>} : vector<12x384xf32>, vector<384x1xf32>, vector<12x1xf32> -> vector<12x1xf32>
    %c0_48 = arith.constant 0 : index
    %c0_49 = arith.constant 0 : index
    %50 = vector.load %arg9[%c0_48, %c0_49] : memref<12x1xf32, #tpu.memory_space<vmem>>, vector<12x1xf32>
    %51 = arith.addf %49, %50 : vector<12x1xf32>
    %c0_50 = arith.constant 0 : index
    %c0_51 = arith.constant 0 : index
    %c0_52 = arith.constant 0 : index
    %52 = vector.load %arg10[%c0_50, %c0_51, %c0_52] : memref<1x12x1xf32, #tpu.memory_space<vmem>>, vector<1x12x1xf32>
    %53 = vector.shape_cast %52 : vector<1x12x1xf32> to vector<12x1xf32>
    %54 = vector.shape_cast %51 : vector<12x1xf32> to vector<1x12x1xf32>
    tpu.vector_store %arg10[%c0_50, %c0_51, %c0_52], %54 {strides = array<i32>} : memref<1x12x1xf32, #tpu.memory_space<vmem>>, vector<1x12x1xf32>,
    return
  }
  func.func @transform_0(%arg0: i32) -> (i32, i32, i32) {
    %c0_i32 = arith.constant 0 : i32
    %c0_i32_0 = arith.constant 0 : i32
    %c0_i32_1 = arith.constant 0 : i32
    return %arg0, %c0_i32, %c0_i32_0 : i32, i32, i32
  }
  func.func @transform_1(%arg0: i32) -> (i32, i32) {
    %c0_i32 = arith.constant 0 : i32
    %c0_i32_0 = arith.constant 0 : i32
    %c0_i32_1 = arith.constant 0 : i32
    return %c0_i32, %c0_i32_0 : i32, i32
  }
  func.func @transform_2(%arg0: i32) -> (i32, i32) {
    %c0_i32 = arith.constant 0 : i32
    %c0_i32_0 = arith.constant 0 : i32
    %c0_i32_1 = arith.constant 0 : i32
    return %c0_i32, %c0_i32_0 : i32, i32
  }
  func.func @transform_3(%arg0: i32) -> (i32, i32) {
    %c0_i32 = arith.constant 0 : i32
    %c0_i32_0 = arith.constant 0 : i32
    %c0_i32_1 = arith.constant 0 : i32
    return %c0_i32, %c0_i32_0 : i32, i32
  }
  func.func @transform_4(%arg0: i32) -> (i32, i32) {
    %c0_i32 = arith.constant 0 : i32
    %c0_i32_0 = arith.constant 0 : i32
    %c0_i32_1 = arith.constant 0 : i32
    return %c0_i32, %c0_i32_0 : i32, i32
  }
  func.func @transform_5(%arg0: i32) -> (i32, i32) {
    %c0_i32 = arith.constant 0 : i32
    %c0_i32_0 = arith.constant 0 : i32
    %c0_i32_1 = arith.constant 0 : i32
    return %c0_i32, %c0_i32_0 : i32, i32
  }
  func.func @transform_6(%arg0: i32) -> (i32, i32) {
    %c0_i32 = arith.constant 0 : i32
    %c0_i32_0 = arith.constant 0 : i32
    %c0_i32_1 = arith.constant 0 : i32
    return %c0_i32, %c0_i32_0 : i32, i32
  }
  func.func @transform_7(%arg0: i32) -> (i32, i32) {
    %c0_i32 = arith.constant 0 : i32
    %c0_i32_0 = arith.constant 0 : i32
    %c0_i32_1 = arith.constant 0 : i32
    return %c0_i32, %c0_i32_0 : i32, i32
  }
  func.func @transform_8(%arg0: i32) -> (i32, i32) {
    %c0_i32 = arith.constant 0 : i32
    %c0_i32_0 = arith.constant 0 : i32
    %c0_i32_1 = arith.constant 0 : i32
    return %c0_i32, %c0_i32_0 : i32, i32
  }
  func.func @transform_9(%arg0: i32) -> (i32, i32, i32) {
    %c0_i32 = arith.constant 0 : i32
    %c0_i32_0 = arith.constant 0 : i32
    %c0_i32_1 = arith.constant 0 : i32
    return %arg0, %c0_i32, %c0_i32_0 : i32, i32, i32
  }
}

</mosaic_0001>

<llo_original>
// kernel: convnet_forward.4
$region0: #{convnet_forward.4}
  #allocation0 [shape = 'u32[]', space=smem, size = 0x4, offset = 0x4, fixed_abs, tag = 'smem constant byte address 0x4 - core index']
  #allocation1 [shape = 'u32[72,128]{1,0:T(1,128)}', space=vmem, size = 0x9000, scoped, tag = 'internal scratch']
  #allocation2 [shape = 'bf16[144,80]{1,0:T(8,128)(2,1)}', space=vmem, size = 0x9000, scoped, tag = 'scratch operand']
  %s0 = inlined_call_operand.vmem [shape: bf16[2,16,110], index: 0, kind: input, shape index: {}]
  %s1 = inlined_call_operand.vmem [shape: bf16[24,144], index: 1, kind: input, shape index: {}]
  %s2 = inlined_call_operand.vmem [shape: f32[24,1], index: 2, kind: input, shape index: {}]
  %s3 = inlined_call_operand.vmem [shape: f32[24,1], index: 3, kind: input, shape index: {}]
  %s4 = inlined_call_operand.vmem [shape: f32[1,80], index: 4, kind: input, shape index: {}]
  %s5 = inlined_call_operand.vmem [shape: bf16[2,24,110], index: 5, kind: output, shape index: {}]
  %s6 = sld [smem:[#allocation0]]
  $region53: #{convnet_forward.4} parent=0
    _
  %s8 = ssub.s32 1, %s6
  %s9 = scalar_select 0, %s8, %s6
  loop: start=0, step=1, limit=4
  $region2: #{convnet_forward.4} parent=0 // loop_pre_header
    _
  $region3: #{convnet_forward.4} parent=0 // loop_header
    %s11 = sphi 0, %s15
    %p12 = scmp.ge.s32.totalorder %s11, 4
    %s21 = sphi 0, %s23
    %s24 = sphi 0, %s21
    %s25 = sphi 0, %s24
    %s41 = sphi 0, %s25
    %s45 = sphi 0, %s45
    %s47 = sphi 0, %s45
    %s48 = sphi 0, %s47
    %s62 = sphi 0, %s48
    %s66 = sphi 0, %s66
    %s68 = sphi 0, %s66
    %s69 = sphi 0, %s68
    %s83 = sphi 0, %s69
    %s87 = sphi 0, %s87
    %s89 = sphi 0, %s87
    %s90 = sphi 0, %s89
    %s104 = sphi 0, %s90
    %s108 = sphi 0, %s108
    %s110 = sphi 0, %s108
    %s111 = sphi 0, %s110
    %s125 = sphi 0, %s111
    %s131 = sphi 0, %s133
    %s134 = sphi 0, %s131
    %s135 = sphi 0, %s134
    %s151 = sphi 0, %s135
  $region4: #{convnet_forward.4} parent=0 // loop_header_branch
    %14 = sbr.rel (%p12) target = $region8
  $region5: #{convnet_forward.4} parent=0 // loop_body
    %s16 = ssub.s32 %s11, 1
    %s17 = ssub.s32 %s11, 2
    %s18 = sadd.s32 %s11, 1
    %s19 = ssub.s32 %s11, %s18
    %p20 = scmp.eq.s32.totalorder %s19, 0
    %s22 = sadd.s32 %s21, 1
    %s23 = scalar_select %p20, %s21, %s22
    %p26 = pneg %p20
    %p27 = scmp.eq.s32.totalorder %s11, 1
    %p28 = por %p26, %p27
    %p29 = scmp.ne.s32.totalorder %s21, %s24
    %p30 = scmp.eq.s32.totalorder %s11, 0
    %p31 = por %p29, %p30
    %p32 = scmp.ne.s32.totalorder %s21, %s24
    %p33 = scmp.eq.s32.totalorder %s16, 1
    %p34 = por %p32, %p33
    %p35 = scmp.ne.s32.totalorder %s24, %s25
    %p36 = scmp.eq.s32.totalorder %s16, 0
    %p37 = por %p35, %p36
    %p38 = scmp.ne.s32.totalorder %s24, %s25
    %p39 = scmp.eq.s32.totalorder %s17, 1
    %p40 = por %p38, %p39
    %p42 = scmp.ne.s32.totalorder %s25, %s41
    %p43 = scmp.eq.s32.totalorder %s17, 0
    %p44 = por %p42, %p43
    %s46 = sadd.s32 %s45, 1
    %p49 = scmp.eq.s32.totalorder %s11, 1
    %p50 = scmp.ne.s32.totalorder %s45, %s47
    %p51 = scmp.eq.s32.totalorder %s11, 0
    %p52 = por %p50, %p51
    %p53 = scmp.ne.s32.totalorder %s45, %s47
    %p54 = scmp.eq.s32.totalorder %s16, 1
    %p55 = por %p53, %p54
    %p56 = scmp.ne.s32.totalorder %s47, %s48
    %p57 = scmp.eq.s32.totalorder %s16, 0
    %p58 = por %p56, %p57
    %p59 = scmp.ne.s32.totalorder %s47, %s48
    %p60 = scmp.eq.s32.totalorder %s17, 1
    %p61 = por %p59, %p60
    %p63 = scmp.ne.s32.totalorder %s48, %s62
    %p64 = scmp.eq.s32.totalorder %s17, 0
    %p65 = por %p63, %p64
    %s67 = sadd.s32 %s66, 1
    %p70 = scmp.eq.s32.totalorder %s11, 1
    %p71 = scmp.ne.s32.totalorder %s66, %s68
    %p72 = scmp.eq.s32.totalorder %s11, 0
    %p73 = por %p71, %p72
    %p74 = scmp.ne.s32.totalorder %s66, %s68
    %p75 = scmp.eq.s32.totalorder %s16, 1
    %p76 = por %p74, %p75
    %p77 = scmp.ne.s32.totalorder %s68, %s69
    %p78 = scmp.eq.s32.totalorder %s16, 0
    %p79 = por %p77, %p78
    %p80 = scmp.ne.s32.totalorder %s68, %s69
    %p81 = scmp.eq.s32.totalorder %s17, 1
    %p82 = por %p80, %p81
    %p84 = scmp.ne.s32.totalorder %s69, %s83
    %p85 = scmp.eq.s32.totalorder %s17, 0
    %p86 = por %p84, %p85
    %s88 = sadd.s32 %s87, 1
    %p91 = scmp.eq.s32.totalorder %s11, 1
    %p92 = scmp.ne.s32.totalorder %s87, %s89
    %p93 = scmp.eq.s32.totalorder %s11, 0
    %p94 = por %p92, %p93
    %p95 = scmp.ne.s32.totalorder %s87, %s89
    %p96 = scmp.eq.s32.totalorder %s16, 1
    %p97 = por %p95, %p96
    %p98 = scmp.ne.s32.totalorder %s89, %s90
    %p99 = scmp.eq.s32.totalorder %s16, 0
    %p100 = por %p98, %p99
    %p101 = scmp.ne.s32.totalorder %s89, %s90
    %p102 = scmp.eq.s32.totalorder %s17, 1
    %p103 = por %p101, %p102
    %p105 = scmp.ne.s32.totalorder %s90, %s104
    %p106 = scmp.eq.s32.totalorder %s17, 0
    %p107 = por %p105, %p106
    %s109 = sadd.s32 %s108, 1
    %p112 = scmp.eq.s32.totalorder %s11, 1
    %p113 = scmp.ne.s32.totalorder %s108, %s110
    %p114 = scmp.eq.s32.totalorder %s11, 0
    %p115 = por %p113, %p114
    %p116 = scmp.ne.s32.totalorder %s108, %s110
    %p117 = scmp.eq.s32.totalorder %s16, 1
    %p118 = por %p116, %p117
    %p119 = scmp.ne.s32.totalorder %s110, %s111
    %p120 = scmp.eq.s32.totalorder %s16, 0
    %p121 = por %p119, %p120
    %p122 = scmp.ne.s32.totalorder %s110, %s111
    %p123 = scmp.eq.s32.totalorder %s17, 1
    %p124 = por %p122, %p123
    %p126 = scmp.ne.s32.totalorder %s111, %s125
    %p127 = scmp.eq.s32.totalorder %s17, 0
    %p128 = por %p126, %p127
    %s129 = ssub.s32 %s11, %s18
    %p130 = scmp.eq.s32.totalorder %s129, 0
    %s132 = sadd.s32 %s131, 1
    %s133 = scalar_select %p130, %s131, %s132
    %p136 = pneg %p130
    %p137 = scmp.eq.s32.totalorder %s11, 1
    %p138 = por %p136, %p137
    %p139 = scmp.ne.s32.totalorder %s131, %s134
    %p140 = scmp.eq.s32.totalorder %s11, 0
    %p141 = por %p139, %p140
    %p142 = scmp.ne.s32.totalorder %s131, %s134
    %p143 = scmp.eq.s32.totalorder %s16, 1
    %p144 = por %p142, %p143
    %p145 = scmp.ne.s32.totalorder %s134, %s135
    %p146 = scmp.eq.s32.totalorder %s16, 0
    %p147 = por %p145, %p146
    %p148 = scmp.ne.s32.totalorder %s134, %s135
    %p149 = scmp.eq.s32.totalorder %s17, 1
    %p150 = por %p148, %p149
    %p152 = scmp.ne.s32.totalorder %s135, %s151
    %p153 = scmp.eq.s32.totalorder %s17, 0
    %p154 = por %p152, %p153
    %p155 = scmp.le.s32.totalorder 1, %s11
    %p156 = scmp.lt.s32.totalorder %s11, 3
    %p157 = pnand %p155, %p156
    %p158 = pneg %p157
    // Predicated region
    $region9: #{convnet_forward.4} parent=5 // pred_check
      _
    $region10: #{convnet_forward.4} parent=5 // pred_check_branch
      %160 = sbr.rel (%p157) target = $region12
    $region11: #{convnet_forward.4} parent=5 // pred_region
      %s161 = ssub.s32 %s11, 1
      // Predicated region
      $region13: #{convnet_forward.4} parent=11 // pred_check
        %p162 = pneg %p58
      $region14: #{convnet_forward.4} parent=11 // pred_check_branch
        %164 = sbr.rel (%p162) target = $region16
      $region15: #{convnet_forward.4} parent=11 // pred_region
        _
      $region16: #{convnet_forward.4} parent=11 // pred_fallthru
        _
      // Predicated region
      $region17: #{convnet_forward.4} parent=11 // pred_check
        %p165 = pneg %p79
      $region18: #{convnet_forward.4} parent=11 // pred_check_branch
        %167 = sbr.rel (%p165) target = $region20
      $region19: #{convnet_forward.4} parent=11 // pred_region
        _
      $region20: #{convnet_forward.4} parent=11 // pred_fallthru
        _
      // Predicated region
      $region21: #{convnet_forward.4} parent=11 // pred_check
        %p168 = pneg %p100
      $region22: #{convnet_forward.4} parent=11 // pred_check_branch
        %170 = sbr.rel (%p168) target = $region24
      $region23: #{convnet_forward.4} parent=11 // pred_region
        _
      $region24: #{convnet_forward.4} parent=11 // pred_fallthru
        _
      // Predicated region
      $region25: #{convnet_forward.4} parent=11 // pred_check
        %p171 = pneg %p121
      $region26: #{convnet_forward.4} parent=11 // pred_check_branch
        %173 = sbr.rel (%p171) target = $region28
      $region27: #{convnet_forward.4} parent=11 // pred_region
        _
      $region28: #{convnet_forward.4} parent=11 // pred_fallthru
        _
    $region12: #{convnet_forward.4} parent=5 // pred_fallthru
      _
    %p174 = scmp.lt.s32.totalorder %s11, 2
    // Predicated region
    $region29: #{convnet_forward.4} parent=5 // pred_check
      %p175 = pneg %p174
    $region30: #{convnet_forward.4} parent=5 // pred_check_branch
      %177 = sbr.rel (%p175) target = $region32
    $region31: #{convnet_forward.4} parent=5 // pred_region
      // Predicated region
      $region33: #{convnet_forward.4} parent=31 // pred_check
        %p178 = pneg %p31
      $region34: #{convnet_forward.4} parent=31 // pred_check_branch
        %180 = sbr.rel (%p178) target = $region36
      $region35: #{convnet_forward.4} parent=31 // pred_region
        %p181 = scmp.lt.s32.totalorder %s11, 1
        %s182 = scalar_select %p181, %s11, 1
        %s183 = smul.addr %s182, 2
        %s184 = smul.addr %s183, 4
        %s185 = scalar_lea.vmem %s0, %s184
      $region36: #{convnet_forward.4} parent=31 // pred_fallthru
        _
    $region32: #{convnet_forward.4} parent=5 // pred_fallthru
      _
    %p186 = scmp.le.s32.totalorder 1, %s11
    %p187 = scmp.lt.s32.totalorder %s11, 3
    %p188 = pnand %p186, %p187
    %p189 = pneg %p188
    // Predicated region
    $region37: #{convnet_forward.4} parent=5 // pred_check
      _
    $region38: #{convnet_forward.4} parent=5 // pred_check_branch
      %191 = sbr.rel (%p188) target = $region40
    $region39: #{convnet_forward.4} parent=5 // pred_region
      %s192 = ssub.s32 %s11, 1
      %p193 = scmp.lt.s32.totalorder %s16, 1
      %s194 = scalar_select %p193, %s16, 1
      %s195 = smul.addr %s194, 2
      %s196 = smul.addr %s195, 4
      %s197 = scalar_lea.vmem %s0, %s196
      %p198 = pneg %p37
      %p199 = pneg %p34
      %p200 = pneg %p58
      %p201 = pneg %p55
      %p202 = pneg %p79
      %p203 = pneg %p76
      %p204 = pneg %p100
      %p205 = pneg %p97
      %p206 = pneg %p121
      %p207 = pneg %p118
      %p208 = pneg %p147
      %p209 = pneg %p144
      %p210 = scmp.lt.s32.totalorder %s16, 1
      %s211 = scalar_select %p210, %s16, 1
      %s212 = smul.addr %s211, 3
      %s213 = smul.addr %s212, 4
      %s214 = scalar_lea.vmem %s5, %s213
      %p215 = scmp.lt.s32.totalorder %s16, 1
      %s216 = scalar_select %p215, %s16, 1
      %s217 = smul.addr %s216, 2
      %s218 = smul.addr %s217, 4
      %s219 = scalar_lea.vmem %s0, %s218
      %p220 = scmp.lt.s32.totalorder %s16, 1
      %s221 = scalar_select %p220, %s16, 1
      %s222 = smul.addr %s221, 3
      %s223 = smul.addr %s222, 4
      %s224 = scalar_lea.vmem %s5, %s223
      %v226 = vld [vmem:[%s219] sm:$0xf]
      %v227 = vld [vmem:[%s219 + $0x4] sm:$0xf]
      %vm228 = vcmask 650240
      %229 = vst.msk [vmem:[#allocation2] sm:$0xf] %vm228, %v226
      %230 = vst.msk [vmem:[#allocation2 + $0x4] sm:$0xf] %vm228, %v227
      %v231 = vld [vmem:[%s219] sm:$0xf]
      %v232 = vld [vmem:[%s219 + $0x4] sm:$0xf]
      %235 = vrot.lane.b32.xlu0 %v231, 127
      %v236 = vpop.permute.xlu0 %235
      %237 = vrot.lane.b32.xlu0 %v232, 127
      %v238 = vpop.permute.xlu0 %237
      %241 = vst.msk [vmem:[#allocation2 + $0x8] sm:$0xf] %vm228, %v236
      %242 = vst.msk [vmem:[#allocation2 + $0xc] sm:$0xf] %vm228, %v238
      %v243 = vld [vmem:[%s219] sm:$0xf]
      %v244 = vld [vmem:[%s219 + $0x4] sm:$0xf]
      %247 = vrot.lane.b32.xlu0 %v243, 126
      %v248 = vpop.permute.xlu0 %247
      %249 = vrot.lane.b32.xlu0 %v244, 126
      %v250 = vpop.permute.xlu0 %249
      %253 = vst.msk [vmem:[#allocation2 + $0x10] sm:$0xf] %vm228, %v248
      %254 = vst.msk [vmem:[#allocation2 + $0x14] sm:$0xf] %vm228, %v250
      %v255 = vld [vmem:[%s219] sm:$0xf]
      %v256 = vld [vmem:[%s219 + $0x4] sm:$0xf]
      %259 = vrot.lane.b32.xlu0 %v255, 118
      %v260 = vpop.permute.xlu0 %259
      %261 = vrot.lane.b32.xlu0 %v256, 118
      %v262 = vpop.permute.xlu0 %261
      %265 = vst.msk [vmem:[#allocation2 + $0x18] sm:$0xf] %vm228, %v260
      %266 = vst.msk [vmem:[#allocation2 + $0x1c] sm:$0xf] %vm228, %v262
      %v267 = vld [vmem:[%s219] sm:$0xf]
      %v268 = vld [vmem:[%s219 + $0x4] sm:$0xf]
      %271 = vrot.lane.b32.xlu0 %v267, 117
      %v272 = vpop.permute.xlu0 %271
      %273 = vrot.lane.b32.xlu0 %v268, 117
      %v274 = vpop.permute.xlu0 %273
      %277 = vst.msk [vmem:[#allocation2 + $0x20] sm:$0xf] %vm228, %v272
      %278 = vst.msk [vmem:[#allocation2 + $0x24] sm:$0xf] %vm228, %v274
      %v279 = vld [vmem:[%s219] sm:$0xf]
      %v280 = vld [vmem:[%s219 + $0x4] sm:$0xf]
      %283 = vrot.lane.b32.xlu0 %v279, 116
      %v284 = vpop.permute.xlu0 %283
      %285 = vrot.lane.b32.xlu0 %v280, 116
      %v286 = vpop.permute.xlu0 %285
      %289 = vst.msk [vmem:[#allocation2 + $0x28] sm:$0xf] %vm228, %v284
      %290 = vst.msk [vmem:[#allocation2 + $0x2c] sm:$0xf] %vm228, %v286
      %v291 = vld [vmem:[%s219] sm:$0xf]
      %v292 = vld [vmem:[%s219 + $0x4] sm:$0xf]
      %295 = vrot.lane.b32.xlu0 %v291, 108
      %v296 = vpop.permute.xlu0 %295
      %297 = vrot.lane.b32.xlu0 %v292, 108
      %v298 = vpop.permute.xlu0 %297
      %301 = vst.msk [vmem:[#allocation2 + $0x30] sm:$0xf] %vm228, %v296
      %302 = vst.msk [vmem:[#allocation2 + $0x34] sm:$0xf] %vm228, %v298
      %v303 = vld [vmem:[%s219] sm:$0xf]
      %v304 = vld [vmem:[%s219 + $0x4] sm:$0xf]
      %307 = vrot.lane.b32.xlu0 %v303, 107
      %v308 = vpop.permute.xlu0 %307
      %309 = vrot.lane.b32.xlu0 %v304, 107
      %v310 = vpop.permute.xlu0 %309
      %313 = vst.msk [vmem:[#allocation2 + $0x38] sm:$0xf] %vm228, %v308
      %314 = vst.msk [vmem:[#allocation2 + $0x3c] sm:$0xf] %vm228, %v310
      %v315 = vld [vmem:[%s219] sm:$0xf]
      %v316 = vld [vmem:[%s219 + $0x4] sm:$0xf]
      %319 = vrot.lane.b32.xlu0 %v315, 106
      %v320 = vpop.permute.xlu0 %319
      %321 = vrot.lane.b32.xlu0 %v316, 106
      %v322 = vpop.permute.xlu0 %321
      %325 = vst.msk [vmem:[#allocation2 + $0x40] sm:$0xf] %vm228, %v320
      %326 = vst.msk [vmem:[#allocation2 + $0x44] sm:$0xf] %vm228, %v322
      %v327 = vld [vmem:[%s1] sm:$0xff]
      %v328 = vld [vmem:[%s1 + $0x8] sm:$0xff]
      %v329 = vld [vmem:[%s1 + $0x10] sm:$0xff]
      %v330 = vld [vmem:[#allocation2] sm:$0xf]
      %v331 = vld [vmem:[#allocation2 + $0x4] sm:$0xf]
      %v332 = vld [vmem:[#allocation2 + $0x8] sm:$0xf]
      %v333 = vld [vmem:[#allocation2 + $0xc] sm:$0xf]
      %v334 = vld [vmem:[#allocation2 + $0x10] sm:$0xf]
      %v335 = vld [vmem:[#allocation2 + $0x14] sm:$0xf]
      %v336 = vld [vmem:[#allocation2 + $0x18] sm:$0xf]
      %v337 = vld [vmem:[#allocation2 + $0x1c] sm:$0xf]
      %v338 = vld [vmem:[#allocation2 + $0x20] sm:$0xf]
      %v339 = vld [vmem:[#allocation2 + $0x24] sm:$0xf]
      %v340 = vld [vmem:[#allocation2 + $0x28] sm:$0xf]
      %v341 = vld [vmem:[#allocation2 + $0x2c] sm:$0xf]
      %v342 = vld [vmem:[#allocation2 + $0x30] sm:$0xf]
      %v343 = vld [vmem:[#allocation2 + $0x34] sm:$0xf]
      %v344 = vld [vmem:[#allocation2 + $0x38] sm:$0xf]
      %v345 = vld [vmem:[#allocation2 + $0x3c] sm:$0xf]
      %v346 = vld [vmem:[#allocation2 + $0x40] sm:$0xf]
      %v347 = vld [vmem:[#allocation2 + $0x44] sm:$0xf]
      %v351 = vunpack.c.l.b16 %v327
      %v352 = vunpack.c.h.b16 %v327
      %v353 = vunpack.c.l.b16 %v328
      %v354 = vunpack.c.h.b16 %v328
      %v355 = vunpack.c.l.b16 %v329
      %v356 = vunpack.c.h.b16 %v329
      %v357 = vpack.c.b16 %v353, %v351
      %v358 = vpack.c.b16 %v354, %v352
      %v359 = vpack.c.b16 %v355, %v355
      %v360 = vpack.c.b16 %v356, %v356
      %v381 = vunpack.c.l.b16 %v330
      %v382 = vunpack.c.l.b16 %v331
      %v383 = vunpack.c.l.b16 %v332
      %v384 = vunpack.c.l.b16 %v333
      %v385 = vunpack.c.l.b16 %v334
      %v386 = vunpack.c.l.b16 %v335
      %v387 = vunpack.c.l.b16 %v336
      %v388 = vunpack.c.l.b16 %v337
      %v389 = vunpack.c.l.b16 %v338
      %v390 = vunpack.c.l.b16 %v339
      %v391 = vunpack.c.l.b16 %v340
      %v392 = vunpack.c.l.b16 %v341
      %v393 = vunpack.c.l.b16 %v342
      %v394 = vunpack.c.l.b16 %v343
      %v395 = vunpack.c.l.b16 %v344
      %v396 = vunpack.c.l.b16 %v345
      %v397 = vunpack.c.l.b16 %v346
      %v398 = vunpack.c.l.b16 %v347
      %v399 = vpack.c.b16 %v382, %v381
      %v400 = vpack.c.b16 %v384, %v383
      %v401 = vpack.c.b16 %v386, %v385
      %v402 = vpack.c.b16 %v388, %v387
      %v403 = vpack.c.b16 %v390, %v389
      %v404 = vpack.c.b16 %v392, %v391
      %v405 = vpack.c.b16 %v394, %v393
      %v406 = vpack.c.b16 %v396, %v395
      %v407 = vpack.c.b16 %v398, %v397
      %vm417 = vcmask 130048
      %v419 = vsel %vm417, %v358, 0
      %v422 = vsel %vm417, %v360, 0
      %424 = vmatpush.bf16.msra.mxu0 %v406
      %425 = vmatpush.bf16.msra.mxu0 %v405
      %426 = vmatpush.bf16.msra.mxu0 %v404
      %427 = vmatpush.bf16.msra.mxu0 %v403
      %428 = vmatpush.bf16.msra.mxu0 %v402
      %429 = vmatpush.bf16.msra.mxu0 %v401
      %430 = vmatpush.bf16.msra.mxu0 %v400
      %431 = vmatpush.bf16.msra.mxu0 %v399
      %432 = vmatmul.bf16.gmra.mxu0 %v357
      %v433 = vpop.f32.mrf.mxu0
      %v434 = vadd.f32 0.0, %v433
      %v435 = vpop.f32.mrf.mxu0
      %v436 = vadd.f32 0.0, %v435
      %437 = vmatmul.bf16.gmra.mxu0 %v359
      %v438 = vpop.f32.mrf.mxu0
      %v439 = vadd.f32 0.0, %v438
      %v440 = vpop.f32.mrf.mxu0
      %441 = vdwg.mxu0
      %442 = vmatpush.bf16.msra.mxu0 0
      %443 = vmatpush.bf16.msra.mxu0 0
      %444 = vmatpush.bf16.msra.mxu0 0
      %445 = vmatpush.bf16.msra.mxu0 0
      %446 = vmatpush.bf16.msra.mxu0 0
      %447 = vmatpush.bf16.msra.mxu0 0
      %448 = vmatpush.bf16.msra.mxu0 0
      %449 = vmatpush.bf16.msra.mxu0 %v407
      %450 = vmatmul.bf16.gmra.mxu0 %v419
      %v451 = vpop.f32.mrf.mxu0
      %v452 = vadd.f32 %v434, %v451
      %v453 = vpop.f32.mrf.mxu0
      %v454 = vadd.f32 %v436, %v453
      %455 = vmatmul.bf16.gmra.mxu0 %v422
      %v456 = vpop.f32.mrf.mxu0
      %v457 = vadd.f32 %v439, %v456
      %v458 = vpop.f32.mrf.mxu0
      %459 = vdwg.mxu0
      %v460 = vld [vmem:[%s2] sm:$0xff]
      %v461 = vld [vmem:[%s2 + $0x8] sm:$0xff]
      %v462 = vld [vmem:[%s2 + $0x10] sm:$0xff]
      %464 = vset.pattern.permute.xlu0 0
      %465 = vperm.xlu0 %464, %v460
      %v466 = vpop.permute.xlu0 %465
      %469 = vset.pattern.permute.xlu0 0
      %470 = vperm.xlu0 %469, %v461
      %v471 = vpop.permute.xlu0 %470
      %474 = vset.pattern.permute.xlu0 0
      %475 = vperm.xlu0 %474, %v462
      %v476 = vpop.permute.xlu0 %475
      %v478 = vmul.f32 %v452, %v466
      %v479 = vmul.f32 %v454, %v471
      %v480 = vmul.f32 %v457, %v476
      %v481 = vld [vmem:[%s3] sm:$0xff]
      %v482 = vld [vmem:[%s3 + $0x8] sm:$0xff]
      %v483 = vld [vmem:[%s3 + $0x10] sm:$0xff]
      %485 = vset.pattern.permute.xlu0 0
      %486 = vperm.xlu0 %485, %v481
      %v487 = vpop.permute.xlu0 %486
      %490 = vset.pattern.permute.xlu0 0
      %491 = vperm.xlu0 %490, %v482
      %v492 = vpop.permute.xlu0 %491
      %495 = vset.pattern.permute.xlu0 0
      %496 = vperm.xlu0 %495, %v483
      %v497 = vpop.permute.xlu0 %496
      %v499 = vadd.f32 %v478, %v487
      %v500 = vadd.f32 %v479, %v492
      %v501 = vadd.f32 %v480, %v497
      %v502 = vmax.f32 %v499, 0.0
      %v503 = vmax.f32 %v500, 0.0
      %v504 = vmax.f32 %v501, 0.0
      %v505 = vld [vmem:[%s4] sm:$0x1]
      %v507 = vperm.slane %v505, 0
      %v509 = vmul.f32 %v502, %v507
      %v510 = vmul.f32 %v503, %v507
      %v511 = vmul.f32 %v504, %v507
      %vm512 = vcmask 896000
      %513 = vst.msk [vmem:[%s224] sm:$0xf] %vm512, 0
      %514 = vst.msk [vmem:[%s224 + $0x4] sm:$0xf] %vm512, 0
      %515 = vst.msk [vmem:[%s224 + $0x8] sm:$0xf] %vm512, 0
      %v516 = vpack.c.bf16 %v509, %v509
      %v517 = vpack.c.bf16 %v510, %v510
      %v518 = vpack.c.bf16 %v511, %v511
      %522 = vrot.lane.b32.xlu0 %v516, 11
      %v523 = vpop.permute.xlu0 %522
      %524 = vrot.lane.b32.xlu0 %v517, 11
      %v525 = vpop.permute.xlu0 %524
      %526 = vrot.lane.b32.xlu0 %v518, 11
      %v527 = vpop.permute.xlu0 %526
      %vm531 = vcmask 740440
      %532 = vst.msk [vmem:[%s224] sm:$0xf] %vm531, %v523
      %533 = vst.msk [vmem:[%s224 + $0x4] sm:$0xf] %vm531, %v525
      %534 = vst.msk [vmem:[%s224 + $0x8] sm:$0xf] %vm531, %v527
      %p535 = scmp.lt.s32.totalorder %s16, 1
      %s536 = scalar_select %p535, %s16, 1
      %s537 = smul.addr %s536, 3
      %s538 = smul.addr %s537, 4
      %s539 = scalar_lea.vmem %s5, %s538
      // Predicated region
      $region41: #{convnet_forward.4} parent=39 // pred_check
        %p540 = pneg %p144
      $region42: #{convnet_forward.4} parent=39 // pred_check_branch
        %542 = sbr.rel (%p540) target = $region44
      $region43: #{convnet_forward.4} parent=39 // pred_region
        _
      $region44: #{convnet_forward.4} parent=39 // pred_fallthru
        _
    $region40: #{convnet_forward.4} parent=5 // pred_fallthru
      _
    %p543 = scmp.le.s32.totalorder 2, %s11
    // Predicated region
    $region45: #{convnet_forward.4} parent=5 // pred_check
      %p544 = pneg %p543
    $region46: #{convnet_forward.4} parent=5 // pred_check_branch
      %546 = sbr.rel (%p544) target = $region48
    $region47: #{convnet_forward.4} parent=5 // pred_region
      %s547 = ssub.s32 %s11, 2
      // Predicated region
      $region49: #{convnet_forward.4} parent=47 // pred_check
        %p548 = pneg %p150
      $region50: #{convnet_forward.4} parent=47 // pred_check_branch
        %550 = sbr.rel (%p548) target = $region52
      $region51: #{convnet_forward.4} parent=47 // pred_region
        %p551 = scmp.lt.s32.totalorder %s17, 1
        %s552 = scalar_select %p551, %s17, 1
        %s553 = smul.addr %s552, 3
        %s554 = smul.addr %s553, 4
        %s555 = scalar_lea.vmem %s5, %s554
      $region52: #{convnet_forward.4} parent=47 // pred_fallthru
        _
    $region48: #{convnet_forward.4} parent=5 // pred_fallthru
      _
  $region6: #{convnet_forward.4} parent=0 // loop_footer
    %s15 = sadd.s32 1, %s11
  $region7: #{convnet_forward.4} parent=0 // loop_footer_branch
    %10 = sbr.rel target = $region3
  $region8: #{convnet_forward.4} parent=0 // loop_exit
    _

// kernel: convnet_forward.3
$region0: #{convnet_forward.3}
  #allocation0 [shape = 'u32[]', space=smem, size = 0x4, offset = 0x4, fixed_abs, tag = 'smem constant byte address 0x4 - core index']
  #allocation1 [shape = 'u32[72,128]{1,0:T(1,128)}', space=vmem, size = 0x9000, scoped, tag = 'internal scratch']
  #allocation2 [shape = 'bf16[2,72,80]{2,1,0:T(8,128)(2,1)}', space=vmem, size = 0x9000, scoped, tag = 'scratch operand']
  %s0 = inlined_call_operand.vmem [shape: bf16[2,4,8,100], index: 0, kind: input, shape index: {}]
  %s1 = inlined_call_operand.vmem [shape: bf16[16,72], index: 1, kind: input, shape index: {}]
  %s2 = inlined_call_operand.vmem [shape: f32[16,1], index: 2, kind: input, shape index: {}]
  %s3 = inlined_call_operand.vmem [shape: f32[16,1], index: 3, kind: input, shape index: {}]
  %s4 = inlined_call_operand.vmem [shape: f32[1,80], index: 4, kind: input, shape index: {}]
  %s5 = inlined_call_operand.vmem [shape: bf16[2,16,110], index: 5, kind: output, shape index: {}]
  %s6 = sld [smem:[#allocation0]]
  $region53: #{convnet_forward.3} parent=0
    _
  %s8 = ssub.s32 1, %s6
  %s9 = scalar_select 0, %s8, %s6
  loop: start=0, step=1, limit=4
  $region2: #{convnet_forward.3} parent=0 // loop_pre_header
    _
  $region3: #{convnet_forward.3} parent=0 // loop_header
    %s11 = sphi 0, %s15
    %p12 = scmp.ge.s32.totalorder %s11, 4
    %s21 = sphi 0, %s23
    %s24 = sphi 0, %s21
    %s25 = sphi 0, %s24
    %s41 = sphi 0, %s25
    %s45 = sphi 0, %s45
    %s47 = sphi 0, %s45
    %s48 = sphi 0, %s47
    %s62 = sphi 0, %s48
    %s66 = sphi 0, %s66
    %s68 = sphi 0, %s66
    %s69 = sphi 0, %s68
    %s83 = sphi 0, %s69
    %s87 = sphi 0, %s87
    %s89 = sphi 0, %s87
    %s90 = sphi 0, %s89
    %s104 = sphi 0, %s90
    %s108 = sphi 0, %s108
    %s110 = sphi 0, %s108
    %s111 = sphi 0, %s110
    %s125 = sphi 0, %s111
    %s131 = sphi 0, %s133
    %s134 = sphi 0, %s131
    %s135 = sphi 0, %s134
    %s151 = sphi 0, %s135
  $region4: #{convnet_forward.3} parent=0 // loop_header_branch
    %14 = sbr.rel (%p12) target = $region8
  $region5: #{convnet_forward.3} parent=0 // loop_body
    %s16 = ssub.s32 %s11, 1
    %s17 = ssub.s32 %s11, 2
    %s18 = sadd.s32 %s11, 1
    %s19 = ssub.s32 %s11, %s18
    %p20 = scmp.eq.s32.totalorder %s19, 0
    %s22 = sadd.s32 %s21, 1
    %s23 = scalar_select %p20, %s21, %s22
    %p26 = pneg %p20
    %p27 = scmp.eq.s32.totalorder %s11, 1
    %p28 = por %p26, %p27
    %p29 = scmp.ne.s32.totalorder %s21, %s24
    %p30 = scmp.eq.s32.totalorder %s11, 0
    %p31 = por %p29, %p30
    %p32 = scmp.ne.s32.totalorder %s21, %s24
    %p33 = scmp.eq.s32.totalorder %s16, 1
    %p34 = por %p32, %p33
    %p35 = scmp.ne.s32.totalorder %s24, %s25
    %p36 = scmp.eq.s32.totalorder %s16, 0
    %p37 = por %p35, %p36
    %p38 = scmp.ne.s32.totalorder %s24, %s25
    %p39 = scmp.eq.s32.totalorder %s17, 1
    %p40 = por %p38, %p39
    %p42 = scmp.ne.s32.totalorder %s25, %s41
    %p43 = scmp.eq.s32.totalorder %s17, 0
    %p44 = por %p42, %p43
    %s46 = sadd.s32 %s45, 1
    %p49 = scmp.eq.s32.totalorder %s11, 1
    %p50 = scmp.ne.s32.totalorder %s45, %s47
    %p51 = scmp.eq.s32.totalorder %s11, 0
    %p52 = por %p50, %p51
    %p53 = scmp.ne.s32.totalorder %s45, %s47
    %p54 = scmp.eq.s32.totalorder %s16, 1
    %p55 = por %p53, %p54
    %p56 = scmp.ne.s32.totalorder %s47, %s48
    %p57 = scmp.eq.s32.totalorder %s16, 0
    %p58 = por %p56, %p57
    %p59 = scmp.ne.s32.totalorder %s47, %s48
    %p60 = scmp.eq.s32.totalorder %s17, 1
    %p61 = por %p59, %p60
    %p63 = scmp.ne.s32.totalorder %s48, %s62
    %p64 = scmp.eq.s32.totalorder %s17, 0
    %p65 = por %p63, %p64
    %s67 = sadd.s32 %s66, 1
    %p70 = scmp.eq.s32.totalorder %s11, 1
    %p71 = scmp.ne.s32.totalorder %s66, %s68
    %p72 = scmp.eq.s32.totalorder %s11, 0
    %p73 = por %p71, %p72
    %p74 = scmp.ne.s32.totalorder %s66, %s68
    %p75 = scmp.eq.s32.totalorder %s16, 1
    %p76 = por %p74, %p75
    %p77 = scmp.ne.s32.totalorder %s68, %s69
    %p78 = scmp.eq.s32.totalorder %s16, 0
    %p79 = por %p77, %p78
    %p80 = scmp.ne.s32.totalorder %s68, %s69
    %p81 = scmp.eq.s32.totalorder %s17, 1
    %p82 = por %p80, %p81
    %p84 = scmp.ne.s32.totalorder %s69, %s83
    %p85 = scmp.eq.s32.totalorder %s17, 0
    %p86 = por %p84, %p85
    %s88 = sadd.s32 %s87, 1
    %p91 = scmp.eq.s32.totalorder %s11, 1
    %p92 = scmp.ne.s32.totalorder %s87, %s89
    %p93 = scmp.eq.s32.totalorder %s11, 0
    %p94 = por %p92, %p93
    %p95 = scmp.ne.s32.totalorder %s87, %s89
    %p96 = scmp.eq.s32.totalorder %s16, 1
    %p97 = por %p95, %p96
    %p98 = scmp.ne.s32.totalorder %s89, %s90
    %p99 = scmp.eq.s32.totalorder %s16, 0
    %p100 = por %p98, %p99
    %p101 = scmp.ne.s32.totalorder %s89, %s90
    %p102 = scmp.eq.s32.totalorder %s17, 1
    %p103 = por %p101, %p102
    %p105 = scmp.ne.s32.totalorder %s90, %s104
    %p106 = scmp.eq.s32.totalorder %s17, 0
    %p107 = por %p105, %p106
    %s109 = sadd.s32 %s108, 1
    %p112 = scmp.eq.s32.totalorder %s11, 1
    %p113 = scmp.ne.s32.totalorder %s108, %s110
    %p114 = scmp.eq.s32.totalorder %s11, 0
    %p115 = por %p113, %p114
    %p116 = scmp.ne.s32.totalorder %s108, %s110
    %p117 = scmp.eq.s32.totalorder %s16, 1
    %p118 = por %p116, %p117
    %p119 = scmp.ne.s32.totalorder %s110, %s111
    %p120 = scmp.eq.s32.totalorder %s16, 0
    %p121 = por %p119, %p120
    %p122 = scmp.ne.s32.totalorder %s110, %s111
    %p123 = scmp.eq.s32.totalorder %s17, 1
    %p124 = por %p122, %p123
    %p126 = scmp.ne.s32.totalorder %s111, %s125
    %p127 = scmp.eq.s32.totalorder %s17, 0
    %p128 = por %p126, %p127
    %s129 = ssub.s32 %s11, %s18
    %p130 = scmp.eq.s32.totalorder %s129, 0
    %s132 = sadd.s32 %s131, 1
    %s133 = scalar_select %p130, %s131, %s132
    %p136 = pneg %p130
    %p137 = scmp.eq.s32.totalorder %s11, 1
    %p138 = por %p136, %p137
    %p139 = scmp.ne.s32.totalorder %s131, %s134
    %p140 = scmp.eq.s32.totalorder %s11, 0
    %p141 = por %p139, %p140
    %p142 = scmp.ne.s32.totalorder %s131, %s134
    %p143 = scmp.eq.s32.totalorder %s16, 1
    %p144 = por %p142, %p143
    %p145 = scmp.ne.s32.totalorder %s134, %s135
    %p146 = scmp.eq.s32.totalorder %s16, 0
    %p147 = por %p145, %p146
    %p148 = scmp.ne.s32.totalorder %s134, %s135
    %p149 = scmp.eq.s32.totalorder %s17, 1
    %p150 = por %p148, %p149
    %p152 = scmp.ne.s32.totalorder %s135, %s151
    %p153 = scmp.eq.s32.totalorder %s17, 0
    %p154 = por %p152, %p153
    %p155 = scmp.le.s32.totalorder 1, %s11
    %p156 = scmp.lt.s32.totalorder %s11, 3
    %p157 = pnand %p155, %p156
    %p158 = pneg %p157
    // Predicated region
    $region9: #{convnet_forward.3} parent=5 // pred_check
      _
    $region10: #{convnet_forward.3} parent=5 // pred_check_branch
      %160 = sbr.rel (%p157) target = $region12
    $region11: #{convnet_forward.3} parent=5 // pred_region
      %s161 = ssub.s32 %s11, 1
      // Predicated region
      $region13: #{convnet_forward.3} parent=11 // pred_check
        %p162 = pneg %p58
      $region14: #{convnet_forward.3} parent=11 // pred_check_branch
        %164 = sbr.rel (%p162) target = $region16
      $region15: #{convnet_forward.3} parent=11 // pred_region
        _
      $region16: #{convnet_forward.3} parent=11 // pred_fallthru
        _
      // Predicated region
      $region17: #{convnet_forward.3} parent=11 // pred_check
        %p165 = pneg %p79
      $region18: #{convnet_forward.3} parent=11 // pred_check_branch
        %167 = sbr.rel (%p165) target = $region20
      $region19: #{convnet_forward.3} parent=11 // pred_region
        _
      $region20: #{convnet_forward.3} parent=11 // pred_fallthru
        _
      // Predicated region
      $region21: #{convnet_forward.3} parent=11 // pred_check
        %p168 = pneg %p100
      $region22: #{convnet_forward.3} parent=11 // pred_check_branch
        %170 = sbr.rel (%p168) target = $region24
      $region23: #{convnet_forward.3} parent=11 // pred_region
        _
      $region24: #{convnet_forward.3} parent=11 // pred_fallthru
        _
      // Predicated region
      $region25: #{convnet_forward.3} parent=11 // pred_check
        %p171 = pneg %p121
      $region26: #{convnet_forward.3} parent=11 // pred_check_branch
        %173 = sbr.rel (%p171) target = $region28
      $region27: #{convnet_forward.3} parent=11 // pred_region
        _
      $region28: #{convnet_forward.3} parent=11 // pred_fallthru
        _
    $region12: #{convnet_forward.3} parent=5 // pred_fallthru
      _
    %p174 = scmp.lt.s32.totalorder %s11, 2
    // Predicated region
    $region29: #{convnet_forward.3} parent=5 // pred_check
      %p175 = pneg %p174
    $region30: #{convnet_forward.3} parent=5 // pred_check_branch
      %177 = sbr.rel (%p175) target = $region32
    $region31: #{convnet_forward.3} parent=5 // pred_region
      // Predicated region
      $region33: #{convnet_forward.3} parent=31 // pred_check
        %p178 = pneg %p31
      $region34: #{convnet_forward.3} parent=31 // pred_check_branch
        %180 = sbr.rel (%p178) target = $region36
      $region35: #{convnet_forward.3} parent=31 // pred_region
        %p181 = scmp.lt.s32.totalorder %s11, 1
        %s182 = scalar_select %p181, %s11, 1
        %s183 = smul.addr %s182, 4
        %s184 = smul.addr %s183, 4
        %s185 = scalar_lea.vmem %s0, %s184
      $region36: #{convnet_forward.3} parent=31 // pred_fallthru
        _
    $region32: #{convnet_forward.3} parent=5 // pred_fallthru
      _
    %p186 = scmp.le.s32.totalorder 1, %s11
    %p187 = scmp.lt.s32.totalorder %s11, 3
    %p188 = pnand %p186, %p187
    %p189 = pneg %p188
    // Predicated region
    $region37: #{convnet_forward.3} parent=5 // pred_check
      _
    $region38: #{convnet_forward.3} parent=5 // pred_check_branch
      %191 = sbr.rel (%p188) target = $region40
    $region39: #{convnet_forward.3} parent=5 // pred_region
      %s192 = ssub.s32 %s11, 1
      %p193 = scmp.lt.s32.totalorder %s16, 1
      %s194 = scalar_select %p193, %s16, 1
      %s195 = smul.addr %s194, 4
      %s196 = smul.addr %s195, 4
      %s197 = scalar_lea.vmem %s0, %s196
      %p198 = pneg %p37
      %p199 = pneg %p34
      %p200 = pneg %p58
      %p201 = pneg %p55
      %p202 = pneg %p79
      %p203 = pneg %p76
      %p204 = pneg %p100
      %p205 = pneg %p97
      %p206 = pneg %p121
      %p207 = pneg %p118
      %p208 = pneg %p147
      %p209 = pneg %p144
      %p210 = scmp.lt.s32.totalorder %s16, 1
      %s211 = scalar_select %p210, %s16, 1
      %s212 = smul.addr %s211, 2
      %s213 = smul.addr %s212, 4
      %s214 = scalar_lea.vmem %s5, %s213
      %p215 = scmp.lt.s32.totalorder %s16, 1
      %s216 = scalar_select %p215, %s16, 1
      %s217 = smul.addr %s216, 4
      %s218 = smul.addr %s217, 4
      %s219 = scalar_lea.vmem %s0, %s218
      %p220 = scmp.lt.s32.totalorder %s16, 1
      %s221 = scalar_select %p220, %s16, 1
      %s222 = smul.addr %s221, 2
      %s223 = smul.addr %s222, 4
      %s224 = scalar_lea.vmem %s5, %s223
      %v226 = vld [vmem:[%s219] sm:$0xf]
      %vm227 = vcmask 650240
      %228 = vst.msk [vmem:[#allocation2] sm:$0xf] %vm227, %v226
      %s229 = scalar_lea.vmem %s219, 4
      %v230 = vld [vmem:[%s229] sm:$0xf]
      %231 = vst.msk [vmem:[#allocation2 + $0x4] sm:$0xf] %vm227, %v230
      %v232 = vld [vmem:[%s219] sm:$0xf]
      %234 = vrot.lane.b32.xlu0 %v232, 127
      %v235 = vpop.permute.xlu0 %234
      %237 = vst.msk [vmem:[#allocation2 + $0x8] sm:$0xf] %vm227, %v235
      %s238 = scalar_lea.vmem %s219, 8
      %v239 = vld [vmem:[%s238] sm:$0xf]
      %240 = vst.msk [vmem:[#allocation2 + $0xc] sm:$0xf] %vm227, %v239
      %s241 = scalar_lea.vmem %s219, 12
      %v242 = vld [vmem:[%s241] sm:$0xf]
      %243 = vst.msk [vmem:[#allocation2 + $0x10] sm:$0xf] %vm227, %v242
      %v244 = vld [vmem:[%s238] sm:$0xf]
      %246 = vrot.lane.b32.xlu0 %v244, 127
      %v247 = vpop.permute.xlu0 %246
      %249 = vst.msk [vmem:[#allocation2 + $0x14] sm:$0xf] %vm227, %v247
      %v250 = vld [vmem:[%s219] sm:$0xf]
      %252 = vrot.lane.b32.xlu0 %v250, 118
      %v253 = vpop.permute.xlu0 %252
      %255 = vst.msk [vmem:[#allocation2 + $0x18] sm:$0xf] %vm227, %v253
      %v256 = vld [vmem:[%s229] sm:$0xf]
      %258 = vrot.lane.b32.xlu0 %v256, 118
      %v259 = vpop.permute.xlu0 %258
      %261 = vst.msk [vmem:[#allocation2 + $0x1c] sm:$0xf] %vm227, %v259
      %v262 = vld [vmem:[%s219] sm:$0xf]
      %264 = vrot.lane.b32.xlu0 %v262, 117
      %v265 = vpop.permute.xlu0 %264
      %267 = vst.msk [vmem:[#allocation2 + $0x20] sm:$0xf] %vm227, %v265
      %v268 = vld [vmem:[%s1] sm:$0xf]
      %v269 = vld [vmem:[%s1 + $0x4] sm:$0xf]
      %v270 = vld [vmem:[#allocation2] sm:$0xf]
      %v271 = vld [vmem:[#allocation2 + $0x4] sm:$0xf]
      %v272 = vld [vmem:[#allocation2 + $0x8] sm:$0xf]
      %v273 = vld [vmem:[#allocation2 + $0xc] sm:$0xf]
      %v274 = vld [vmem:[#allocation2 + $0x10] sm:$0xf]
      %v275 = vld [vmem:[#allocation2 + $0x14] sm:$0xf]
      %v276 = vld [vmem:[#allocation2 + $0x18] sm:$0xf]
      %v277 = vld [vmem:[#allocation2 + $0x1c] sm:$0xf]
      %v278 = vld [vmem:[#allocation2 + $0x20] sm:$0xf]
      %v281 = vunpack.c.l.b16 %v268
      %v282 = vunpack.c.l.b16 %v269
      %v283 = vpack.c.b16 %v282, %v281
      %v293 = vunpack.c.l.b16 %v270
      %v294 = vunpack.c.l.b16 %v271
      %v295 = vunpack.c.l.b16 %v272
      %v296 = vunpack.c.l.b16 %v273
      %v297 = vunpack.c.l.b16 %v274
      %v298 = vunpack.c.l.b16 %v275
      %v299 = vunpack.c.l.b16 %v276
      %v300 = vunpack.c.l.b16 %v277
      %v301 = vunpack.c.l.b16 %v278
      %v302 = vpack.c.b16 %v294, %v293
      %v303 = vpack.c.b16 %v296, %v295
      %v304 = vpack.c.b16 %v298, %v297
      %v305 = vpack.c.b16 %v300, %v299
      %v306 = vpack.c.b16 %v301, %v301
      %vm311 = vcmask 588800
      %v313 = vsel %vm311, %v283, 0
      %vm315 = vcmask 1043456
      %v317 = vsel %vm315, %v306, 0
      %319 = vmatpush.bf16.msra.mxu0 0
      %320 = vmatpush.bf16.msra.mxu0 0
      %321 = vmatpush.bf16.msra.mxu0 0
      %322 = vmatpush.bf16.msra.mxu0 %v317
      %323 = vmatpush.bf16.msra.mxu0 %v305
      %324 = vmatpush.bf16.msra.mxu0 %v304
      %325 = vmatpush.bf16.msra.mxu0 %v303
      %326 = vmatpush.bf16.msra.mxu0 %v302
      %327 = vmatmul.bf16.gmra.mxu0 %v313
      %v328 = vpop.f32.mrf.mxu0
      %v329 = vadd.f32 0.0, %v328
      %v330 = vpop.f32.mrf.mxu0
      %v331 = vadd.f32 0.0, %v330
      %332 = vdwg.mxu0
      %v333 = vld [vmem:[%s2] sm:$0xff]
      %v334 = vld [vmem:[%s2 + $0x8] sm:$0xff]
      %336 = vset.pattern.permute.xlu0 0
      %337 = vperm.xlu0 %336, %v333
      %v338 = vpop.permute.xlu0 %337
      %341 = vset.pattern.permute.xlu0 0
      %342 = vperm.xlu0 %341, %v334
      %v343 = vpop.permute.xlu0 %342
      %v345 = vmul.f32 %v329, %v338
      %v346 = vmul.f32 %v331, %v343
      %v347 = vld [vmem:[%s3] sm:$0xff]
      %v348 = vld [vmem:[%s3 + $0x8] sm:$0xff]
      %350 = vset.pattern.permute.xlu0 0
      %351 = vperm.xlu0 %350, %v347
      %v352 = vpop.permute.xlu0 %351
      %355 = vset.pattern.permute.xlu0 0
      %356 = vperm.xlu0 %355, %v348
      %v357 = vpop.permute.xlu0 %356
      %v359 = vadd.f32 %v345, %v352
      %v360 = vadd.f32 %v346, %v357
      %v361 = vmax.f32 %v359, 0.0
      %v362 = vmax.f32 %v360, 0.0
      %v363 = vld [vmem:[%s229] sm:$0xf]
      %s364 = scalar_lea.vmem [#allocation2], 36
      %365 = vst.msk [vmem:[%s364] sm:$0xf] %vm227, %v363
      %v366 = vld [vmem:[%s219] sm:$0xf]
      %368 = vrot.lane.b32.xlu0 %v366, 127
      %v369 = vpop.permute.xlu0 %368
      %371 = vst.msk [vmem:[%s364 + $0x4] sm:$0xf] %vm227, %v369
      %v372 = vld [vmem:[%s229] sm:$0xf]
      %374 = vrot.lane.b32.xlu0 %v372, 127
      %v375 = vpop.permute.xlu0 %374
      %377 = vst.msk [vmem:[%s364 + $0x8] sm:$0xf] %vm227, %v375
      %v378 = vld [vmem:[%s241] sm:$0xf]
      %379 = vst.msk [vmem:[%s364 + $0xc] sm:$0xf] %vm227, %v378
      %v380 = vld [vmem:[%s238] sm:$0xf]
      %382 = vrot.lane.b32.xlu0 %v380, 127
      %v383 = vpop.permute.xlu0 %382
      %385 = vst.msk [vmem:[%s364 + $0x10] sm:$0xf] %vm227, %v383
      %v386 = vld [vmem:[%s241] sm:$0xf]
      %388 = vrot.lane.b32.xlu0 %v386, 127
      %v389 = vpop.permute.xlu0 %388
      %391 = vst.msk [vmem:[%s364 + $0x14] sm:$0xf] %vm227, %v389
      %v392 = vld [vmem:[%s229] sm:$0xf]
      %394 = vrot.lane.b32.xlu0 %v392, 118
      %v395 = vpop.permute.xlu0 %394
      %397 = vst.msk [vmem:[%s364 + $0x18] sm:$0xf] %vm227, %v395
      %v398 = vld [vmem:[%s219] sm:$0xf]
      %400 = vrot.lane.b32.xlu0 %v398, 117
      %v401 = vpop.permute.xlu0 %400
      %403 = vst.msk [vmem:[%s364 + $0x1c] sm:$0xf] %vm227, %v401
      %v404 = vld [vmem:[%s229] sm:$0xf]
      %406 = vrot.lane.b32.xlu0 %v404, 117
      %v407 = vpop.permute.xlu0 %406
      %409 = vst.msk [vmem:[%s364 + $0x20] sm:$0xf] %vm227, %v407
      %v410 = vld [vmem:[%s1] sm:$0xf]
      %v411 = vld [vmem:[%s1 + $0x4] sm:$0xf]
      %v412 = vld [vmem:[%s364] sm:$0xf]
      %v413 = vld [vmem:[%s364 + $0x4] sm:$0xf]
      %v414 = vld [vmem:[%s364 + $0x8] sm:$0xf]
      %v415 = vld [vmem:[%s364 + $0xc] sm:$0xf]
      %v416 = vld [vmem:[%s364 + $0x10] sm:$0xf]
      %v417 = vld [vmem:[%s364 + $0x14] sm:$0xf]
      %v418 = vld [vmem:[%s364 + $0x18] sm:$0xf]
      %v419 = vld [vmem:[%s364 + $0x1c] sm:$0xf]
      %v420 = vld [vmem:[%s364 + $0x20] sm:$0xf]
      %v423 = vunpack.c.l.b16 %v410
      %v424 = vunpack.c.l.b16 %v411
      %v425 = vpack.c.b16 %v424, %v423
      %v435 = vunpack.c.l.b16 %v412
      %v436 = vunpack.c.l.b16 %v413
      %v437 = vunpack.c.l.b16 %v414
      %v438 = vunpack.c.l.b16 %v415
      %v439 = vunpack.c.l.b16 %v416
      %v440 = vunpack.c.l.b16 %v417
      %v441 = vunpack.c.l.b16 %v418
      %v442 = vunpack.c.l.b16 %v419
      %v443 = vunpack.c.l.b16 %v420
      %v444 = vpack.c.b16 %v436, %v435
      %v445 = vpack.c.b16 %v438, %v437
      %v446 = vpack.c.b16 %v440, %v439
      %v447 = vpack.c.b16 %v442, %v441
      %v448 = vpack.c.b16 %v443, %v443
      %v454 = vsel %vm311, %v425, 0
      %v457 = vsel %vm315, %v448, 0
      %459 = vmatpush.bf16.msra.mxu0 0
      %460 = vmatpush.bf16.msra.mxu0 0
      %461 = vmatpush.bf16.msra.mxu0 0
      %462 = vmatpush.bf16.msra.mxu0 %v457
      %463 = vmatpush.bf16.msra.mxu0 %v447
      %464 = vmatpush.bf16.msra.mxu0 %v446
      %465 = vmatpush.bf16.msra.mxu0 %v445
      %466 = vmatpush.bf16.msra.mxu0 %v444
      %467 = vmatmul.bf16.gmra.mxu0 %v454
      %v468 = vpop.f32.mrf.mxu0
      %v469 = vadd.f32 0.0, %v468
      %v470 = vpop.f32.mrf.mxu0
      %v471 = vadd.f32 0.0, %v470
      %472 = vdwg.mxu0
      %v473 = vld [vmem:[%s2] sm:$0xff]
      %v474 = vld [vmem:[%s2 + $0x8] sm:$0xff]
      %476 = vset.pattern.permute.xlu0 0
      %477 = vperm.xlu0 %476, %v473
      %v478 = vpop.permute.xlu0 %477
      %481 = vset.pattern.permute.xlu0 0
      %482 = vperm.xlu0 %481, %v474
      %v483 = vpop.permute.xlu0 %482
      %v485 = vmul.f32 %v469, %v478
      %v486 = vmul.f32 %v471, %v483
      %v487 = vld [vmem:[%s3] sm:$0xff]
      %v488 = vld [vmem:[%s3 + $0x8] sm:$0xff]
      %490 = vset.pattern.permute.xlu0 0
      %491 = vperm.xlu0 %490, %v487
      %v492 = vpop.permute.xlu0 %491
      %495 = vset.pattern.permute.xlu0 0
      %496 = vperm.xlu0 %495, %v488
      %v497 = vpop.permute.xlu0 %496
      %v499 = vadd.f32 %v485, %v492
      %v500 = vadd.f32 %v486, %v497
      %v501 = vmax.f32 %v499, 0.0
      %v502 = vmax.f32 %v500, 0.0
      %v503 = vmax.f32 %v361, %v501
      %v504 = vmax.f32 %v362, %v502
      %v505 = vld [vmem:[%s238] sm:$0xf]
      %506 = vst.msk [vmem:[#allocation2] sm:$0xf] %vm227, %v505
      %v507 = vld [vmem:[%s241] sm:$0xf]
      %508 = vst.msk [vmem:[#allocation2 + $0x4] sm:$0xf] %vm227, %v507
      %v509 = vld [vmem:[%s238] sm:$0xf]
      %511 = vrot.lane.b32.xlu0 %v509, 127
      %v512 = vpop.permute.xlu0 %511
      %514 = vst.msk [vmem:[#allocation2 + $0x8] sm:$0xf] %vm227, %v512
      %v515 = vld [vmem:[%s219] sm:$0xf]
      %517 = vrot.lane.b32.xlu0 %v515, 118
      %v518 = vpop.permute.xlu0 %517
      %520 = vst.msk [vmem:[#allocation2 + $0xc] sm:$0xf] %vm227, %v518
      %v521 = vld [vmem:[%s229] sm:$0xf]
      %523 = vrot.lane.b32.xlu0 %v521, 118
      %v524 = vpop.permute.xlu0 %523
      %526 = vst.msk [vmem:[#allocation2 + $0x10] sm:$0xf] %vm227, %v524
      %v527 = vld [vmem:[%s219] sm:$0xf]
      %529 = vrot.lane.b32.xlu0 %v527, 117
      %v530 = vpop.permute.xlu0 %529
      %532 = vst.msk [vmem:[#allocation2 + $0x14] sm:$0xf] %vm227, %v530
      %v533 = vld [vmem:[%s238] sm:$0xf]
      %535 = vrot.lane.b32.xlu0 %v533, 118
      %v536 = vpop.permute.xlu0 %535
      %538 = vst.msk [vmem:[#allocation2 + $0x18] sm:$0xf] %vm227, %v536
      %v539 = vld [vmem:[%s241] sm:$0xf]
      %541 = vrot.lane.b32.xlu0 %v539, 118
      %v542 = vpop.permute.xlu0 %541
      %544 = vst.msk [vmem:[#allocation2 + $0x1c] sm:$0xf] %vm227, %v542
      %v545 = vld [vmem:[%s238] sm:$0xf]
      %547 = vrot.lane.b32.xlu0 %v545, 117
      %v548 = vpop.permute.xlu0 %547
      %550 = vst.msk [vmem:[#allocation2 + $0x20] sm:$0xf] %vm227, %v548
      %v551 = vld [vmem:[%s1] sm:$0xf]
      %v552 = vld [vmem:[%s1 + $0x4] sm:$0xf]
      %v553 = vld [vmem:[#allocation2] sm:$0xf]
      %v554 = vld [vmem:[#allocation2 + $0x4] sm:$0xf]
      %v555 = vld [vmem:[#allocation2 + $0x8] sm:$0xf]
      %v556 = vld [vmem:[#allocation2 + $0xc] sm:$0xf]
      %v557 = vld [vmem:[#allocation2 + $0x10] sm:$0xf]
      %v558 = vld [vmem:[#allocation2 + $0x14] sm:$0xf]
      %v559 = vld [vmem:[#allocation2 + $0x18] sm:$0xf]
      %v560 = vld [vmem:[#allocation2 + $0x1c] sm:$0xf]
      %v561 = vld [vmem:[#allocation2 + $0x20] sm:$0xf]
      %v564 = vunpack.c.l.b16 %v551
      %v565 = vunpack.c.l.b16 %v552
      %v566 = vpack.c.b16 %v565, %v564
      %v576 = vunpack.c.l.b16 %v553
      %v577 = vunpack.c.l.b16 %v554
      %v578 = vunpack.c.l.b16 %v555
      %v579 = vunpack.c.l.b16 %v556
      %v580 = vunpack.c.l.b16 %v557
      %v581 = vunpack.c.l.b16 %v558
      %v582 = vunpack.c.l.b16 %v559
      %v583 = vunpack.c.l.b16 %v560
      %v584 = vunpack.c.l.b16 %v561
      %v585 = vpack.c.b16 %v577, %v576
      %v586 = vpack.c.b16 %v579, %v578
      %v587 = vpack.c.b16 %v581, %v580
      %v588 = vpack.c.b16 %v583, %v582
      %v589 = vpack.c.b16 %v584, %v584
      %v595 = vsel %vm311, %v566, 0
      %v598 = vsel %vm315, %v589, 0
      %600 = vmatpush.bf16.msra.mxu0 0
      %601 = vmatpush.bf16.msra.mxu0 0
      %602 = vmatpush.bf16.msra.mxu0 0
      %603 = vmatpush.bf16.msra.mxu0 %v598
      %604 = vmatpush.bf16.msra.mxu0 %v588
      %605 = vmatpush.bf16.msra.mxu0 %v587
      %606 = vmatpush.bf16.msra.mxu0 %v586
      %607 = vmatpush.bf16.msra.mxu0 %v585
      %608 = vmatmul.bf16.gmra.mxu0 %v595
      %v609 = vpop.f32.mrf.mxu0
      %v610 = vadd.f32 0.0, %v609
      %v611 = vpop.f32.mrf.mxu0
      %v612 = vadd.f32 0.0, %v611
      %613 = vdwg.mxu0
      %v614 = vld [vmem:[%s2] sm:$0xff]
      %v615 = vld [vmem:[%s2 + $0x8] sm:$0xff]
      %617 = vset.pattern.permute.xlu0 0
      %618 = vperm.xlu0 %617, %v614
      %v619 = vpop.permute.xlu0 %618
      %622 = vset.pattern.permute.xlu0 0
      %623 = vperm.xlu0 %622, %v615
      %v624 = vpop.permute.xlu0 %623
      %v626 = vmul.f32 %v610, %v619
      %v627 = vmul.f32 %v612, %v624
      %v628 = vld [vmem:[%s3] sm:$0xff]
      %v629 = vld [vmem:[%s3 + $0x8] sm:$0xff]
      %631 = vset.pattern.permute.xlu0 0
      %632 = vperm.xlu0 %631, %v628
      %v633 = vpop.permute.xlu0 %632
      %636 = vset.pattern.permute.xlu0 0
      %637 = vperm.xlu0 %636, %v629
      %v638 = vpop.permute.xlu0 %637
      %v640 = vadd.f32 %v626, %v633
      %v641 = vadd.f32 %v627, %v638
      %v642 = vmax.f32 %v640, 0.0
      %v643 = vmax.f32 %v641, 0.0
      %v644 = vmax.f32 %v503, %v642
      %v645 = vmax.f32 %v504, %v643
      %v646 = vld [vmem:[%s241] sm:$0xf]
      %647 = vst.msk [vmem:[%s364] sm:$0xf] %vm227, %v646
      %v648 = vld [vmem:[%s238] sm:$0xf]
      %650 = vrot.lane.b32.xlu0 %v648, 127
      %v651 = vpop.permute.xlu0 %650
      %653 = vst.msk [vmem:[%s364 + $0x4] sm:$0xf] %vm227, %v651
      %v654 = vld [vmem:[%s241] sm:$0xf]
      %656 = vrot.lane.b32.xlu0 %v654, 127
      %v657 = vpop.permute.xlu0 %656
      %659 = vst.msk [vmem:[%s364 + $0x8] sm:$0xf] %vm227, %v657
      %v660 = vld [vmem:[%s229] sm:$0xf]
      %662 = vrot.lane.b32.xlu0 %v660, 118
      %v663 = vpop.permute.xlu0 %662
      %665 = vst.msk [vmem:[%s364 + $0xc] sm:$0xf] %vm227, %v663
      %v666 = vld [vmem:[%s219] sm:$0xf]
      %668 = vrot.lane.b32.xlu0 %v666, 117
      %v669 = vpop.permute.xlu0 %668
      %671 = vst.msk [vmem:[%s364 + $0x10] sm:$0xf] %vm227, %v669
      %v672 = vld [vmem:[%s229] sm:$0xf]
      %674 = vrot.lane.b32.xlu0 %v672, 117
      %v675 = vpop.permute.xlu0 %674
      %677 = vst.msk [vmem:[%s364 + $0x14] sm:$0xf] %vm227, %v675
      %v678 = vld [vmem:[%s241] sm:$0xf]
      %680 = vrot.lane.b32.xlu0 %v678, 118
      %v681 = vpop.permute.xlu0 %680
      %683 = vst.msk [vmem:[%s364 + $0x18] sm:$0xf] %vm227, %v681
      %v684 = vld [vmem:[%s238] sm:$0xf]
      %686 = vrot.lane.b32.xlu0 %v684, 117
      %v687 = vpop.permute.xlu0 %686
      %689 = vst.msk [vmem:[%s364 + $0x1c] sm:$0xf] %vm227, %v687
      %v690 = vld [vmem:[%s241] sm:$0xf]
      %692 = vrot.lane.b32.xlu0 %v690, 117
      %v693 = vpop.permute.xlu0 %692
      %695 = vst.msk [vmem:[%s364 + $0x20] sm:$0xf] %vm227, %v693
      %v696 = vld [vmem:[%s1] sm:$0xf]
      %v697 = vld [vmem:[%s1 + $0x4] sm:$0xf]
      %v698 = vld [vmem:[%s364] sm:$0xf]
      %v699 = vld [vmem:[%s364 + $0x4] sm:$0xf]
      %v700 = vld [vmem:[%s364 + $0x8] sm:$0xf]
      %v701 = vld [vmem:[%s364 + $0xc] sm:$0xf]
      %v702 = vld [vmem:[%s364 + $0x10] sm:$0xf]
      %v703 = vld [vmem:[%s364 + $0x14] sm:$0xf]
      %v704 = vld [vmem:[%s364 + $0x18] sm:$0xf]
      %v705 = vld [vmem:[%s364 + $0x1c] sm:$0xf]
      %v706 = vld [vmem:[%s364 + $0x20] sm:$0xf]
      %v709 = vunpack.c.l.b16 %v696
      %v710 = vunpack.c.l.b16 %v697
      %v711 = vpack.c.b16 %v710, %v709
      %v721 = vunpack.c.l.b16 %v698
      %v722 = vunpack.c.l.b16 %v699
      %v723 = vunpack.c.l.b16 %v700
      %v724 = vunpack.c.l.b16 %v701
      %v725 = vunpack.c.l.b16 %v702
      %v726 = vunpack.c.l.b16 %v703
      %v727 = vunpack.c.l.b16 %v704
      %v728 = vunpack.c.l.b16 %v705
      %v729 = vunpack.c.l.b16 %v706
      %v730 = vpack.c.b16 %v722, %v721
      %v731 = vpack.c.b16 %v724, %v723
      %v732 = vpack.c.b16 %v726, %v725
      %v733 = vpack.c.b16 %v728, %v727
      %v734 = vpack.c.b16 %v729, %v729
      %v740 = vsel %vm311, %v711, 0
      %v743 = vsel %vm315, %v734, 0
      %745 = vmatpush.bf16.msra.mxu0 0
      %746 = vmatpush.bf16.msra.mxu0 0
      %747 = vmatpush.bf16.msra.mxu0 0
      %748 = vmatpush.bf16.msra.mxu0 %v743
      %749 = vmatpush.bf16.msra.mxu0 %v733
      %750 = vmatpush.bf16.msra.mxu0 %v732
      %751 = vmatpush.bf16.msra.mxu0 %v731
      %752 = vmatpush.bf16.msra.mxu0 %v730
      %753 = vmatmul.bf16.gmra.mxu0 %v740
      %v754 = vpop.f32.mrf.mxu0
      %v755 = vadd.f32 0.0, %v754
      %v756 = vpop.f32.mrf.mxu0
      %v757 = vadd.f32 0.0, %v756
      %758 = vdwg.mxu0
      %v759 = vld [vmem:[%s2] sm:$0xff]
      %v760 = vld [vmem:[%s2 + $0x8] sm:$0xff]
      %762 = vset.pattern.permute.xlu0 0
      %763 = vperm.xlu0 %762, %v759
      %v764 = vpop.permute.xlu0 %763
      %767 = vset.pattern.permute.xlu0 0
      %768 = vperm.xlu0 %767, %v760
      %v769 = vpop.permute.xlu0 %768
      %v771 = vmul.f32 %v755, %v764
      %v772 = vmul.f32 %v757, %v769
      %v773 = vld [vmem:[%s3] sm:$0xff]
      %v774 = vld [vmem:[%s3 + $0x8] sm:$0xff]
      %776 = vset.pattern.permute.xlu0 0
      %777 = vperm.xlu0 %776, %v773
      %v778 = vpop.permute.xlu0 %777
      %781 = vset.pattern.permute.xlu0 0
      %782 = vperm.xlu0 %781, %v774
      %v783 = vpop.permute.xlu0 %782
      %v785 = vadd.f32 %v771, %v778
      %v786 = vadd.f32 %v772, %v783
      %v787 = vmax.f32 %v785, 0.0
      %v788 = vmax.f32 %v786, 0.0
      %v789 = vmax.f32 %v644, %v787
      %v790 = vmax.f32 %v645, %v788
      %v791 = vld [vmem:[%s4] sm:$0x1]
      %v793 = vperm.slane %v791, 0
      %v795 = vmul.f32 %v789, %v793
      %v796 = vmul.f32 %v790, %v793
      %vm797 = vcmask 896000
      %798 = vst.msk [vmem:[%s224] sm:$0xf] %vm797, 0
      %799 = vst.msk [vmem:[%s224 + $0x4] sm:$0xf] %vm797, 0
      %v800 = vpack.c.bf16 %v795, %v795
      %v801 = vpack.c.bf16 %v796, %v796
      %804 = vrot.lane.b32.xlu0 %v800, 11
      %v805 = vpop.permute.xlu0 %804
      %806 = vrot.lane.b32.xlu0 %v801, 11
      %v807 = vpop.permute.xlu0 %806
      %vm810 = vcmask 740440
      %811 = vst.msk [vmem:[%s224] sm:$0xf] %vm810, %v805
      %812 = vst.msk [vmem:[%s224 + $0x4] sm:$0xf] %vm810, %v807
      %p813 = scmp.lt.s32.totalorder %s16, 1
      %s814 = scalar_select %p813, %s16, 1
      %s815 = smul.addr %s814, 2
      %s816 = smul.addr %s815, 4
      %s817 = scalar_lea.vmem %s5, %s816
      // Predicated region
      $region41: #{convnet_forward.3} parent=39 // pred_check
        %p818 = pneg %p144
      $region42: #{convnet_forward.3} parent=39 // pred_check_branch
        %820 = sbr.rel (%p818) target = $region44
      $region43: #{convnet_forward.3} parent=39 // pred_region
        _
      $region44: #{convnet_forward.3} parent=39 // pred_fallthru
        _
    $region40: #{convnet_forward.3} parent=5 // pred_fallthru
      _
    %p821 = scmp.le.s32.totalorder 2, %s11
    // Predicated region
    $region45: #{convnet_forward.3} parent=5 // pred_check
      %p822 = pneg %p821
    $region46: #{convnet_forward.3} parent=5 // pred_check_branch
      %824 = sbr.rel (%p822) target = $region48
    $region47: #{convnet_forward.3} parent=5 // pred_region
      %s825 = ssub.s32 %s11, 2
      // Predicated region
      $region49: #{convnet_forward.3} parent=47 // pred_check
        %p826 = pneg %p150
      $region50: #{convnet_forward.3} parent=47 // pred_check_branch
        %828 = sbr.rel (%p826) target = $region52
      $region51: #{convnet_forward.3} parent=47 // pred_region
        %p829 = scmp.lt.s32.totalorder %s17, 1
        %s830 = scalar_select %p829, %s17, 1
        %s831 = smul.addr %s830, 2
        %s832 = smul.addr %s831, 4
        %s833 = scalar_lea.vmem %s5, %s832
      $region52: #{convnet_forward.3} parent=47 // pred_fallthru
        _
    $region48: #{convnet_forward.3} parent=5 // pred_fallthru
      _
  $region6: #{convnet_forward.3} parent=0 // loop_footer
    %s15 = sadd.s32 1, %s11
  $region7: #{convnet_forward.3} parent=0 // loop_footer_branch
    %10 = sbr.rel target = $region3
  $region8: #{convnet_forward.3} parent=0 // loop_exit
    _

// kernel: convnet_forward.5
$region0: #{convnet_forward.5}
  #allocation0 [shape = 'u32[]', space=smem, size = 0x4, offset = 0x4, fixed_abs, tag = 'smem constant byte address 0x4 - core index']
  #allocation1 [shape = 'u32[72,128]{1,0:T(1,128)}', space=vmem, size = 0x9000, scoped, tag = 'internal scratch']
  #allocation2 [shape = 'bf16[216,80]{1,0:T(8,128)(2,1)}', space=vmem, size = 0xd800, scoped, tag = 'scratch operand']
  %s0 = inlined_call_operand.vmem [shape: bf16[2,24,110], index: 0, kind: input, shape index: {}]
  %s1 = inlined_call_operand.vmem [shape: bf16[32,216], index: 1, kind: input, shape index: {}]
  %s2 = inlined_call_operand.vmem [shape: f32[32,1], index: 2, kind: input, shape index: {}]
  %s3 = inlined_call_operand.vmem [shape: f32[32,1], index: 3, kind: input, shape index: {}]
  %s4 = inlined_call_operand.vmem [shape: f32[1,80], index: 4, kind: input, shape index: {}]
  %s5 = inlined_call_operand.vmem [shape: bf16[384,80], index: 5, kind: input, shape index: {}]
  %s6 = inlined_call_operand.vmem [shape: f32[384,32], index: 6, kind: input, shape index: {}]
  %s7 = inlined_call_operand.vmem [shape: f32[12,384], index: 7, kind: input, shape index: {}]
  %s8 = inlined_call_operand.vmem [shape: f32[12,1], index: 8, kind: input, shape index: {}]
  %s9 = inlined_call_operand.vmem [shape: f32[2,12,1], index: 9, kind: output, shape index: {}]
  %s10 = sld [smem:[#allocation0]]
  $region69: #{convnet_forward.5} parent=0
    _
  %s12 = ssub.s32 1, %s10
  %s13 = scalar_select 0, %s12, %s10
  loop: start=0, step=1, limit=4
  $region2: #{convnet_forward.5} parent=0 // loop_pre_header
    _
  $region3: #{convnet_forward.5} parent=0 // loop_header
    %s15 = sphi 0, %s19
    %p16 = scmp.ge.s32.totalorder %s15, 4
    %s25 = sphi 0, %s27
    %s28 = sphi 0, %s25
    %s29 = sphi 0, %s28
    %s45 = sphi 0, %s29
    %s49 = sphi 0, %s49
    %s51 = sphi 0, %s49
    %s52 = sphi 0, %s51
    %s66 = sphi 0, %s52
    %s70 = sphi 0, %s70
    %s72 = sphi 0, %s70
    %s73 = sphi 0, %s72
    %s87 = sphi 0, %s73
    %s91 = sphi 0, %s91
    %s93 = sphi 0, %s91
    %s94 = sphi 0, %s93
    %s108 = sphi 0, %s94
    %s112 = sphi 0, %s112
    %s114 = sphi 0, %s112
    %s115 = sphi 0, %s114
    %s129 = sphi 0, %s115
    %s133 = sphi 0, %s133
    %s135 = sphi 0, %s133
    %s136 = sphi 0, %s135
    %s150 = sphi 0, %s136
    %s154 = sphi 0, %s154
    %s156 = sphi 0, %s154
    %s157 = sphi 0, %s156
    %s171 = sphi 0, %s157
    %s175 = sphi 0, %s175
    %s177 = sphi 0, %s175
    %s178 = sphi 0, %s177
    %s192 = sphi 0, %s178
    %s196 = sphi 0, %s196
    %s198 = sphi 0, %s196
    %s199 = sphi 0, %s198
    %s213 = sphi 0, %s199
    %s219 = sphi 0, %s221
    %s222 = sphi 0, %s219
    %s223 = sphi 0, %s222
    %s239 = sphi 0, %s223
  $region4: #{convnet_forward.5} parent=0 // loop_header_branch
    %18 = sbr.rel (%p16) target = $region8
  $region5: #{convnet_forward.5} parent=0 // loop_body
    %s20 = ssub.s32 %s15, 1
    %s21 = ssub.s32 %s15, 2
    %s22 = sadd.s32 %s15, 1
    %s23 = ssub.s32 %s15, %s22
    %p24 = scmp.eq.s32.totalorder %s23, 0
    %s26 = sadd.s32 %s25, 1
    %s27 = scalar_select %p24, %s25, %s26
    %p30 = pneg %p24
    %p31 = scmp.eq.s32.totalorder %s15, 1
    %p32 = por %p30, %p31
    %p33 = scmp.ne.s32.totalorder %s25, %s28
    %p34 = scmp.eq.s32.totalorder %s15, 0
    %p35 = por %p33, %p34
    %p36 = scmp.ne.s32.totalorder %s25, %s28
    %p37 = scmp.eq.s32.totalorder %s20, 1
    %p38 = por %p36, %p37
    %p39 = scmp.ne.s32.totalorder %s28, %s29
    %p40 = scmp.eq.s32.totalorder %s20, 0
    %p41 = por %p39, %p40
    %p42 = scmp.ne.s32.totalorder %s28, %s29
    %p43 = scmp.eq.s32.totalorder %s21, 1
    %p44 = por %p42, %p43
    %p46 = scmp.ne.s32.totalorder %s29, %s45
    %p47 = scmp.eq.s32.totalorder %s21, 0
    %p48 = por %p46, %p47
    %s50 = sadd.s32 %s49, 1
    %p53 = scmp.eq.s32.totalorder %s15, 1
    %p54 = scmp.ne.s32.totalorder %s49, %s51
    %p55 = scmp.eq.s32.totalorder %s15, 0
    %p56 = por %p54, %p55
    %p57 = scmp.ne.s32.totalorder %s49, %s51
    %p58 = scmp.eq.s32.totalorder %s20, 1
    %p59 = por %p57, %p58
    %p60 = scmp.ne.s32.totalorder %s51, %s52
    %p61 = scmp.eq.s32.totalorder %s20, 0
    %p62 = por %p60, %p61
    %p63 = scmp.ne.s32.totalorder %s51, %s52
    %p64 = scmp.eq.s32.totalorder %s21, 1
    %p65 = por %p63, %p64
    %p67 = scmp.ne.s32.totalorder %s52, %s66
    %p68 = scmp.eq.s32.totalorder %s21, 0
    %p69 = por %p67, %p68
    %s71 = sadd.s32 %s70, 1
    %p74 = scmp.eq.s32.totalorder %s15, 1
    %p75 = scmp.ne.s32.totalorder %s70, %s72
    %p76 = scmp.eq.s32.totalorder %s15, 0
    %p77 = por %p75, %p76
    %p78 = scmp.ne.s32.totalorder %s70, %s72
    %p79 = scmp.eq.s32.totalorder %s20, 1
    %p80 = por %p78, %p79
    %p81 = scmp.ne.s32.totalorder %s72, %s73
    %p82 = scmp.eq.s32.totalorder %s20, 0
    %p83 = por %p81, %p82
    %p84 = scmp.ne.s32.totalorder %s72, %s73
    %p85 = scmp.eq.s32.totalorder %s21, 1
    %p86 = por %p84, %p85
    %p88 = scmp.ne.s32.totalorder %s73, %s87
    %p89 = scmp.eq.s32.totalorder %s21, 0
    %p90 = por %p88, %p89
    %s92 = sadd.s32 %s91, 1
    %p95 = scmp.eq.s32.totalorder %s15, 1
    %p96 = scmp.ne.s32.totalorder %s91, %s93
    %p97 = scmp.eq.s32.totalorder %s15, 0
    %p98 = por %p96, %p97
    %p99 = scmp.ne.s32.totalorder %s91, %s93
    %p100 = scmp.eq.s32.totalorder %s20, 1
    %p101 = por %p99, %p100
    %p102 = scmp.ne.s32.totalorder %s93, %s94
    %p103 = scmp.eq.s32.totalorder %s20, 0
    %p104 = por %p102, %p103
    %p105 = scmp.ne.s32.totalorder %s93, %s94
    %p106 = scmp.eq.s32.totalorder %s21, 1
    %p107 = por %p105, %p106
    %p109 = scmp.ne.s32.totalorder %s94, %s108
    %p110 = scmp.eq.s32.totalorder %s21, 0
    %p111 = por %p109, %p110
    %s113 = sadd.s32 %s112, 1
    %p116 = scmp.eq.s32.totalorder %s15, 1
    %p117 = scmp.ne.s32.totalorder %s112, %s114
    %p118 = scmp.eq.s32.totalorder %s15, 0
    %p119 = por %p117, %p118
    %p120 = scmp.ne.s32.totalorder %s112, %s114
    %p121 = scmp.eq.s32.totalorder %s20, 1
    %p122 = por %p120, %p121
    %p123 = scmp.ne.s32.totalorder %s114, %s115
    %p124 = scmp.eq.s32.totalorder %s20, 0
    %p125 = por %p123, %p124
    %p126 = scmp.ne.s32.totalorder %s114, %s115
    %p127 = scmp.eq.s32.totalorder %s21, 1
    %p128 = por %p126, %p127
    %p130 = scmp.ne.s32.totalorder %s115, %s129
    %p131 = scmp.eq.s32.totalorder %s21, 0
    %p132 = por %p130, %p131
    %s134 = sadd.s32 %s133, 1
    %p137 = scmp.eq.s32.totalorder %s15, 1
    %p138 = scmp.ne.s32.totalorder %s133, %s135
    %p139 = scmp.eq.s32.totalorder %s15, 0
    %p140 = por %p138, %p139
    %p141 = scmp.ne.s32.totalorder %s133, %s135
    %p142 = scmp.eq.s32.totalorder %s20, 1
    %p143 = por %p141, %p142
    %p144 = scmp.ne.s32.totalorder %s135, %s136
    %p145 = scmp.eq.s32.totalorder %s20, 0
    %p146 = por %p144, %p145
    %p147 = scmp.ne.s32.totalorder %s135, %s136
    %p148 = scmp.eq.s32.totalorder %s21, 1
    %p149 = por %p147, %p148
    %p151 = scmp.ne.s32.totalorder %s136, %s150
    %p152 = scmp.eq.s32.totalorder %s21, 0
    %p153 = por %p151, %p152
    %s155 = sadd.s32 %s154, 1
    %p158 = scmp.eq.s32.totalorder %s15, 1
    %p159 = scmp.ne.s32.totalorder %s154, %s156
    %p160 = scmp.eq.s32.totalorder %s15, 0
    %p161 = por %p159, %p160
    %p162 = scmp.ne.s32.totalorder %s154, %s156
    %p163 = scmp.eq.s32.totalorder %s20, 1
    %p164 = por %p162, %p163
    %p165 = scmp.ne.s32.totalorder %s156, %s157
    %p166 = scmp.eq.s32.totalorder %s20, 0
    %p167 = por %p165, %p166
    %p168 = scmp.ne.s32.totalorder %s156, %s157
    %p169 = scmp.eq.s32.totalorder %s21, 1
    %p170 = por %p168, %p169
    %p172 = scmp.ne.s32.totalorder %s157, %s171
    %p173 = scmp.eq.s32.totalorder %s21, 0
    %p174 = por %p172, %p173
    %s176 = sadd.s32 %s175, 1
    %p179 = scmp.eq.s32.totalorder %s15, 1
    %p180 = scmp.ne.s32.totalorder %s175, %s177
    %p181 = scmp.eq.s32.totalorder %s15, 0
    %p182 = por %p180, %p181
    %p183 = scmp.ne.s32.totalorder %s175, %s177
    %p184 = scmp.eq.s32.totalorder %s20, 1
    %p185 = por %p183, %p184
    %p186 = scmp.ne.s32.totalorder %s177, %s178
    %p187 = scmp.eq.s32.totalorder %s20, 0
    %p188 = por %p186, %p187
    %p189 = scmp.ne.s32.totalorder %s177, %s178
    %p190 = scmp.eq.s32.totalorder %s21, 1
    %p191 = por %p189, %p190
    %p193 = scmp.ne.s32.totalorder %s178, %s192
    %p194 = scmp.eq.s32.totalorder %s21, 0
    %p195 = por %p193, %p194
    %s197 = sadd.s32 %s196, 1
    %p200 = scmp.eq.s32.totalorder %s15, 1
    %p201 = scmp.ne.s32.totalorder %s196, %s198
    %p202 = scmp.eq.s32.totalorder %s15, 0
    %p203 = por %p201, %p202
    %p204 = scmp.ne.s32.totalorder %s196, %s198
    %p205 = scmp.eq.s32.totalorder %s20, 1
    %p206 = por %p204, %p205
    %p207 = scmp.ne.s32.totalorder %s198, %s199
    %p208 = scmp.eq.s32.totalorder %s20, 0
    %p209 = por %p207, %p208
    %p210 = scmp.ne.s32.totalorder %s198, %s199
    %p211 = scmp.eq.s32.totalorder %s21, 1
    %p212 = por %p210, %p211
    %p214 = scmp.ne.s32.totalorder %s199, %s213
    %p215 = scmp.eq.s32.totalorder %s21, 0
    %p216 = por %p214, %p215
    %s217 = ssub.s32 %s15, %s22
    %p218 = scmp.eq.s32.totalorder %s217, 0
    %s220 = sadd.s32 %s219, 1
    %s221 = scalar_select %p218, %s219, %s220
    %p224 = pneg %p218
    %p225 = scmp.eq.s32.totalorder %s15, 1
    %p226 = por %p224, %p225
    %p227 = scmp.ne.s32.totalorder %s219, %s222
    %p228 = scmp.eq.s32.totalorder %s15, 0
    %p229 = por %p227, %p228
    %p230 = scmp.ne.s32.totalorder %s219, %s222
    %p231 = scmp.eq.s32.totalorder %s20, 1
    %p232 = por %p230, %p231
    %p233 = scmp.ne.s32.totalorder %s222, %s223
    %p234 = scmp.eq.s32.totalorder %s20, 0
    %p235 = por %p233, %p234
    %p236 = scmp.ne.s32.totalorder %s222, %s223
    %p237 = scmp.eq.s32.totalorder %s21, 1
    %p238 = por %p236, %p237
    %p240 = scmp.ne.s32.totalorder %s223, %s239
    %p241 = scmp.eq.s32.totalorder %s21, 0
    %p242 = por %p240, %p241
    %p243 = scmp.le.s32.totalorder 1, %s15
    %p244 = scmp.lt.s32.totalorder %s15, 3
    %p245 = pnand %p243, %p244
    %p246 = pneg %p245
    // Predicated region
    $region9: #{convnet_forward.5} parent=5 // pred_check
      _
    $region10: #{convnet_forward.5} parent=5 // pred_check_branch
      %248 = sbr.rel (%p245) target = $region12
    $region11: #{convnet_forward.5} parent=5 // pred_region
      %s249 = ssub.s32 %s15, 1
      // Predicated region
      $region13: #{convnet_forward.5} parent=11 // pred_check
        %p250 = pneg %p62
      $region14: #{convnet_forward.5} parent=11 // pred_check_branch
        %252 = sbr.rel (%p250) target = $region16
      $region15: #{convnet_forward.5} parent=11 // pred_region
        _
      $region16: #{convnet_forward.5} parent=11 // pred_fallthru
        _
      // Predicated region
      $region17: #{convnet_forward.5} parent=11 // pred_check
        %p253 = pneg %p83
      $region18: #{convnet_forward.5} parent=11 // pred_check_branch
        %255 = sbr.rel (%p253) target = $region20
      $region19: #{convnet_forward.5} parent=11 // pred_region
        _
      $region20: #{convnet_forward.5} parent=11 // pred_fallthru
        _
      // Predicated region
      $region21: #{convnet_forward.5} parent=11 // pred_check
        %p256 = pneg %p104
      $region22: #{convnet_forward.5} parent=11 // pred_check_branch
        %258 = sbr.rel (%p256) target = $region24
      $region23: #{convnet_forward.5} parent=11 // pred_region
        _
      $region24: #{convnet_forward.5} parent=11 // pred_fallthru
        _
      // Predicated region
      $region25: #{convnet_forward.5} parent=11 // pred_check
        %p259 = pneg %p125
      $region26: #{convnet_forward.5} parent=11 // pred_check_branch
        %261 = sbr.rel (%p259) target = $region28
      $region27: #{convnet_forward.5} parent=11 // pred_region
        _
      $region28: #{convnet_forward.5} parent=11 // pred_fallthru
        _
      // Predicated region
      $region29: #{convnet_forward.5} parent=11 // pred_check
        %p262 = pneg %p146
      $region30: #{convnet_forward.5} parent=11 // pred_check_branch
        %264 = sbr.rel (%p262) target = $region32
      $region31: #{convnet_forward.5} parent=11 // pred_region
        _
      $region32: #{convnet_forward.5} parent=11 // pred_fallthru
        _
      // Predicated region
      $region33: #{convnet_forward.5} parent=11 // pred_check
        %p265 = pneg %p167
      $region34: #{convnet_forward.5} parent=11 // pred_check_branch
        %267 = sbr.rel (%p265) target = $region36
      $region35: #{convnet_forward.5} parent=11 // pred_region
        _
      $region36: #{convnet_forward.5} parent=11 // pred_fallthru
        _
      // Predicated region
      $region37: #{convnet_forward.5} parent=11 // pred_check
        %p268 = pneg %p188
      $region38: #{convnet_forward.5} parent=11 // pred_check_branch
        %270 = sbr.rel (%p268) target = $region40
      $region39: #{convnet_forward.5} parent=11 // pred_region
        _
      $region40: #{convnet_forward.5} parent=11 // pred_fallthru
        _
      // Predicated region
      $region41: #{convnet_forward.5} parent=11 // pred_check
        %p271 = pneg %p209
      $region42: #{convnet_forward.5} parent=11 // pred_check_branch
        %273 = sbr.rel (%p271) target = $region44
      $region43: #{convnet_forward.5} parent=11 // pred_region
        _
      $region44: #{convnet_forward.5} parent=11 // pred_fallthru
        _
    $region12: #{convnet_forward.5} parent=5 // pred_fallthru
      _
    %p274 = scmp.lt.s32.totalorder %s15, 2
    // Predicated region
    $region45: #{convnet_forward.5} parent=5 // pred_check
      %p275 = pneg %p274
    $region46: #{convnet_forward.5} parent=5 // pred_check_branch
      %277 = sbr.rel (%p275) target = $region48
    $region47: #{convnet_forward.5} parent=5 // pred_region
      // Predicated region
      $region49: #{convnet_forward.5} parent=47 // pred_check
        %p278 = pneg %p35
      $region50: #{convnet_forward.5} parent=47 // pred_check_branch
        %280 = sbr.rel (%p278) target = $region52
      $region51: #{convnet_forward.5} parent=47 // pred_region
        %p281 = scmp.lt.s32.totalorder %s15, 1
        %s282 = scalar_select %p281, %s15, 1
        %s283 = smul.addr %s282, 3
        %s284 = smul.addr %s283, 4
        %s285 = scalar_lea.vmem %s0, %s284
      $region52: #{convnet_forward.5} parent=47 // pred_fallthru
        _
    $region48: #{convnet_forward.5} parent=5 // pred_fallthru
      _
    %p286 = scmp.le.s32.totalorder 1, %s15
    %p287 = scmp.lt.s32.totalorder %s15, 3
    %p288 = pnand %p286, %p287
    %p289 = pneg %p288
    // Predicated region
    $region53: #{convnet_forward.5} parent=5 // pred_check
      _
    $region54: #{convnet_forward.5} parent=5 // pred_check_branch
      %291 = sbr.rel (%p288) target = $region56
    $region55: #{convnet_forward.5} parent=5 // pred_region
      %s292 = ssub.s32 %s15, 1
      %p293 = scmp.lt.s32.totalorder %s20, 1
      %s294 = scalar_select %p293, %s20, 1
      %s295 = smul.addr %s294, 3
      %s296 = smul.addr %s295, 4
      %s297 = scalar_lea.vmem %s0, %s296
      %p298 = pneg %p41
      %p299 = pneg %p38
      %p300 = pneg %p62
      %p301 = pneg %p59
      %p302 = pneg %p83
      %p303 = pneg %p80
      %p304 = pneg %p104
      %p305 = pneg %p101
      %p306 = pneg %p125
      %p307 = pneg %p122
      %p308 = pneg %p146
      %p309 = pneg %p143
      %p310 = pneg %p167
      %p311 = pneg %p164
      %p312 = pneg %p188
      %p313 = pneg %p185
      %p314 = pneg %p209
      %p315 = pneg %p206
      %p316 = pneg %p235
      %p317 = pneg %p232
      %p318 = scmp.lt.s32.totalorder %s20, 1
      %s319 = scalar_select %p318, %s20, 1
      %s320 = smul.addr %s319, 2
      %s321 = smul.addr %s320, 8
      %s322 = scalar_lea.vmem %s9, %s321
      %p323 = scmp.lt.s32.totalorder %s20, 1
      %s324 = scalar_select %p323, %s20, 1
      %s325 = smul.addr %s324, 3
      %s326 = smul.addr %s325, 4
      %s327 = scalar_lea.vmem %s0, %s326
      %p328 = scmp.lt.s32.totalorder %s20, 1
      %s329 = scalar_select %p328, %s20, 1
      %s330 = smul.addr %s329, 2
      %s331 = smul.addr %s330, 8
      %s332 = scalar_lea.vmem %s9, %s331
      %v334 = vld [vmem:[%s327] sm:$0xf]
      %v335 = vld [vmem:[%s327 + $0x4] sm:$0xf]
      %v336 = vld [vmem:[%s327 + $0x8] sm:$0xf]
      %vm337 = vcmask 650240
      %338 = vst.msk [vmem:[#allocation2] sm:$0xf] %vm337, %v334
      %339 = vst.msk [vmem:[#allocation2 + $0x4] sm:$0xf] %vm337, %v335
      %340 = vst.msk [vmem:[#allocation2 + $0x8] sm:$0xf] %vm337, %v336
      %v341 = vld [vmem:[%s327] sm:$0xf]
      %v342 = vld [vmem:[%s327 + $0x4] sm:$0xf]
      %v343 = vld [vmem:[%s327 + $0x8] sm:$0xf]
      %347 = vrot.lane.b32.xlu0 %v341, 127
      %v348 = vpop.permute.xlu0 %347
      %349 = vrot.lane.b32.xlu0 %v342, 127
      %v350 = vpop.permute.xlu0 %349
      %351 = vrot.lane.b32.xlu0 %v343, 127
      %v352 = vpop.permute.xlu0 %351
      %356 = vst.msk [vmem:[#allocation2 + $0xc] sm:$0xf] %vm337, %v348
      %357 = vst.msk [vmem:[#allocation2 + $0x10] sm:$0xf] %vm337, %v350
      %358 = vst.msk [vmem:[#allocation2 + $0x14] sm:$0xf] %vm337, %v352
      %v359 = vld [vmem:[%s327] sm:$0xf]
      %v360 = vld [vmem:[%s327 + $0x4] sm:$0xf]
      %v361 = vld [vmem:[%s327 + $0x8] sm:$0xf]
      %365 = vrot.lane.b32.xlu0 %v359, 126
      %v366 = vpop.permute.xlu0 %365
      %367 = vrot.lane.b32.xlu0 %v360, 126
      %v368 = vpop.permute.xlu0 %367
      %369 = vrot.lane.b32.xlu0 %v361, 126
      %v370 = vpop.permute.xlu0 %369
      %374 = vst.msk [vmem:[#allocation2 + $0x18] sm:$0xf] %vm337, %v366
      %375 = vst.msk [vmem:[#allocation2 + $0x1c] sm:$0xf] %vm337, %v368
      %376 = vst.msk [vmem:[#allocation2 + $0x20] sm:$0xf] %vm337, %v370
      %v377 = vld [vmem:[%s327] sm:$0xf]
      %v378 = vld [vmem:[%s327 + $0x4] sm:$0xf]
      %v379 = vld [vmem:[%s327 + $0x8] sm:$0xf]
      %383 = vrot.lane.b32.xlu0 %v377, 118
      %v384 = vpop.permute.xlu0 %383
      %385 = vrot.lane.b32.xlu0 %v378, 118
      %v386 = vpop.permute.xlu0 %385
      %387 = vrot.lane.b32.xlu0 %v379, 118
      %v388 = vpop.permute.xlu0 %387
      %392 = vst.msk [vmem:[#allocation2 + $0x24] sm:$0xf] %vm337, %v384
      %393 = vst.msk [vmem:[#allocation2 + $0x28] sm:$0xf] %vm337, %v386
      %394 = vst.msk [vmem:[#allocation2 + $0x2c] sm:$0xf] %vm337, %v388
      %v395 = vld [vmem:[%s327] sm:$0xf]
      %v396 = vld [vmem:[%s327 + $0x4] sm:$0xf]
      %v397 = vld [vmem:[%s327 + $0x8] sm:$0xf]
      %401 = vrot.lane.b32.xlu0 %v395, 117
      %v402 = vpop.permute.xlu0 %401
      %403 = vrot.lane.b32.xlu0 %v396, 117
      %v404 = vpop.permute.xlu0 %403
      %405 = vrot.lane.b32.xlu0 %v397, 117
      %v406 = vpop.permute.xlu0 %405
      %410 = vst.msk [vmem:[#allocation2 + $0x30] sm:$0xf] %vm337, %v402
      %411 = vst.msk [vmem:[#allocation2 + $0x34] sm:$0xf] %vm337, %v404
      %412 = vst.msk [vmem:[#allocation2 + $0x38] sm:$0xf] %vm337, %v406
      %v413 = vld [vmem:[%s327] sm:$0xf]
      %v414 = vld [vmem:[%s327 + $0x4] sm:$0xf]
      %v415 = vld [vmem:[%s327 + $0x8] sm:$0xf]
      %419 = vrot.lane.b32.xlu0 %v413, 116
      %v420 = vpop.permute.xlu0 %419
      %421 = vrot.lane.b32.xlu0 %v414, 116
      %v422 = vpop.permute.xlu0 %421
      %423 = vrot.lane.b32.xlu0 %v415, 116
      %v424 = vpop.permute.xlu0 %423
      %428 = vst.msk [vmem:[#allocation2 + $0x3c] sm:$0xf] %vm337, %v420
      %429 = vst.msk [vmem:[#allocation2 + $0x40] sm:$0xf] %vm337, %v422
      %430 = vst.msk [vmem:[#allocation2 + $0x44] sm:$0xf] %vm337, %v424
      %v431 = vld [vmem:[%s327] sm:$0xf]
      %v432 = vld [vmem:[%s327 + $0x4] sm:$0xf]
      %v433 = vld [vmem:[%s327 + $0x8] sm:$0xf]
      %437 = vrot.lane.b32.xlu0 %v431, 108
      %v438 = vpop.permute.xlu0 %437
      %439 = vrot.lane.b32.xlu0 %v432, 108
      %v440 = vpop.permute.xlu0 %439
      %441 = vrot.lane.b32.xlu0 %v433, 108
      %v442 = vpop.permute.xlu0 %441
      %446 = vst.msk [vmem:[#allocation2 + $0x48] sm:$0xf] %vm337, %v438
      %447 = vst.msk [vmem:[#allocation2 + $0x4c] sm:$0xf] %vm337, %v440
      %448 = vst.msk [vmem:[#allocation2 + $0x50] sm:$0xf] %vm337, %v442
      %v449 = vld [vmem:[%s327] sm:$0xf]
      %v450 = vld [vmem:[%s327 + $0x4] sm:$0xf]
      %v451 = vld [vmem:[%s327 + $0x8] sm:$0xf]
      %455 = vrot.lane.b32.xlu0 %v449, 107
      %v456 = vpop.permute.xlu0 %455
      %457 = vrot.lane.b32.xlu0 %v450, 107
      %v458 = vpop.permute.xlu0 %457
      %459 = vrot.lane.b32.xlu0 %v451, 107
      %v460 = vpop.permute.xlu0 %459
      %464 = vst.msk [vmem:[#allocation2 + $0x54] sm:$0xf] %vm337, %v456
      %465 = vst.msk [vmem:[#allocation2 + $0x58] sm:$0xf] %vm337, %v458
      %466 = vst.msk [vmem:[#allocation2 + $0x5c] sm:$0xf] %vm337, %v460
      %v467 = vld [vmem:[%s327] sm:$0xf]
      %v468 = vld [vmem:[%s327 + $0x4] sm:$0xf]
      %v469 = vld [vmem:[%s327 + $0x8] sm:$0xf]
      %473 = vrot.lane.b32.xlu0 %v467, 106
      %v474 = vpop.permute.xlu0 %473
      %475 = vrot.lane.b32.xlu0 %v468, 106
      %v476 = vpop.permute.xlu0 %475
      %477 = vrot.lane.b32.xlu0 %v469, 106
      %v478 = vpop.permute.xlu0 %477
      %482 = vst.msk [vmem:[#allocation2 + $0x60] sm:$0xf] %vm337, %v474
      %483 = vst.msk [vmem:[#allocation2 + $0x64] sm:$0xf] %vm337, %v476
      %484 = vst.msk [vmem:[#allocation2 + $0x68] sm:$0xf] %vm337, %v478
      %v485 = vld [vmem:[%s1] sm:$0xff]
      %v486 = vld [vmem:[%s1 + $0x8] sm:$0xff]
      %v487 = vld [vmem:[%s1 + $0x10] sm:$0xff]
      %v488 = vld [vmem:[%s1 + $0x18] sm:$0xff]
      %v489 = vld [vmem:[#allocation2] sm:$0xf]
      %v490 = vld [vmem:[#allocation2 + $0x4] sm:$0xf]
      %v491 = vld [vmem:[#allocation2 + $0x8] sm:$0xf]
      %v492 = vld [vmem:[#allocation2 + $0xc] sm:$0xf]
      %v493 = vld [vmem:[#allocation2 + $0x10] sm:$0xf]
      %v494 = vld [vmem:[#allocation2 + $0x14] sm:$0xf]
      %v495 = vld [vmem:[#allocation2 + $0x18] sm:$0xf]
      %v496 = vld [vmem:[#allocation2 + $0x1c] sm:$0xf]
      %v497 = vld [vmem:[#allocation2 + $0x20] sm:$0xf]
      %v498 = vld [vmem:[#allocation2 + $0x24] sm:$0xf]
      %v499 = vld [vmem:[#allocation2 + $0x28] sm:$0xf]
      %v500 = vld [vmem:[#allocation2 + $0x2c] sm:$0xf]
      %v501 = vld [vmem:[#allocation2 + $0x30] sm:$0xf]
      %v502 = vld [vmem:[#allocation2 + $0x34] sm:$0xf]
      %v503 = vld [vmem:[#allocation2 + $0x38] sm:$0xf]
      %v504 = vld [vmem:[#allocation2 + $0x3c] sm:$0xf]
      %v505 = vld [vmem:[#allocation2 + $0x40] sm:$0xf]
      %v506 = vld [vmem:[#allocation2 + $0x44] sm:$0xf]
      %v507 = vld [vmem:[#allocation2 + $0x48] sm:$0xf]
      %v508 = vld [vmem:[#allocation2 + $0x4c] sm:$0xf]
      %v509 = vld [vmem:[#allocation2 + $0x50] sm:$0xf]
      %v510 = vld [vmem:[#allocation2 + $0x54] sm:$0xf]
      %v511 = vld [vmem:[#allocation2 + $0x58] sm:$0xf]
      %v512 = vld [vmem:[#allocation2 + $0x5c] sm:$0xf]
      %v513 = vld [vmem:[#allocation2 + $0x60] sm:$0xf]
      %v514 = vld [vmem:[#allocation2 + $0x64] sm:$0xf]
      %v515 = vld [vmem:[#allocation2 + $0x68] sm:$0xf]
      %v520 = vunpack.c.l.b16 %v485
      %v521 = vunpack.c.h.b16 %v485
      %v522 = vunpack.c.l.b16 %v486
      %v523 = vunpack.c.h.b16 %v486
      %v524 = vunpack.c.l.b16 %v487
      %v525 = vunpack.c.h.b16 %v487
      %v526 = vunpack.c.l.b16 %v488
      %v527 = vunpack.c.h.b16 %v488
      %v528 = vpack.c.b16 %v522, %v520
      %v529 = vpack.c.b16 %v523, %v521
      %v530 = vpack.c.b16 %v526, %v524
      %v531 = vpack.c.b16 %v527, %v525
      %v561 = vunpack.c.l.b16 %v489
      %v562 = vunpack.c.l.b16 %v490
      %v563 = vunpack.c.l.b16 %v491
      %v564 = vunpack.c.l.b16 %v492
      %v565 = vunpack.c.l.b16 %v493
      %v566 = vunpack.c.l.b16 %v494
      %v567 = vunpack.c.l.b16 %v495
      %v568 = vunpack.c.l.b16 %v496
      %v569 = vunpack.c.l.b16 %v497
      %v570 = vunpack.c.l.b16 %v498
      %v571 = vunpack.c.l.b16 %v499
      %v572 = vunpack.c.l.b16 %v500
      %v573 = vunpack.c.l.b16 %v501
      %v574 = vunpack.c.l.b16 %v502
      %v575 = vunpack.c.l.b16 %v503
      %v576 = vunpack.c.l.b16 %v504
      %v577 = vunpack.c.l.b16 %v505
      %v578 = vunpack.c.l.b16 %v506
      %v579 = vunpack.c.l.b16 %v507
      %v580 = vunpack.c.l.b16 %v508
      %v581 = vunpack.c.l.b16 %v509
      %v582 = vunpack.c.l.b16 %v510
      %v583 = vunpack.c.l.b16 %v511
      %v584 = vunpack.c.l.b16 %v512
      %v585 = vunpack.c.l.b16 %v513
      %v586 = vunpack.c.l.b16 %v514
      %v587 = vunpack.c.l.b16 %v515
      %v588 = vpack.c.b16 %v562, %v561
      %v589 = vpack.c.b16 %v564, %v563
      %v590 = vpack.c.b16 %v566, %v565
      %v591 = vpack.c.b16 %v568, %v567
      %v592 = vpack.c.b16 %v570, %v569
      %v593 = vpack.c.b16 %v572, %v571
      %v594 = vpack.c.b16 %v574, %v573
      %v595 = vpack.c.b16 %v576, %v575
      %v596 = vpack.c.b16 %v578, %v577
      %v597 = vpack.c.b16 %v580, %v579
      %v598 = vpack.c.b16 %v582, %v581
      %v599 = vpack.c.b16 %v584, %v583
      %v600 = vpack.c.b16 %v586, %v585
      %v601 = vpack.c.b16 %v587, %v587
      %vm615 = vcmask 719872
      %v617 = vsel %vm615, %v529, 0
      %v620 = vsel %vm615, %v531, 0
      %vm622 = vcmask 1043456
      %v624 = vsel %vm622, %v601, 0
      %626 = vmatpush.bf16.msra.mxu0 %v595
      %627 = vmatpush.bf16.msra.mxu0 %v594
      %628 = vmatpush.bf16.msra.mxu0 %v593
      %629 = vmatpush.bf16.msra.mxu0 %v592
      %630 = vmatpush.bf16.msra.mxu0 %v591
      %631 = vmatpush.bf16.msra.mxu0 %v590
      %632 = vmatpush.bf16.msra.mxu0 %v589
      %633 = vmatpush.bf16.msra.mxu0 %v588
      %634 = vmatmul.bf16.gmra.mxu0 %v528
      %v635 = vpop.f32.mrf.mxu0
      %v636 = vadd.f32 0.0, %v635
      %v637 = vpop.f32.mrf.mxu0
      %v638 = vadd.f32 0.0, %v637
      %639 = vmatmul.bf16.gmra.mxu0 %v530
      %v640 = vpop.f32.mrf.mxu0
      %v641 = vadd.f32 0.0, %v640
      %v642 = vpop.f32.mrf.mxu0
      %v643 = vadd.f32 0.0, %v642
      %644 = vdwg.mxu0
      %645 = vmatpush.bf16.msra.mxu0 0
      %646 = vmatpush.bf16.msra.mxu0 0
      %647 = vmatpush.bf16.msra.mxu0 %v624
      %648 = vmatpush.bf16.msra.mxu0 %v600
      %649 = vmatpush.bf16.msra.mxu0 %v599
      %650 = vmatpush.bf16.msra.mxu0 %v598
      %651 = vmatpush.bf16.msra.mxu0 %v597
      %652 = vmatpush.bf16.msra.mxu0 %v596
      %653 = vmatmul.bf16.gmra.mxu0 %v617
      %v654 = vpop.f32.mrf.mxu0
      %v655 = vadd.f32 %v636, %v654
      %v656 = vpop.f32.mrf.mxu0
      %v657 = vadd.f32 %v638, %v656
      %658 = vmatmul.bf16.gmra.mxu0 %v620
      %v659 = vpop.f32.mrf.mxu0
      %v660 = vadd.f32 %v641, %v659
      %v661 = vpop.f32.mrf.mxu0
      %v662 = vadd.f32 %v643, %v661
      %663 = vdwg.mxu0
      %v664 = vld [vmem:[%s2] sm:$0xff]
      %v665 = vld [vmem:[%s2 + $0x8] sm:$0xff]
      %v666 = vld [vmem:[%s2 + $0x10] sm:$0xff]
      %v667 = vld [vmem:[%s2 + $0x18] sm:$0xff]
      %669 = vset.pattern.permute.xlu0 0
      %670 = vperm.xlu0 %669, %v664
      %v671 = vpop.permute.xlu0 %670
      %674 = vset.pattern.permute.xlu0 0
      %675 = vperm.xlu0 %674, %v665
      %v676 = vpop.permute.xlu0 %675
      %679 = vset.pattern.permute.xlu0 0
      %680 = vperm.xlu0 %679, %v666
      %v681 = vpop.permute.xlu0 %680
      %684 = vset.pattern.permute.xlu0 0
      %685 = vperm.xlu0 %684, %v667
      %v686 = vpop.permute.xlu0 %685
      %v688 = vmul.f32 %v655, %v671
      %v689 = vmul.f32 %v657, %v676
      %v690 = vmul.f32 %v660, %v681
      %v691 = vmul.f32 %v662, %v686
      %v692 = vld [vmem:[%s3] sm:$0xff]
      %v693 = vld [vmem:[%s3 + $0x8] sm:$0xff]
      %v694 = vld [vmem:[%s3 + $0x10] sm:$0xff]
      %v695 = vld [vmem:[%s3 + $0x18] sm:$0xff]
      %697 = vset.pattern.permute.xlu0 0
      %698 = vperm.xlu0 %697, %v692
      %v699 = vpop.permute.xlu0 %698
      %702 = vset.pattern.permute.xlu0 0
      %703 = vperm.xlu0 %702, %v693
      %v704 = vpop.permute.xlu0 %703
      %707 = vset.pattern.permute.xlu0 0
      %708 = vperm.xlu0 %707, %v694
      %v709 = vpop.permute.xlu0 %708
      %712 = vset.pattern.permute.xlu0 0
      %713 = vperm.xlu0 %712, %v695
      %v714 = vpop.permute.xlu0 %713
      %v716 = vadd.f32 %v688, %v699
      %v717 = vadd.f32 %v689, %v704
      %v718 = vadd.f32 %v690, %v709
      %v719 = vadd.f32 %v691, %v714
      %v720 = vmax.f32 %v716, 0.0
      %v721 = vmax.f32 %v717, 0.0
      %v722 = vmax.f32 %v718, 0.0
      %v723 = vmax.f32 %v719, 0.0
      %v724 = vld [vmem:[%s4] sm:$0x1]
      %v726 = vperm.slane %v724, 0
      %v728 = vmul.f32 %v720, %v726
      %v729 = vmul.f32 %v721, %v726
      %v730 = vmul.f32 %v722, %v726
      %v731 = vmul.f32 %v723, %v726
      %v732 = vld [vmem:[%s5] sm:$0xf]
      %v733 = vld [vmem:[%s5 + $0x4] sm:$0xf]
      %v734 = vld [vmem:[%s5 + $0x8] sm:$0xf]
      %v735 = vld [vmem:[%s5 + $0xc] sm:$0xf]
      %v736 = vld [vmem:[%s5 + $0x10] sm:$0xf]
      %v737 = vld [vmem:[%s5 + $0x14] sm:$0xf]
      %v738 = vld [vmem:[%s5 + $0x18] sm:$0xf]
      %v739 = vld [vmem:[%s5 + $0x1c] sm:$0xf]
      %v740 = vld [vmem:[%s5 + $0x20] sm:$0xf]
      %v741 = vld [vmem:[%s5 + $0x24] sm:$0xf]
      %v742 = vld [vmem:[%s5 + $0x28] sm:$0xf]
      %v743 = vld [vmem:[%s5 + $0x2c] sm:$0xf]
      %v744 = vld [vmem:[%s5 + $0x30] sm:$0xf]
      %v745 = vld [vmem:[%s5 + $0x34] sm:$0xf]
      %v746 = vld [vmem:[%s5 + $0x38] sm:$0xf]
      %v747 = vld [vmem:[%s5 + $0x3c] sm:$0xf]
      %v748 = vld [vmem:[%s5 + $0x40] sm:$0xf]
      %v749 = vld [vmem:[%s5 + $0x44] sm:$0xf]
      %v750 = vld [vmem:[%s5 + $0x48] sm:$0xf]
      %v751 = vld [vmem:[%s5 + $0x4c] sm:$0xf]
      %v752 = vld [vmem:[%s5 + $0x50] sm:$0xf]
      %v753 = vld [vmem:[%s5 + $0x54] sm:$0xf]
      %v754 = vld [vmem:[%s5 + $0x58] sm:$0xf]
      %v755 = vld [vmem:[%s5 + $0x5c] sm:$0xf]
      %v756 = vld [vmem:[%s5 + $0x60] sm:$0xf]
      %v757 = vld [vmem:[%s5 + $0x64] sm:$0xf]
      %v758 = vld [vmem:[%s5 + $0x68] sm:$0xf]
      %v759 = vld [vmem:[%s5 + $0x6c] sm:$0xf]
      %v760 = vld [vmem:[%s5 + $0x70] sm:$0xf]
      %v761 = vld [vmem:[%s5 + $0x74] sm:$0xf]
      %v762 = vld [vmem:[%s5 + $0x78] sm:$0xf]
      %v763 = vld [vmem:[%s5 + $0x7c] sm:$0xf]
      %v764 = vld [vmem:[%s5 + $0x80] sm:$0xf]
      %v765 = vld [vmem:[%s5 + $0x84] sm:$0xf]
      %v766 = vld [vmem:[%s5 + $0x88] sm:$0xf]
      %v767 = vld [vmem:[%s5 + $0x8c] sm:$0xf]
      %v768 = vld [vmem:[%s5 + $0x90] sm:$0xf]
      %v769 = vld [vmem:[%s5 + $0x94] sm:$0xf]
      %v770 = vld [vmem:[%s5 + $0x98] sm:$0xf]
      %v771 = vld [vmem:[%s5 + $0x9c] sm:$0xf]
      %v772 = vld [vmem:[%s5 + $0xa0] sm:$0xf]
      %v773 = vld [vmem:[%s5 + $0xa4] sm:$0xf]
      %v774 = vld [vmem:[%s5 + $0xa8] sm:$0xf]
      %v775 = vld [vmem:[%s5 + $0xac] sm:$0xf]
      %v776 = vld [vmem:[%s5 + $0xb0] sm:$0xf]
      %v777 = vld [vmem:[%s5 + $0xb4] sm:$0xf]
      %v778 = vld [vmem:[%s5 + $0xb8] sm:$0xf]
      %v779 = vld [vmem:[%s5 + $0xbc] sm:$0xf]
      %v780 = vpack.c.bf16 %v729, %v728
      %v781 = vpack.c.bf16 %v731, %v730
      %v830 = vunpack.c.l.b16 %v732
      %v831 = vunpack.c.l.b16 %v733
      %v832 = vunpack.c.l.b16 %v734
      %v833 = vunpack.c.l.b16 %v735
      %v834 = vunpack.c.l.b16 %v736
      %v835 = vunpack.c.l.b16 %v737
      %v836 = vunpack.c.l.b16 %v738
      %v837 = vunpack.c.l.b16 %v739
      %v838 = vunpack.c.l.b16 %v740
      %v839 = vunpack.c.l.b16 %v741
      %v840 = vunpack.c.l.b16 %v742
      %v841 = vunpack.c.l.b16 %v743
      %v842 = vunpack.c.l.b16 %v744
      %v843 = vunpack.c.l.b16 %v745
      %v844 = vunpack.c.l.b16 %v746
      %v845 = vunpack.c.l.b16 %v747
      %v846 = vunpack.c.l.b16 %v748
      %v847 = vunpack.c.l.b16 %v749
      %v848 = vunpack.c.l.b16 %v750
      %v849 = vunpack.c.l.b16 %v751
      %v850 = vunpack.c.l.b16 %v752
      %v851 = vunpack.c.l.b16 %v753
      %v852 = vunpack.c.l.b16 %v754
      %v853 = vunpack.c.l.b16 %v755
      %v854 = vunpack.c.l.b16 %v756
      %v855 = vunpack.c.l.b16 %v757
      %v856 = vunpack.c.l.b16 %v758
      %v857 = vunpack.c.l.b16 %v759
      %v858 = vunpack.c.l.b16 %v760
      %v859 = vunpack.c.l.b16 %v761
      %v860 = vunpack.c.l.b16 %v762
      %v861 = vunpack.c.l.b16 %v763
      %v862 = vunpack.c.l.b16 %v764
      %v863 = vunpack.c.l.b16 %v765
      %v864 = vunpack.c.l.b16 %v766
      %v865 = vunpack.c.l.b16 %v767
      %v866 = vunpack.c.l.b16 %v768
      %v867 = vunpack.c.l.b16 %v769
      %v868 = vunpack.c.l.b16 %v770
      %v869 = vunpack.c.l.b16 %v771
      %v870 = vunpack.c.l.b16 %v772
      %v871 = vunpack.c.l.b16 %v773
      %v872 = vunpack.c.l.b16 %v774
      %v873 = vunpack.c.l.b16 %v775
      %v874 = vunpack.c.l.b16 %v776
      %v875 = vunpack.c.l.b16 %v777
      %v876 = vunpack.c.l.b16 %v778
      %v877 = vunpack.c.l.b16 %v779
      %v878 = vpack.c.b16 %v831, %v830
      %v879 = vpack.c.b16 %v833, %v832
      %v880 = vpack.c.b16 %v835, %v834
      %v881 = vpack.c.b16 %v837, %v836
      %v882 = vpack.c.b16 %v839, %v838
      %v883 = vpack.c.b16 %v841, %v840
      %v884 = vpack.c.b16 %v843, %v842
      %v885 = vpack.c.b16 %v845, %v844
      %v886 = vpack.c.b16 %v847, %v846
      %v887 = vpack.c.b16 %v849, %v848
      %v888 = vpack.c.b16 %v851, %v850
      %v889 = vpack.c.b16 %v853, %v852
      %v890 = vpack.c.b16 %v855, %v854
      %v891 = vpack.c.b16 %v857, %v856
      %v892 = vpack.c.b16 %v859, %v858
      %v893 = vpack.c.b16 %v861, %v860
      %v894 = vpack.c.b16 %v863, %v862
      %v895 = vpack.c.b16 %v865, %v864
      %v896 = vpack.c.b16 %v867, %v866
      %v897 = vpack.c.b16 %v869, %v868
      %v898 = vpack.c.b16 %v871, %v870
      %v899 = vpack.c.b16 %v873, %v872
      %v900 = vpack.c.b16 %v875, %v874
      %v901 = vpack.c.b16 %v877, %v876
      %vm902 = vcmask 654336
      %v904 = vsel %vm902, %v878, 0
      %v907 = vsel %vm902, %v879, 0
      %v910 = vsel %vm902, %v880, 0
      %v913 = vsel %vm902, %v881, 0
      %v916 = vsel %vm902, %v882, 0
      %v919 = vsel %vm902, %v883, 0
      %v922 = vsel %vm902, %v884, 0
      %v925 = vsel %vm902, %v885, 0
      %v928 = vsel %vm902, %v886, 0
      %v931 = vsel %vm902, %v887, 0
      %v934 = vsel %vm902, %v888, 0
      %v937 = vsel %vm902, %v889, 0
      %v940 = vsel %vm902, %v890, 0
      %v943 = vsel %vm902, %v891, 0
      %v946 = vsel %vm902, %v892, 0
      %v949 = vsel %vm902, %v893, 0
      %v952 = vsel %vm902, %v894, 0
      %v955 = vsel %vm902, %v895, 0
      %v958 = vsel %vm902, %v896, 0
      %v961 = vsel %vm902, %v897, 0
      %v964 = vsel %vm902, %v898, 0
      %v967 = vsel %vm902, %v899, 0
      %v970 = vsel %vm902, %v900, 0
      %v973 = vsel %vm902, %v901, 0
      %v976 = vsel %vm902, %v780, 0
      %v979 = vsel %vm902, %v781, 0
      %981 = vmatpush.bf16.xpose.msra.mxu0 0
      %982 = vmatpush.bf16.xpose.msra.mxu0 0
      %983 = vmatpush.bf16.xpose.msra.mxu0 0
      %984 = vmatpush.bf16.xpose.msra.mxu0 0
      %985 = vmatpush.bf16.xpose.msra.mxu0 0
      %986 = vmatpush.bf16.xpose.msra.mxu0 0
      %987 = vmatpush.bf16.xpose.msra.mxu0 %v979
      %988 = vmatpush.bf16.xpose.msra.mxu0 %v976
      %989 = vmatmul.bf16.gmra.mxu0 %v904
      %v990 = vpop.f32.mrf.mxu0
      %v991 = vadd.f32 0.0, %v990
      %v992 = vpop.f32.mrf.mxu0
      %v993 = vadd.f32 0.0, %v992
      %994 = vmatmul.bf16.gmra.mxu0 %v907
      %v995 = vpop.f32.mrf.mxu0
      %v996 = vadd.f32 0.0, %v995
      %v997 = vpop.f32.mrf.mxu0
      %v998 = vadd.f32 0.0, %v997
      %999 = vmatmul.bf16.gmra.mxu0 %v910
      %v1000 = vpop.f32.mrf.mxu0
      %v1001 = vadd.f32 0.0, %v1000
      %v1002 = vpop.f32.mrf.mxu0
      %v1003 = vadd.f32 0.0, %v1002
      %1004 = vmatmul.bf16.gmra.mxu0 %v913
      %v1005 = vpop.f32.mrf.mxu0
      %v1006 = vadd.f32 0.0, %v1005
      %v1007 = vpop.f32.mrf.mxu0
      %v1008 = vadd.f32 0.0, %v1007
      %1009 = vmatmul.bf16.gmra.mxu0 %v916
      %v1010 = vpop.f32.mrf.mxu0
      %v1011 = vadd.f32 0.0, %v1010
      %v1012 = vpop.f32.mrf.mxu0
      %v1013 = vadd.f32 0.0, %v1012
      %1014 = vmatmul.bf16.gmra.mxu0 %v919
      %v1015 = vpop.f32.mrf.mxu0
      %v1016 = vadd.f32 0.0, %v1015
      %v1017 = vpop.f32.mrf.mxu0
      %v1018 = vadd.f32 0.0, %v1017
      %1019 = vmatmul.bf16.gmra.mxu0 %v922
      %v1020 = vpop.f32.mrf.mxu0
      %v1021 = vadd.f32 0.0, %v1020
      %v1022 = vpop.f32.mrf.mxu0
      %v1023 = vadd.f32 0.0, %v1022
      %1024 = vmatmul.bf16.gmra.mxu0 %v925
      %v1025 = vpop.f32.mrf.mxu0
      %v1026 = vadd.f32 0.0, %v1025
      %v1027 = vpop.f32.mrf.mxu0
      %v1028 = vadd.f32 0.0, %v1027
      %1029 = vmatmul.bf16.gmra.mxu0 %v928
      %v1030 = vpop.f32.mrf.mxu0
      %v1031 = vadd.f32 0.0, %v1030
      %v1032 = vpop.f32.mrf.mxu0
      %v1033 = vadd.f32 0.0, %v1032
      %1034 = vmatmul.bf16.gmra.mxu0 %v931
      %v1035 = vpop.f32.mrf.mxu0
      %v1036 = vadd.f32 0.0, %v1035
      %v1037 = vpop.f32.mrf.mxu0
      %v1038 = vadd.f32 0.0, %v1037
      %1039 = vmatmul.bf16.gmra.mxu0 %v934
      %v1040 = vpop.f32.mrf.mxu0
      %v1041 = vadd.f32 0.0, %v1040
      %v1042 = vpop.f32.mrf.mxu0
      %v1043 = vadd.f32 0.0, %v1042
      %1044 = vmatmul.bf16.gmra.mxu0 %v937
      %v1045 = vpop.f32.mrf.mxu0
      %v1046 = vadd.f32 0.0, %v1045
      %v1047 = vpop.f32.mrf.mxu0
      %v1048 = vadd.f32 0.0, %v1047
      %1049 = vmatmul.bf16.gmra.mxu0 %v940
      %v1050 = vpop.f32.mrf.mxu0
      %v1051 = vadd.f32 0.0, %v1050
      %v1052 = vpop.f32.mrf.mxu0
      %v1053 = vadd.f32 0.0, %v1052
      %1054 = vmatmul.bf16.gmra.mxu0 %v943
      %v1055 = vpop.f32.mrf.mxu0
      %v1056 = vadd.f32 0.0, %v1055
      %v1057 = vpop.f32.mrf.mxu0
      %v1058 = vadd.f32 0.0, %v1057
      %1059 = vmatmul.bf16.gmra.mxu0 %v946
      %v1060 = vpop.f32.mrf.mxu0
      %v1061 = vadd.f32 0.0, %v1060
      %v1062 = vpop.f32.mrf.mxu0
      %v1063 = vadd.f32 0.0, %v1062
      %1064 = vmatmul.bf16.gmra.mxu0 %v949
      %v1065 = vpop.f32.mrf.mxu0
      %v1066 = vadd.f32 0.0, %v1065
      %v1067 = vpop.f32.mrf.mxu0
      %v1068 = vadd.f32 0.0, %v1067
      %1069 = vmatmul.bf16.gmra.mxu0 %v952
      %v1070 = vpop.f32.mrf.mxu0
      %v1071 = vadd.f32 0.0, %v1070
      %v1072 = vpop.f32.mrf.mxu0
      %v1073 = vadd.f32 0.0, %v1072
      %1074 = vmatmul.bf16.gmra.mxu0 %v955
      %v1075 = vpop.f32.mrf.mxu0
      %v1076 = vadd.f32 0.0, %v1075
      %v1077 = vpop.f32.mrf.mxu0
      %v1078 = vadd.f32 0.0, %v1077
      %1079 = vmatmul.bf16.gmra.mxu0 %v958
      %v1080 = vpop.f32.mrf.mxu0
      %v1081 = vadd.f32 0.0, %v1080
      %v1082 = vpop.f32.mrf.mxu0
      %v1083 = vadd.f32 0.0, %v1082
      %1084 = vmatmul.bf16.gmra.mxu0 %v961
      %v1085 = vpop.f32.mrf.mxu0
      %v1086 = vadd.f32 0.0, %v1085
      %v1087 = vpop.f32.mrf.mxu0
      %v1088 = vadd.f32 0.0, %v1087
      %1089 = vmatmul.bf16.gmra.mxu0 %v964
      %v1090 = vpop.f32.mrf.mxu0
      %v1091 = vadd.f32 0.0, %v1090
      %v1092 = vpop.f32.mrf.mxu0
      %v1093 = vadd.f32 0.0, %v1092
      %1094 = vmatmul.bf16.gmra.mxu0 %v967
      %v1095 = vpop.f32.mrf.mxu0
      %v1096 = vadd.f32 0.0, %v1095
      %v1097 = vpop.f32.mrf.mxu0
      %v1098 = vadd.f32 0.0, %v1097
      %1099 = vmatmul.bf16.gmra.mxu0 %v970
      %v1100 = vpop.f32.mrf.mxu0
      %v1101 = vadd.f32 0.0, %v1100
      %v1102 = vpop.f32.mrf.mxu0
      %v1103 = vadd.f32 0.0, %v1102
      %1104 = vmatmul.bf16.gmra.mxu0 %v973
      %v1105 = vpop.f32.mrf.mxu0
      %v1106 = vadd.f32 0.0, %v1105
      %v1107 = vpop.f32.mrf.mxu0
      %v1108 = vadd.f32 0.0, %v1107
      %1109 = vdwg.mxu0
      %v1110 = vld [vmem:[%s6] sm:$0xff]
      %v1111 = vld [vmem:[%s6 + $0x8] sm:$0xff]
      %v1112 = vld [vmem:[%s6 + $0x10] sm:$0xff]
      %v1113 = vld [vmem:[%s6 + $0x18] sm:$0xff]
      %v1114 = vld [vmem:[%s6 + $0x20] sm:$0xff]
      %v1115 = vld [vmem:[%s6 + $0x28] sm:$0xff]
      %v1116 = vld [vmem:[%s6 + $0x30] sm:$0xff]
      %v1117 = vld [vmem:[%s6 + $0x38] sm:$0xff]
      %v1118 = vld [vmem:[%s6 + $0x40] sm:$0xff]
      %v1119 = vld [vmem:[%s6 + $0x48] sm:$0xff]
      %v1120 = vld [vmem:[%s6 + $0x50] sm:$0xff]
      %v1121 = vld [vmem:[%s6 + $0x58] sm:$0xff]
      %v1122 = vld [vmem:[%s6 + $0x60] sm:$0xff]
      %v1123 = vld [vmem:[%s6 + $0x68] sm:$0xff]
      %v1124 = vld [vmem:[%s6 + $0x70] sm:$0xff]
      %v1125 = vld [vmem:[%s6 + $0x78] sm:$0xff]
      %v1126 = vld [vmem:[%s6 + $0x80] sm:$0xff]
      %v1127 = vld [vmem:[%s6 + $0x88] sm:$0xff]
      %v1128 = vld [vmem:[%s6 + $0x90] sm:$0xff]
      %v1129 = vld [vmem:[%s6 + $0x98] sm:$0xff]
      %v1130 = vld [vmem:[%s6 + $0xa0] sm:$0xff]
      %v1131 = vld [vmem:[%s6 + $0xa8] sm:$0xff]
      %v1132 = vld [vmem:[%s6 + $0xb0] sm:$0xff]
      %v1133 = vld [vmem:[%s6 + $0xb8] sm:$0xff]
      %v1134 = vld [vmem:[%s6 + $0xc0] sm:$0xff]
      %v1135 = vld [vmem:[%s6 + $0xc8] sm:$0xff]
      %v1136 = vld [vmem:[%s6 + $0xd0] sm:$0xff]
      %v1137 = vld [vmem:[%s6 + $0xd8] sm:$0xff]
      %v1138 = vld [vmem:[%s6 + $0xe0] sm:$0xff]
      %v1139 = vld [vmem:[%s6 + $0xe8] sm:$0xff]
      %v1140 = vld [vmem:[%s6 + $0xf0] sm:$0xff]
      %v1141 = vld [vmem:[%s6 + $0xf8] sm:$0xff]
      %v1142 = vld [vmem:[%s6 + $0x100] sm:$0xff]
      %v1143 = vld [vmem:[%s6 + $0x108] sm:$0xff]
      %v1144 = vld [vmem:[%s6 + $0x110] sm:$0xff]
      %v1145 = vld [vmem:[%s6 + $0x118] sm:$0xff]
      %v1146 = vld [vmem:[%s6 + $0x120] sm:$0xff]
      %v1147 = vld [vmem:[%s6 + $0x128] sm:$0xff]
      %v1148 = vld [vmem:[%s6 + $0x130] sm:$0xff]
      %v1149 = vld [vmem:[%s6 + $0x138] sm:$0xff]
      %v1150 = vld [vmem:[%s6 + $0x140] sm:$0xff]
      %v1151 = vld [vmem:[%s6 + $0x148] sm:$0xff]
      %v1152 = vld [vmem:[%s6 + $0x150] sm:$0xff]
      %v1153 = vld [vmem:[%s6 + $0x158] sm:$0xff]
      %v1154 = vld [vmem:[%s6 + $0x160] sm:$0xff]
      %v1155 = vld [vmem:[%s6 + $0x168] sm:$0xff]
      %v1156 = vld [vmem:[%s6 + $0x170] sm:$0xff]
      %v1157 = vld [vmem:[%s6 + $0x178] sm:$0xff]
      %v1158 = vmul.f32 %v991, %v1110
      %v1159 = vmul.f32 %v993, %v1111
      %v1160 = vmul.f32 %v996, %v1112
      %v1161 = vmul.f32 %v998, %v1113
      %v1162 = vmul.f32 %v1001, %v1114
      %v1163 = vmul.f32 %v1003, %v1115
      %v1164 = vmul.f32 %v1006, %v1116
      %v1165 = vmul.f32 %v1008, %v1117
      %v1166 = vmul.f32 %v1011, %v1118
      %v1167 = vmul.f32 %v1013, %v1119
      %v1168 = vmul.f32 %v1016, %v1120
      %v1169 = vmul.f32 %v1018, %v1121
      %v1170 = vmul.f32 %v1021, %v1122
      %v1171 = vmul.f32 %v1023, %v1123
      %v1172 = vmul.f32 %v1026, %v1124
      %v1173 = vmul.f32 %v1028, %v1125
      %v1174 = vmul.f32 %v1031, %v1126
      %v1175 = vmul.f32 %v1033, %v1127
      %v1176 = vmul.f32 %v1036, %v1128
      %v1177 = vmul.f32 %v1038, %v1129
      %v1178 = vmul.f32 %v1041, %v1130
      %v1179 = vmul.f32 %v1043, %v1131
      %v1180 = vmul.f32 %v1046, %v1132
      %v1181 = vmul.f32 %v1048, %v1133
      %v1182 = vmul.f32 %v1051, %v1134
      %v1183 = vmul.f32 %v1053, %v1135
      %v1184 = vmul.f32 %v1056, %v1136
      %v1185 = vmul.f32 %v1058, %v1137
      %v1186 = vmul.f32 %v1061, %v1138
      %v1187 = vmul.f32 %v1063, %v1139
      %v1188 = vmul.f32 %v1066, %v1140
      %v1189 = vmul.f32 %v1068, %v1141
      %v1190 = vmul.f32 %v1071, %v1142
      %v1191 = vmul.f32 %v1073, %v1143
      %v1192 = vmul.f32 %v1076, %v1144
      %v1193 = vmul.f32 %v1078, %v1145
      %v1194 = vmul.f32 %v1081, %v1146
      %v1195 = vmul.f32 %v1083, %v1147
      %v1196 = vmul.f32 %v1086, %v1148
      %v1197 = vmul.f32 %v1088, %v1149
      %v1198 = vmul.f32 %v1091, %v1150
      %v1199 = vmul.f32 %v1093, %v1151
      %v1200 = vmul.f32 %v1096, %v1152
      %v1201 = vmul.f32 %v1098, %v1153
      %v1202 = vmul.f32 %v1101, %v1154
      %v1203 = vmul.f32 %v1103, %v1155
      %v1204 = vmul.f32 %v1106, %v1156
      %v1205 = vmul.f32 %v1108, %v1157
      %vm1206 = vcmask 261120
      %v1207 = vsel %vm1206, %v1158, 0.0
      %1208 = vadd.xlane.f32.xlu0 %v1207
      %v1209 = vpop.xlane.xlu0 %1208
      %v1210 = vsel %vm1206, %v1159, 0.0
      %1211 = vadd.xlane.f32.xlu0 %v1210
      %v1212 = vpop.xlane.xlu0 %1211
      %v1213 = vsel %vm1206, %v1160, 0.0
      %1214 = vadd.xlane.f32.xlu0 %v1213
      %v1215 = vpop.xlane.xlu0 %1214
      %v1216 = vsel %vm1206, %v1161, 0.0
      %1217 = vadd.xlane.f32.xlu0 %v1216
      %v1218 = vpop.xlane.xlu0 %1217
      %v1219 = vsel %vm1206, %v1162, 0.0
      %1220 = vadd.xlane.f32.xlu0 %v1219
      %v1221 = vpop.xlane.xlu0 %1220
      %v1222 = vsel %vm1206, %v1163, 0.0
      %1223 = vadd.xlane.f32.xlu0 %v1222
      %v1224 = vpop.xlane.xlu0 %1223
      %v1225 = vsel %vm1206, %v1164, 0.0
      %1226 = vadd.xlane.f32.xlu0 %v1225
      %v1227 = vpop.xlane.xlu0 %1226
      %v1228 = vsel %vm1206, %v1165, 0.0
      %1229 = vadd.xlane.f32.xlu0 %v1228
      %v1230 = vpop.xlane.xlu0 %1229
      %v1231 = vsel %vm1206, %v1166, 0.0
      %1232 = vadd.xlane.f32.xlu0 %v1231
      %v1233 = vpop.xlane.xlu0 %1232
      %v1234 = vsel %vm1206, %v1167, 0.0
      %1235 = vadd.xlane.f32.xlu0 %v1234
      %v1236 = vpop.xlane.xlu0 %1235
      %v1237 = vsel %vm1206, %v1168, 0.0
      %1238 = vadd.xlane.f32.xlu0 %v1237
      %v1239 = vpop.xlane.xlu0 %1238
      %v1240 = vsel %vm1206, %v1169, 0.0
      %1241 = vadd.xlane.f32.xlu0 %v1240
      %v1242 = vpop.xlane.xlu0 %1241
      %v1243 = vsel %vm1206, %v1170, 0.0
      %1244 = vadd.xlane.f32.xlu0 %v1243
      %v1245 = vpop.xlane.xlu0 %1244
      %v1246 = vsel %vm1206, %v1171, 0.0
      %1247 = vadd.xlane.f32.xlu0 %v1246
      %v1248 = vpop.xlane.xlu0 %1247
      %v1249 = vsel %vm1206, %v1172, 0.0
      %1250 = vadd.xlane.f32.xlu0 %v1249
      %v1251 = vpop.xlane.xlu0 %1250
      %v1252 = vsel %vm1206, %v1173, 0.0
      %1253 = vadd.xlane.f32.xlu0 %v1252
      %v1254 = vpop.xlane.xlu0 %1253
      %v1255 = vsel %vm1206, %v1174, 0.0
      %1256 = vadd.xlane.f32.xlu0 %v1255
      %v1257 = vpop.xlane.xlu0 %1256
      %v1258 = vsel %vm1206, %v1175, 0.0
      %1259 = vadd.xlane.f32.xlu0 %v1258
      %v1260 = vpop.xlane.xlu0 %1259
      %v1261 = vsel %vm1206, %v1176, 0.0
      %1262 = vadd.xlane.f32.xlu0 %v1261
      %v1263 = vpop.xlane.xlu0 %1262
      %v1264 = vsel %vm1206, %v1177, 0.0
      %1265 = vadd.xlane.f32.xlu0 %v1264
      %v1266 = vpop.xlane.xlu0 %1265
      %v1267 = vsel %vm1206, %v1178, 0.0
      %1268 = vadd.xlane.f32.xlu0 %v1267
      %v1269 = vpop.xlane.xlu0 %1268
      %v1270 = vsel %vm1206, %v1179, 0.0
      %1271 = vadd.xlane.f32.xlu0 %v1270
      %v1272 = vpop.xlane.xlu0 %1271
      %v1273 = vsel %vm1206, %v1180, 0.0
      %1274 = vadd.xlane.f32.xlu0 %v1273
      %v1275 = vpop.xlane.xlu0 %1274
      %v1276 = vsel %vm1206, %v1181, 0.0
      %1277 = vadd.xlane.f32.xlu0 %v1276
      %v1278 = vpop.xlane.xlu0 %1277
      %v1279 = vsel %vm1206, %v1182, 0.0
      %1280 = vadd.xlane.f32.xlu0 %v1279
      %v1281 = vpop.xlane.xlu0 %1280
      %v1282 = vsel %vm1206, %v1183, 0.0
      %1283 = vadd.xlane.f32.xlu0 %v1282
      %v1284 = vpop.xlane.xlu0 %1283
      %v1285 = vsel %vm1206, %v1184, 0.0
      %1286 = vadd.xlane.f32.xlu0 %v1285
      %v1287 = vpop.xlane.xlu0 %1286
      %v1288 = vsel %vm1206, %v1185, 0.0
      %1289 = vadd.xlane.f32.xlu0 %v1288
      %v1290 = vpop.xlane.xlu0 %1289
      %v1291 = vsel %vm1206, %v1186, 0.0
      %1292 = vadd.xlane.f32.xlu0 %v1291
      %v1293 = vpop.xlane.xlu0 %1292
      %v1294 = vsel %vm1206, %v1187, 0.0
      %1295 = vadd.xlane.f32.xlu0 %v1294
      %v1296 = vpop.xlane.xlu0 %1295
      %v1297 = vsel %vm1206, %v1188, 0.0
      %1298 = vadd.xlane.f32.xlu0 %v1297
      %v1299 = vpop.xlane.xlu0 %1298
      %v1300 = vsel %vm1206, %v1189, 0.0
      %1301 = vadd.xlane.f32.xlu0 %v1300
      %v1302 = vpop.xlane.xlu0 %1301
      %v1303 = vsel %vm1206, %v1190, 0.0
      %1304 = vadd.xlane.f32.xlu0 %v1303
      %v1305 = vpop.xlane.xlu0 %1304
      %v1306 = vsel %vm1206, %v1191, 0.0
      %1307 = vadd.xlane.f32.xlu0 %v1306
      %v1308 = vpop.xlane.xlu0 %1307
      %v1309 = vsel %vm1206, %v1192, 0.0
      %1310 = vadd.xlane.f32.xlu0 %v1309
      %v1311 = vpop.xlane.xlu0 %1310
      %v1312 = vsel %vm1206, %v1193, 0.0
      %1313 = vadd.xlane.f32.xlu0 %v1312
      %v1314 = vpop.xlane.xlu0 %1313
      %v1315 = vsel %vm1206, %v1194, 0.0
      %1316 = vadd.xlane.f32.xlu0 %v1315
      %v1317 = vpop.xlane.xlu0 %1316
      %v1318 = vsel %vm1206, %v1195, 0.0
      %1319 = vadd.xlane.f32.xlu0 %v1318
      %v1320 = vpop.xlane.xlu0 %1319
      %v1321 = vsel %vm1206, %v1196, 0.0
      %1322 = vadd.xlane.f32.xlu0 %v1321
      %v1323 = vpop.xlane.xlu0 %1322
      %v1324 = vsel %vm1206, %v1197, 0.0
      %1325 = vadd.xlane.f32.xlu0 %v1324
      %v1326 = vpop.xlane.xlu0 %1325
      %v1327 = vsel %vm1206, %v1198, 0.0
      %1328 = vadd.xlane.f32.xlu0 %v1327
      %v1329 = vpop.xlane.xlu0 %1328
      %v1330 = vsel %vm1206, %v1199, 0.0
      %1331 = vadd.xlane.f32.xlu0 %v1330
      %v1332 = vpop.xlane.xlu0 %1331
      %v1333 = vsel %vm1206, %v1200, 0.0
      %1334 = vadd.xlane.f32.xlu0 %v1333
      %v1335 = vpop.xlane.xlu0 %1334
      %v1336 = vsel %vm1206, %v1201, 0.0
      %1337 = vadd.xlane.f32.xlu0 %v1336
      %v1338 = vpop.xlane.xlu0 %1337
      %v1339 = vsel %vm1206, %v1202, 0.0
      %1340 = vadd.xlane.f32.xlu0 %v1339
      %v1341 = vpop.xlane.xlu0 %1340
      %v1342 = vsel %vm1206, %v1203, 0.0
      %1343 = vadd.xlane.f32.xlu0 %v1342
      %v1344 = vpop.xlane.xlu0 %1343
      %v1345 = vsel %vm1206, %v1204, 0.0
      %1346 = vadd.xlane.f32.xlu0 %v1345
      %v1347 = vpop.xlane.xlu0 %1346
      %v1348 = vsel %vm1206, %v1205, 0.0
      %1349 = vadd.xlane.f32.xlu0 %v1348
      %v1350 = vpop.xlane.xlu0 %1349
      %v1351 = vld [vmem:[%s7] sm:$0xff]
      %v1352 = vld [vmem:[%s7 + $0x8] sm:$0xff]
      %v1353 = vld [vmem:[%s7 + $0x10] sm:$0xff]
      %v1354 = vld [vmem:[%s7 + $0x18] sm:$0xf]
      %v1355 = vld [vmem:[%s7 + $0x20] sm:$0xf]
      %v1356 = vld [vmem:[%s7 + $0x28] sm:$0xf]
      %v1357 = vld [vmem:[%s8] sm:$0xff]
      %v1358 = vld [vmem:[%s8 + $0x8] sm:$0xf]
      %1359 = vmatpush.msra.mxu0 %v1254
      %1360 = vmatpush.msra.mxu0 %v1251
      %1361 = vmatpush.msra.mxu0 %v1248
      %1362 = vmatpush.msra.mxu0 %v1245
      %1363 = vmatpush.msra.mxu0 %v1242
      %1364 = vmatpush.msra.mxu0 %v1239
      %1365 = vmatpush.msra.mxu0 %v1236
      %1366 = vmatpush.msra.mxu0 %v1233
      %1367 = vmatpush.msra.mxu0 %v1230
      %1368 = vmatpush.msra.mxu0 %v1227
      %1369 = vmatpush.msra.mxu0 %v1224
      %1370 = vmatpush.msra.mxu0 %v1221
      %1371 = vmatpush.msra.mxu0 %v1218
      %1372 = vmatpush.msra.mxu0 %v1215
      %1373 = vmatpush.msra.mxu0 %v1212
      %1374 = vmatpush.msra.mxu0 %v1209
      %1375 = vmatmul.f32.gmra.mxu0 %v1351
      %v1376 = vpop.f32.mrf.mxu0
      %v1377 = vadd.f32 %v1357, %v1376
      %1378 = vmatmul.f32.gmra.mxu0 %v1354
      %v1379 = vpop.f32.mrf.mxu0
      %v1380 = vadd.f32 %v1358, %v1379
      %1381 = vdwg.mxu0
      %1382 = vmatpush.msra.mxu0 %v1302
      %1383 = vmatpush.msra.mxu0 %v1299
      %1384 = vmatpush.msra.mxu0 %v1296
      %1385 = vmatpush.msra.mxu0 %v1293
      %1386 = vmatpush.msra.mxu0 %v1290
      %1387 = vmatpush.msra.mxu0 %v1287
      %1388 = vmatpush.msra.mxu0 %v1284
      %1389 = vmatpush.msra.mxu0 %v1281
      %1390 = vmatpush.msra.mxu0 %v1278
      %1391 = vmatpush.msra.mxu0 %v1275
      %1392 = vmatpush.msra.mxu0 %v1272
      %1393 = vmatpush.msra.mxu0 %v1269
      %1394 = vmatpush.msra.mxu0 %v1266
      %1395 = vmatpush.msra.mxu0 %v1263
      %1396 = vmatpush.msra.mxu0 %v1260
      %1397 = vmatpush.msra.mxu0 %v1257
      %1398 = vmatmul.f32.gmra.mxu0 %v1352
      %v1399 = vpop.f32.mrf.mxu0
      %v1400 = vadd.f32 %v1377, %v1399
      %1401 = vmatmul.f32.gmra.mxu0 %v1355
      %v1402 = vpop.f32.mrf.mxu0
      %v1403 = vadd.f32 %v1380, %v1402
      %1404 = vdwg.mxu0
      %1405 = vmatpush.msra.mxu0 %v1350
      %1406 = vmatpush.msra.mxu0 %v1347
      %1407 = vmatpush.msra.mxu0 %v1344
      %1408 = vmatpush.msra.mxu0 %v1341
      %1409 = vmatpush.msra.mxu0 %v1338
      %1410 = vmatpush.msra.mxu0 %v1335
      %1411 = vmatpush.msra.mxu0 %v1332
      %1412 = vmatpush.msra.mxu0 %v1329
      %1413 = vmatpush.msra.mxu0 %v1326
      %1414 = vmatpush.msra.mxu0 %v1323
      %1415 = vmatpush.msra.mxu0 %v1320
      %1416 = vmatpush.msra.mxu0 %v1317
      %1417 = vmatpush.msra.mxu0 %v1314
      %1418 = vmatpush.msra.mxu0 %v1311
      %1419 = vmatpush.msra.mxu0 %v1308
      %1420 = vmatpush.msra.mxu0 %v1305
      %1421 = vmatmul.f32.gmra.mxu0 %v1353
      %v1422 = vpop.f32.mrf.mxu0
      %v1423 = vadd.f32 %v1400, %v1422
      %1424 = vmatmul.f32.gmra.mxu0 %v1356
      %v1425 = vpop.f32.mrf.mxu0
      %v1426 = vadd.f32 %v1403, %v1425
      %1427 = vdwg.mxu0
      %vm1428 = vcmask 7168
      %1429 = vst.msk [vmem:[%s332] sm:$0xff] %vm1428, %v1423
      %vm1430 = vcmask 3072
      %1431 = vst.msk [vmem:[%s332 + $0x8] sm:$0xf] %vm1430, %v1426
      %p1432 = scmp.lt.s32.totalorder %s20, 1
      %s1433 = scalar_select %p1432, %s20, 1
      %s1434 = smul.addr %s1433, 2
      %s1435 = smul.addr %s1434, 8
      %s1436 = scalar_lea.vmem %s9, %s1435
      // Predicated region
      $region57: #{convnet_forward.5} parent=55 // pred_check
        %p1437 = pneg %p232
      $region58: #{convnet_forward.5} parent=55 // pred_check_branch
        %1439 = sbr.rel (%p1437) target = $region60
      $region59: #{convnet_forward.5} parent=55 // pred_region
        _
      $region60: #{convnet_forward.5} parent=55 // pred_fallthru
        _
    $region56: #{convnet_forward.5} parent=5 // pred_fallthru
      _
    %p1440 = scmp.le.s32.totalorder 2, %s15
    // Predicated region
    $region61: #{convnet_forward.5} parent=5 // pred_check
      %p1441 = pneg %p1440
    $region62: #{convnet_forward.5} parent=5 // pred_check_branch
      %1443 = sbr.rel (%p1441) target = $region64
    $region63: #{convnet_forward.5} parent=5 // pred_region
      %s1444 = ssub.s32 %s15, 2
      // Predicated region
      $region65: #{convnet_forward.5} parent=63 // pred_check
        %p1445 = pneg %p238
      $region66: #{convnet_forward.5} parent=63 // pred_check_branch
        %1447 = sbr.rel (%p1445) target = $region68
      $region67: #{convnet_forward.5} parent=63 // pred_region
        %p1448 = scmp.lt.s32.totalorder %s21, 1
        %s1449 = scalar_select %p1448, %s21, 1
        %s1450 = smul.addr %s1449, 2
        %s1451 = smul.addr %s1450, 8
        %s1452 = scalar_lea.vmem %s9, %s1451
      $region68: #{convnet_forward.5} parent=63 // pred_fallthru
        _
    $region64: #{convnet_forward.5} parent=5 // pred_fallthru
      _
  $region6: #{convnet_forward.5} parent=0 // loop_footer
    %s19 = sadd.s32 1, %s15
  $region7: #{convnet_forward.5} parent=0 // loop_footer_branch
    %14 = sbr.rel target = $region3
  $region8: #{convnet_forward.5} parent=0 // loop_exit
    _

</llo_original>
